<compile_context>
chip_gen: v6e
topology: v6e:2x2x1
jax: 0.10.0
libtpu: 0.0.40
codegen_flags: <defaults>
</compile_context>

<pallas_src>
import jax
import jax.numpy as jnp
from jax import lax
from jax.experimental import pallas as pl
from jax.experimental.pallas import tpu as pltpu

F32 = jnp.float32

_HALF = 84      # 6*14 == 12*7: width of the even/odd column-pool output blocks
_ODD0 = 128     # lane offset of the odd-column block inside the 256-wide matmul


# ---------------------------------------------------------------------------
# host-side folding (runs once per forward, outside the kernel)
# ---------------------------------------------------------------------------
def _fold_conv_pool(w, s, w_in):
    """Fold conv weights + BN scale + even/odd column-pool selection.

    w: (Cout, Cin, 3, 3), s: (Cout,) BN scale, w_in: input spatial width.
    Returns (3, Cin*w_in, 256) stacked over the row tap dr; lanes [0, Cout*w_in/2)
    hold the even output columns, lanes [128, 128 + Cout*w_in/2) the odd ones.
    """
    cout, cin = w.shape[0], w.shape[1]
    w_out = w_in // 2
    ws = w.astype(F32) * s.astype(F32)[:, None, None, None]        # (Cout,Cin,3,3)
    a = jnp.arange(w_in)[:, None]                                   # input column
    jp = jnp.arange(w_out)[None, :]                                  # pooled column
    blocks = []
    for off in (1, 0):                              # even cols: dc=a-2jp+1 ; odd: dc=a-2jp
        dc = a - 2 * jp + off                                        # (w_in, w_out)
        valid = (dc >= 0) & (dc <= 2)
        gath = ws[:, :, :, jnp.clip(dc, 0, 2)]                       # (Cout,Cin,3,w_in,w_out)
        gath = jnp.where(valid[None, None, None], gath, 0.0)
        blk = gath.transpose(2, 1, 3, 0, 4).reshape(3, cin * w_in, cout * w_out)
        blocks.append(blk)
    out = jnp.zeros((3, cin * w_in, 256), F32)
    out = out.at[:, :, 0:cout * w_out].set(blocks[0])
    out = out.at[:, :, _ODD0:_ODD0 + cout * w_out].set(blocks[1])
    return out


# ---------------------------------------------------------------------------
# kernel
# ---------------------------------------------------------------------------
def _net_d_kernel(x_ref, w1_ref, t1_ref, w2_ref, t2_ref, mtop_ref, mbot_ref,
                  gt_ref, sgt_ref, b0_ref, out_ref, s2_ref):
    r1 = x_ref.shape[1]          # b*28
    r2 = r1 // 2                 # b*14

    # Zero the scratch pad slabs every step (no cross-step state -> "parallel" safe).
    zpad = jnp.zeros((8, _HALF), F32)
    s2_ref[pl.ds(0, 8), :] = zpad
    s2_ref[pl.ds(r2 + 8, 8), :] = zpad

    x = x_ref[0]                                                     # (b*28, 84)

    # Conv1 + BN1 + ReLU + column half of MaxPool1: one matmul, K=84, N=256.
    a = jnp.dot(x, w1_ref[...], preferred_element_type=F32)          # (b*28, 256)
    zc = jnp.maximum(
        jnp.maximum(a[:, 0:_HALF], a[:, _ODD0:_ODD0 + _HALF]) + t1_ref[...], 0.0)

    # Row half of MaxPool1: host fed rows in (all even rows, then all odd rows)
    # order, so the pool is a max of the two aligned halves.                (b*14, 84)
    p1 = jnp.maximum(zc[:r2, :], zc[r2:, :])

    # Conv2 row taps via padded scratch + one-row offset loads + boundary masks.
    s2_ref[pl.ds(8, r2), :] = p1
    tap_dn = s2_ref[pl.ds(7, r2), :] * mtop_ref[...]                 # P1[row-1]
    tap_up = s2_ref[pl.ds(9, r2), :] * mbot_ref[...]                 # P1[row+1]

    # Conv2 + BN2 + ReLU + column half of MaxPool2: 3 matmuls, K=84 each.
    v = (jnp.dot(tap_dn, w2_ref[0], preferred_element_type=F32)
         + jnp.dot(p1, w2_ref[1], preferred_element_type=F32)
         + jnp.dot(tap_up, w2_ref[2], preferred_element_type=F32))   # (b*14, 256)
    cm = jnp.maximum(
        jnp.maximum(v[:, 0:_HALF], v[:, _ODD0:_ODD0 + _HALF]) + t2_ref[...], 0.0)

    # Row half of MaxPool2: m[q] = max(cm[q], cm[q+1]); odd rows are unused and
    # are zeroed by the head weights (gt).
    s2_ref[pl.ds(8, r2), :] = cm
    m = jnp.maximum(cm, s2_ref[pl.ds(9, r2), :])                     # (b*14, 84)

    # Collapsed Flatten + Linear(588,12) + Dropout(eval) + Linear(12,1):
    # logit[n] = sum over image n of (m * gt) + b0.
    # TODO(synk): Dropout(0.2) is eval-mode identity (train-mode RNG mask not
    # replicated).
    q = m * gt_ref[...]                                              # (b*14, 84)
    per_img = jnp.dot(sgt_ref[...], q, preferred_element_type=F32)   # (b, 84)
    logit = jnp.sum(per_img, axis=1, keepdims=True) + b0_ref[...]    # (b, 1)
    out_ref[0] = 1.0 / (1.0 + jnp.exp(-logit))                       # exact sigmoid


# ---------------------------------------------------------------------------
# wrapper
# ---------------------------------------------------------------------------
def net_d_forward(x, p, batch_per_step=16):
    n = x.shape[0]
    b = batch_per_step
    if b % 4 != 0:
        raise ValueError("batch_per_step must be a multiple of 4 (sublane alignment)")
    g = max(1, -(-n // b))
    npad = g * b
    eps = 1e-5
    r2 = b * 14

    # Fold conv bias + eval BatchNorm (running stats) into scale s / shift t.
    s1 = p["bn1_gamma"] / jnp.sqrt(p["bn1_var"] + eps)
    t1 = s1 * (p["conv1_b"] - p["bn1_mean"]) + p["bn1_beta"]
    s2 = p["bn2_gamma"] / jnp.sqrt(p["bn2_var"] + eps)
    t2 = s2 * (p["conv2_b"] - p["bn2_mean"]) + p["bn2_beta"]

    # Conv weights with BN scale and column-pool selection folded in.
    w1 = _fold_conv_pool(p["conv1_w"], s1, 28).reshape(3 * 28, 256)   # (84, 256)
    w2 = _fold_conv_pool(p["conv2_w"], s2, 14)                        # (3, 84, 256)
    t1half = jnp.repeat(t1.astype(F32), 14)[None, :]                  # (1, 84)
    t2half = jnp.repeat(t2.astype(F32), 7)[None, :]                   # (1, 84)

    # Per-image boundary-row masks for the conv2 row taps.
    qmod = jnp.arange(r2) % 14
    mtop = (qmod != 0).astype(F32)[:, None]                           # (b*14, 1)
    mbot = (qmod != 13).astype(F32)[:, None]                          # (b*14, 1)

    # Collapsed head: g = fc2_w @ fc1_w, b0 = fc2_w @ fc1_b + fc2_b.  The head
    # weights also perform the even-row selection of MaxPool2 (odd rows = 0).
    gvec = jnp.dot(p["fc2_w"].astype(F32), p["fc1_w"].astype(F32)).reshape(12, 7, 7)
    g7 = jnp.transpose(gvec, (1, 0, 2)).reshape(7, 84)                # [i, (o, j)]
    g1 = jnp.zeros((14, 84), F32).at[0::2, :].set(g7)
    gt = jnp.tile(g1, (b, 1))                                         # (b*14, 84)
    sgt = jnp.repeat(jnp.eye(b, dtype=F32), 14, axis=1)               # (b, b*14)
    b0 = (jnp.dot(p["fc2_w"].astype(F32), p["fc1_b"].astype(F32))
          + p["fc2_b"].astype(F32)).reshape(1, 1)

    # Host-side input prep: 3 row taps concatenated along lanes, then the rows of
    # each group of b images reordered to (all even image-rows, all odd image-rows).
    xr = x.reshape(n, 28, 28).astype(F32)
    if npad != n:
        xr = jnp.pad(xr, ((0, npad - n), (0, 0), (0, 0)))
    xd = jnp.pad(xr, ((0, 0), (1, 0), (0, 0)))[:, :28, :]             # row r -> x[r-1]
    xu = jnp.pad(xr, ((0, 0), (0, 1), (0, 0)))[:, 1:, :]              # row r -> x[r+1]
    xcat = jnp.concatenate([xd, xr, xu], axis=2)                      # (npad, 28, 84)
    xg = xcat.reshape(g, b, 28, 84)
    xin = jnp.concatenate([xg[:, :, 0::2, :].reshape(g, r2, 84),
                           xg[:, :, 1::2, :].reshape(g, r2, 84)], axis=1)  # (g, b*28, 84)

    consts = [w1, t1half, w2, t2half, mtop, mbot, gt, sgt, b0]

    def const_spec(arr):
        # Full-extent block with constant index -> DMA'd once, kept resident.
        return pl.BlockSpec(arr.shape, lambda i, _nd=arr.ndim: (0,) * _nd)

    out = pl.pallas_call(
        _net_d_kernel,
        out_shape=jax.ShapeDtypeStruct((g, b, 1), F32),
        grid=(g,),
        in_specs=[pl.BlockSpec((1, b * 28, 84), lambda i: (i, 0, 0))]
                 + [const_spec(c) for c in consts],
        out_specs=pl.BlockSpec((1, b, 1), lambda i: (i, 0, 0)),
        scratch_shapes=[pltpu.VMEM((r2 + 16, _HALF), F32)],
        compiler_params=pltpu.CompilerParams(dimension_semantics=("parallel",)),
    )(xin, *consts)
    return out.reshape(npad)[:n]          # torch .squeeze(): (N, 1) -> (N,)


# ---------------------------------------------------------------------------
# pure-JAX reference of Net_D.forward (inference mode)
# ---------------------------------------------------------------------------
def net_d_reference(x, p):
    eps = 1e-5
    hp = jax.lax.Precision.HIGHEST

    def conv(x, w, bias):
        y = lax.conv_general_dilated(x, w, (1, 1), "SAME",
                                     dimension_numbers=("NCHW", "OIHW", "NCHW"),
                                     precision=hp)
        return y + bias[None, :, None, None]

    def bn(y, g, be, m, v):
        s = g / jnp.sqrt(v + eps)
        return (y - m[None, :, None, None]) * s[None, :, None, None] + be[None, :, None, None]

    def pool(y):
        return lax.reduce_window(y, -jnp.inf, lax.max, (1, 1, 2, 2), (1, 1, 2, 2), "VALID")

    y = pool(jax.nn.relu(bn(conv(x, p["conv1_w"], p["conv1_b"]),
                            p["bn1_gamma"], p["bn1_beta"], p["bn1_mean"], p["bn1_var"])))
    y = pool(jax.nn.relu(bn(conv(y, p["conv2_w"], p["conv2_b"]),
                            p["bn2_gamma"], p["bn2_beta"], p["bn2_mean"], p["bn2_var"])))
    f = y.reshape(y.shape[0], -1)
    z = jnp.dot(f, p["fc1_w"].T, precision=hp) + p["fc1_b"]
    z = jnp.dot(z, p["fc2_w"].T, precision=hp) + p["fc2_b"]
    return jax.nn.sigmoid(z).squeeze()


if __name__ == "__main__":
    ks = jax.random.split(jax.random.PRNGKey(0), 17)
    params = {
        "conv1_w": 0.2 * jax.random.normal(ks[0], (6, 1, 3, 3), F32),
        "conv1_b": 0.1 * jax.random.normal(ks[1], (6,), F32),
        "bn1_gamma": 1.0 + 0.1 * jax.random.normal(ks[2], (6,), F32),
        "bn1_beta": 0.1 * jax.random.normal(ks[3], (6,), F32),
        "bn1_mean": 0.1 * jax.random.normal(ks[4], (6,), F32),
        "bn1_var": 1.0 + 0.1 * jax.random.uniform(ks[5], (6,), F32),
        "conv2_w": 0.2 * jax.random.normal(ks[6], (12, 6, 3, 3), F32),
        "conv2_b": 0.1 * jax.random.normal(ks[7], (12,), F32),
        "bn2_gamma": 1.0 + 0.1 * jax.random.normal(ks[8], (12,), F32),
        "bn2_beta": 0.1 * jax.random.normal(ks[9], (12,), F32),
        "bn2_mean": 0.1 * jax.random.normal(ks[10], (12,), F32),
        "bn2_var": 1.0 + 0.1 * jax.random.uniform(ks[11], (12,), F32),
        "fc1_w": 0.1 * jax.random.normal(ks[12], (12, 588), F32),
        "fc1_b": 0.1 * jax.random.normal(ks[13], (12,), F32),
        "fc2_w": 0.1 * jax.random.normal(ks[14], (1, 12), F32),
        "fc2_b": 0.1 * jax.random.normal(ks[15], (1,), F32),
    }
    # Fashion-MNIST sized input (the Linear(12*7*7, 12) layer fixes H=W=28).
    # 16 images packed per grid step -> grid length 4 keeps the input DMA pipelined
    # and gives both v7x TensorCores work.
    x = jax.random.normal(ks[16], (64, 1, 28, 28), F32)

    out = jax.block_until_ready(net_d_forward(x, params, batch_per_step=16))
    ref = jax.block_until_ready(net_d_reference(x, params))
    assert out.shape == (64,), out.shape
    if not jnp.allclose(out, ref, atol=5e-3, rtol=5e-3):
        raise AssertionError(f"mismatch: pallas={out} ref={ref}")
    print("KERNEL_OK")
</pallas_src>

<mosaic_0001>
module attributes {stable_mosaic.version = 11 : i64} {
  func.func @_net_d_kernel(%arg0: i32, %arg1: memref<1x448x84xf32, #tpu.memory_space<vmem>>, %arg2: memref<84x256xf32, #tpu.memory_space<vmem>>, %arg3: memref<1x84xf32, #tpu.memory_space<vmem>>, %arg4: memref<3x84x256xf32, #tpu.memory_space<vmem>>, %arg5: memref<1x84xf32, #tpu.memory_space<vmem>>, %arg6: memref<224x1xf32, #tpu.memory_space<vmem>>, %arg7: memref<224x1xf32, #tpu.memory_space<vmem>>, %arg8: memref<224x84xf32, #tpu.memory_space<vmem>>, %arg9: memref<16x224xf32, #tpu.memory_space<vmem>>, %arg10: memref<1x1xf32, #tpu.memory_space<vmem>>, %arg11: memref<1x16x1xf32, #tpu.memory_space<vmem>>, %arg12: memref<240x84xf32, #tpu.memory_space<vmem>>) attributes {dimension_semantics = [#tpu.dimension_semantics<parallel>], iteration_bounds = array<i64: 4>, scalar_prefetch = 0 : i64, scratch_operands = 1 : i64, tpu.core_type = #tpu.core_type<tc>, window_params = [{transform_indices = @transform_0, window_bounds = array<i64: 1, 448, 84>}, {pipeline_mode = #tpu.pipeline_mode<synchronous>, transform_indices = @transform_1, window_bounds = array<i64: 84, 256>}, {pipeline_mode = #tpu.pipeline_mode<synchronous>, transform_indices = @transform_2, window_bounds = array<i64: 1, 84>}, {pipeline_mode = #tpu.pipeline_mode<synchronous>, transform_indices = @transform_3, window_bounds = array<i64: 3, 84, 256>}, {pipeline_mode = #tpu.pipeline_mode<synchronous>, transform_indices = @transform_4, window_bounds = array<i64: 1, 84>}, {pipeline_mode = #tpu.pipeline_mode<synchronous>, transform_indices = @transform_5, window_bounds = array<i64: 224, 1>}, {pipeline_mode = #tpu.pipeline_mode<synchronous>, transform_indices = @transform_6, window_bounds = array<i64: 224, 1>}, {pipeline_mode = #tpu.pipeline_mode<synchronous>, transform_indices = @transform_7, window_bounds = array<i64: 224, 84>}, {pipeline_mode = #tpu.pipeline_mode<synchronous>, transform_indices = @transform_8, window_bounds = array<i64: 16, 224>}, {pipeline_mode = #tpu.pipeline_mode<synchronous>, transform_indices = @transform_9, window_bounds = array<i64: 1, 1>}, {transform_indices = @transform_10, window_bounds = array<i64: 1, 16, 1>}]} {
    %cst = arith.constant 0.000000e+00 : f32
    %0 = vector.broadcast %cst : f32 to vector<8x84xf32>
    %c0 = arith.constant 0 : index
    %c0_0 = arith.constant 0 : index
    %1 = vector.load %arg12[%c0, %c0_0] : memref<240x84xf32, #tpu.memory_space<vmem>>, vector<8x84xf32>
    tpu.vector_store %arg12[%c0, %c0_0], %0 {strides = array<i32>} : memref<240x84xf32, #tpu.memory_space<vmem>>, vector<8x84xf32>,
    %c232 = arith.constant 232 : index
    %c0_1 = arith.constant 0 : index
    %2 = vector.load %arg12[%c232, %c0_1] : memref<240x84xf32, #tpu.memory_space<vmem>>, vector<8x84xf32>
    tpu.vector_store %arg12[%c232, %c0_1], %0 {strides = array<i32>} : memref<240x84xf32, #tpu.memory_space<vmem>>, vector<8x84xf32>,
    %c0_2 = arith.constant 0 : index
    %c0_3 = arith.constant 0 : index
    %c0_4 = arith.constant 0 : index
    %3 = vector.load %arg1[%c0_2, %c0_3, %c0_4] : memref<1x448x84xf32, #tpu.memory_space<vmem>>, vector<1x448x84xf32>
    %4 = vector.shape_cast %3 : vector<1x448x84xf32> to vector<448x84xf32>
    %c0_5 = arith.constant 0 : index
    %c0_6 = arith.constant 0 : index
    %5 = vector.load %arg2[%c0_5, %c0_6] : memref<84x256xf32, #tpu.memory_space<vmem>>, vector<84x256xf32>
    %cst_7 = arith.constant dense<0.000000e+00> : vector<448x256xf32>
    %6 = tpu.matmul %4, %5, %cst_7 {dimension_numbers = #tpu.dot_dimension_numbers<[1], [0], [0], [1], [0, 0, 1, 1], [], []>} : vector<448x84xf32>, vector<84x256xf32>, vector<448x256xf32> -> vector<448x256xf32>
    %7 = vector.extract_strided_slice %6 {offsets = [0, 0], sizes = [448, 84], strides = [1, 1]} : vector<448x256xf32> to vector<448x84xf32>
    %8 = vector.extract_strided_slice %6 {offsets = [0, 128], sizes = [448, 84], strides = [1, 1]} : vector<448x256xf32> to vector<448x84xf32>
    %9 = arith.maximumf %7, %8 : vector<448x84xf32>
    %c0_8 = arith.constant 0 : index
    %c0_9 = arith.constant 0 : index
    %10 = vector.load %arg3[%c0_8, %c0_9] : memref<1x84xf32, #tpu.memory_space<vmem>>, vector<1x84xf32>
    %11 = vector.broadcast %10 : vector<1x84xf32> to vector<448x84xf32>
    %12 = arith.addf %9, %11 : vector<448x84xf32>
    %cst_10 = arith.constant 0.000000e+00 : f32
    %13 = vector.broadcast %cst_10 : f32 to vector<448x84xf32>
    %14 = arith.maximumf %12, %13 : vector<448x84xf32>
    %15 = vector.extract_strided_slice %14 {offsets = [0, 0], sizes = [224, 84], strides = [1, 1]} : vector<448x84xf32> to vector<224x84xf32>
    %16 = vector.extract_strided_slice %14 {offsets = [224, 0], sizes = [224, 84], strides = [1, 1]} : vector<448x84xf32> to vector<224x84xf32>
    %17 = arith.maximumf %15, %16 : vector<224x84xf32>
    %c8 = arith.constant 8 : index
    %c0_11 = arith.constant 0 : index
    %18 = vector.load %arg12[%c8, %c0_11] : memref<240x84xf32, #tpu.memory_space<vmem>>, vector<224x84xf32>
    tpu.vector_store %arg12[%c8, %c0_11], %17 {strides = array<i32>} : memref<240x84xf32, #tpu.memory_space<vmem>>, vector<224x84xf32>,
    %c7 = arith.constant 7 : index
    %c0_12 = arith.constant 0 : index
    %19 = vector.load %arg12[%c7, %c0_12] : memref<240x84xf32, #tpu.memory_space<vmem>>, vector<224x84xf32>
    %c0_13 = arith.constant 0 : index
    %c0_14 = arith.constant 0 : index
    %20 = vector.load %arg6[%c0_13, %c0_14] : memref<224x1xf32, #tpu.memory_space<vmem>>, vector<224x1xf32>
    %21 = vector.broadcast %20 : vector<224x1xf32> to vector<224x84xf32>
    %22 = arith.mulf %19, %21 : vector<224x84xf32>
    %c9 = arith.constant 9 : index
    %c0_15 = arith.constant 0 : index
    %23 = vector.load %arg12[%c9, %c0_15] : memref<240x84xf32, #tpu.memory_space<vmem>>, vector<224x84xf32>
    %c0_16 = arith.constant 0 : index
    %c0_17 = arith.constant 0 : index
    %24 = vector.load %arg7[%c0_16, %c0_17] : memref<224x1xf32, #tpu.memory_space<vmem>>, vector<224x1xf32>
    %25 = vector.broadcast %24 : vector<224x1xf32> to vector<224x84xf32>
    %26 = arith.mulf %23, %25 : vector<224x84xf32>
    %c0_18 = arith.constant 0 : index
    %c0_19 = arith.constant 0 : index
    %c0_20 = arith.constant 0 : index
    %27 = vector.load %arg4[%c0_18, %c0_19, %c0_20] : memref<3x84x256xf32, #tpu.memory_space<vmem>>, vector<1x84x256xf32>
    %28 = vector.shape_cast %27 : vector<1x84x256xf32> to vector<84x256xf32>
    %cst_21 = arith.constant dense<0.000000e+00> : vector<224x256xf32>
    %29 = tpu.matmul %22, %28, %cst_21 {dimension_numbers = #tpu.dot_dimension_numbers<[1], [0], [0], [1], [0, 0, 1, 1], [], []>} : vector<224x84xf32>, vector<84x256xf32>, vector<224x256xf32> -> vector<224x256xf32>
    %c1 = arith.constant 1 : index
    %c0_22 = arith.constant 0 : index
    %c0_23 = arith.constant 0 : index
    %30 = vector.load %arg4[%c1, %c0_22, %c0_23] : memref<3x84x256xf32, #tpu.memory_space<vmem>>, vector<1x84x256xf32>
    %31 = vector.shape_cast %30 : vector<1x84x256xf32> to vector<84x256xf32>
    %cst_24 = arith.constant dense<0.000000e+00> : vector<224x256xf32>
    %32 = tpu.matmul %17, %31, %cst_24 {dimension_numbers = #tpu.dot_dimension_numbers<[1], [0], [0], [1], [0, 0, 1, 1], [], []>} : vector<224x84xf32>, vector<84x256xf32>, vector<224x256xf32> -> vector<224x256xf32>
    %33 = arith.addf %29, %32 : vector<224x256xf32>
    %c2 = arith.constant 2 : index
    %c0_25 = arith.constant 0 : index
    %c0_26 = arith.constant 0 : index
    %34 = vector.load %arg4[%c2, %c0_25, %c0_26] : memref<3x84x256xf32, #tpu.memory_space<vmem>>, vector<1x84x256xf32>
    %35 = vector.shape_cast %34 : vector<1x84x256xf32> to vector<84x256xf32>
    %cst_27 = arith.constant dense<0.000000e+00> : vector<224x256xf32>
    %36 = tpu.matmul %26, %35, %cst_27 {dimension_numbers = #tpu.dot_dimension_numbers<[1], [0], [0], [1], [0, 0, 1, 1], [], []>} : vector<224x84xf32>, vector<84x256xf32>, vector<224x256xf32> -> vector<224x256xf32>
    %37 = arith.addf %33, %36 : vector<224x256xf32>
    %38 = vector.extract_strided_slice %37 {offsets = [0, 0], sizes = [224, 84], strides = [1, 1]} : vector<224x256xf32> to vector<224x84xf32>
    %39 = vector.extract_strided_slice %37 {offsets = [0, 128], sizes = [224, 84], strides = [1, 1]} : vector<224x256xf32> to vector<224x84xf32>
    %40 = arith.maximumf %38, %39 : vector<224x84xf32>
    %c0_28 = arith.constant 0 : index
    %c0_29 = arith.constant 0 : index
    %41 = vector.load %arg5[%c0_28, %c0_29] : memref<1x84xf32, #tpu.memory_space<vmem>>, vector<1x84xf32>
    %42 = vector.broadcast %41 : vector<1x84xf32> to vector<224x84xf32>
    %43 = arith.addf %40, %42 : vector<224x84xf32>
    %cst_30 = arith.constant 0.000000e+00 : f32
    %44 = vector.broadcast %cst_30 : f32 to vector<224x84xf32>
    %45 = arith.maximumf %43, %44 : vector<224x84xf32>
    %c8_31 = arith.constant 8 : index
    %c0_32 = arith.constant 0 : index
    %46 = vector.load %arg12[%c8_31, %c0_32] : memref<240x84xf32, #tpu.memory_space<vmem>>, vector<224x84xf32>
    tpu.vector_store %arg12[%c8_31, %c0_32], %45 {strides = array<i32>} : memref<240x84xf32, #tpu.memory_space<vmem>>, vector<224x84xf32>,
    %c9_33 = arith.constant 9 : index
    %c0_34 = arith.constant 0 : index
    %47 = vector.load %arg12[%c9_33, %c0_34] : memref<240x84xf32, #tpu.memory_space<vmem>>, vector<224x84xf32>
    %48 = arith.maximumf %45, %47 : vector<224x84xf32>
    %c0_35 = arith.constant 0 : index
    %c0_36 = arith.constant 0 : index
    %49 = vector.load %arg8[%c0_35, %c0_36] : memref<224x84xf32, #tpu.memory_space<vmem>>, vector<224x84xf32>
    %50 = arith.mulf %48, %49 : vector<224x84xf32>
    %c0_37 = arith.constant 0 : index
    %c0_38 = arith.constant 0 : index
    %51 = vector.load %arg9[%c0_37, %c0_38] : memref<16x224xf32, #tpu.memory_space<vmem>>, vector<16x224xf32>
    %cst_39 = arith.constant dense<0.000000e+00> : vector<16x84xf32>
    %52 = tpu.matmul %51, %50, %cst_39 {dimension_numbers = #tpu.dot_dimension_numbers<[1], [0], [0], [1], [0, 0, 1, 1], [], []>} : vector<16x224xf32>, vector<224x84xf32>, vector<16x84xf32> -> vector<16x84xf32>
    %cst_40 = arith.constant dense<0.000000e+00> : vector<16xf32>
    %53 = vector.multi_reduction <add>, %52, %cst_40 [1] : vector<16x84xf32> to vector<16xf32>
    %54 = vector.shape_cast %53 : vector<16xf32> to vector<16x1xf32>
    %c0_41 = arith.constant 0 : index
    %c0_42 = arith.constant 0 : index
    %55 = vector.load %arg10[%c0_41, %c0_42] : memref<1x1xf32, #tpu.memory_space<vmem>>, vector<1x1xf32>
    %56 = vector.broadcast %55 : vector<1x1xf32> to vector<16x1xf32>
    %57 = arith.addf %54, %56 : vector<16x1xf32>
    %cst_43 = arith.constant 0.000000e+00 : f32
    %58 = vector.broadcast %cst_43 : f32 to vector<16x1xf32>
    %59 = arith.subf %58, %57 : vector<16x1xf32>
    %60 = math.exp %59 : vector<16x1xf32>
    %cst_44 = arith.constant 1.000000e+00 : f32
    %61 = vector.broadcast %cst_44 : f32 to vector<16x1xf32>
    %62 = arith.addf %61, %60 : vector<16x1xf32>
    %cst_45 = arith.constant 1.000000e+00 : f32
    %63 = vector.broadcast %cst_45 : f32 to vector<16x1xf32>
    %64 = arith.divf %63, %62 : vector<16x1xf32>
    %c0_46 = arith.constant 0 : index
    %c0_47 = arith.constant 0 : index
    %c0_48 = arith.constant 0 : index
    %65 = vector.load %arg11[%c0_46, %c0_47, %c0_48] : memref<1x16x1xf32, #tpu.memory_space<vmem>>, vector<1x16x1xf32>
    %66 = vector.shape_cast %65 : vector<1x16x1xf32> to vector<16x1xf32>
    %67 = vector.shape_cast %64 : vector<16x1xf32> to vector<1x16x1xf32>
    tpu.vector_store %arg11[%c0_46, %c0_47, %c0_48], %67 {strides = array<i32>} : memref<1x16x1xf32, #tpu.memory_space<vmem>>, vector<1x16x1xf32>,
    return
  }
  func.func @transform_0(%arg0: i32) -> (i32, i32, i32) {
    %c0_i32 = arith.constant 0 : i32
    %c0_i32_0 = arith.constant 0 : i32
    %c0_i32_1 = arith.constant 0 : i32
    return %arg0, %c0_i32, %c0_i32_0 : i32, i32, i32
  }
  func.func @transform_1(%arg0: i32) -> (i32, i32) {
    %c0_i32 = arith.constant 0 : i32
    %c0_i32_0 = arith.constant 0 : i32
    %c0_i32_1 = arith.constant 0 : i32
    return %c0_i32, %c0_i32_0 : i32, i32
  }
  func.func @transform_2(%arg0: i32) -> (i32, i32) {
    %c0_i32 = arith.constant 0 : i32
    %c0_i32_0 = arith.constant 0 : i32
    %c0_i32_1 = arith.constant 0 : i32
    return %c0_i32, %c0_i32_0 : i32, i32
  }
  func.func @transform_3(%arg0: i32) -> (i32, i32, i32) {
    %c0_i32 = arith.constant 0 : i32
    %c0_i32_0 = arith.constant 0 : i32
    %c0_i32_1 = arith.constant 0 : i32
    %c0_i32_2 = arith.constant 0 : i32
    return %c0_i32, %c0_i32_0, %c0_i32_1 : i32, i32, i32
  }
  func.func @transform_4(%arg0: i32) -> (i32, i32) {
    %c0_i32 = arith.constant 0 : i32
    %c0_i32_0 = arith.constant 0 : i32
    %c0_i32_1 = arith.constant 0 : i32
    return %c0_i32, %c0_i32_0 : i32, i32
  }
  func.func @transform_5(%arg0: i32) -> (i32, i32) {
    %c0_i32 = arith.constant 0 : i32
    %c0_i32_0 = arith.constant 0 : i32
    %c0_i32_1 = arith.constant 0 : i32
    return %c0_i32, %c0_i32_0 : i32, i32
  }
  func.func @transform_6(%arg0: i32) -> (i32, i32) {
    %c0_i32 = arith.constant 0 : i32
    %c0_i32_0 = arith.constant 0 : i32
    %c0_i32_1 = arith.constant 0 : i32
    return %c0_i32, %c0_i32_0 : i32, i32
  }
  func.func @transform_7(%arg0: i32) -> (i32, i32) {
    %c0_i32 = arith.constant 0 : i32
    %c0_i32_0 = arith.constant 0 : i32
    %c0_i32_1 = arith.constant 0 : i32
    return %c0_i32, %c0_i32_0 : i32, i32
  }
  func.func @transform_8(%arg0: i32) -> (i32, i32) {
    %c0_i32 = arith.constant 0 : i32
    %c0_i32_0 = arith.constant 0 : i32
    %c0_i32_1 = arith.constant 0 : i32
    return %c0_i32, %c0_i32_0 : i32, i32
  }
  func.func @transform_9(%arg0: i32) -> (i32, i32) {
    %c0_i32 = arith.constant 0 : i32
    %c0_i32_0 = arith.constant 0 : i32
    %c0_i32_1 = arith.constant 0 : i32
    return %c0_i32, %c0_i32_0 : i32, i32
  }
  func.func @transform_10(%arg0: i32) -> (i32, i32, i32) {
    %c0_i32 = arith.constant 0 : i32
    %c0_i32_0 = arith.constant 0 : i32
    %c0_i32_1 = arith.constant 0 : i32
    return %arg0, %c0_i32, %c0_i32_0 : i32, i32, i32
  }
}

</mosaic_0001>

<llo_original>
// kernel: tpu_custom_call.1
$region0: #{tpu_custom_call.1}
  #allocation0 [shape = 'u32[]', space=smem, size = 0x4, offset = 0x4, fixed_abs, tag = 'smem constant byte address 0x4 - core index']
  #allocation1 [shape = 'u32[144,128]{1,0:T(1,128)}', space=vmem, size = 0x12000, scoped, tag = 'internal scratch']
  #allocation2 [shape = 'f32[240,84]{1,0:T(8,128)}', space=vmem, size = 0x1e000, scoped, tag = 'scratch operand']
  #allocation3 [shape = 'f32[1,1]{1,0:T(1,128)S(1)}', space=vmem, size = 0x200, scoped, tag = 'scoped memory for tpu_custom_call.1']
  %s0 = inlined_call_operand.vmem [shape: f32[4,448,84], index: 0, kind: input, shape index: {}]
  %s1 = inlined_call_operand.vmem [shape: f32[84,256], index: 1, kind: input, shape index: {}]
  %s2 = inlined_call_operand.vmem [shape: f32[1,84], index: 2, kind: input, shape index: {}]
  %s3 = inlined_call_operand.vmem [shape: f32[3,84,256], index: 3, kind: input, shape index: {}]
  %s4 = inlined_call_operand.vmem [shape: f32[1,84], index: 4, kind: input, shape index: {}]
  %s5 = inlined_call_operand.vmem [shape: f32[224,1], index: 5, kind: input, shape index: {}]
  %s6 = inlined_call_operand.vmem [shape: f32[224,1], index: 6, kind: input, shape index: {}]
  %s7 = inlined_call_operand.vmem [shape: f32[224,84], index: 7, kind: input, shape index: {}]
  %s8 = inlined_call_operand.vmem [shape: f32[16,224], index: 8, kind: input, shape index: {}]
  %s9 = inlined_call_operand.<no memory space> [shape: f32[1,1], index: 9, kind: input, shape index: {}]
  %s10 = inlined_call_operand.vmem [shape: f32[4,16,1], index: 10, kind: output, shape index: {}]
  %s11 = sld [smem:[#allocation0]]
  $region73: #{tpu_custom_call.1} parent=0
    _
  %s13 = ssub.s32 1, %s11
  %s14 = scalar_select 0, %s13, %s11
  %v15 = vstv %s9
  %16 = vst [vmem:[#allocation3] sm:$0x1] %v15
  loop: start=0, step=1, limit=6
  $region2: #{tpu_custom_call.1} parent=0 // loop_pre_header
    _
  $region3: #{tpu_custom_call.1} parent=0 // loop_header
    %s18 = sphi 0, %s22
    %p19 = scmp.ge.s32.totalorder %s18, 6
    %s28 = sphi 0, %s30
    %s31 = sphi 0, %s28
    %s32 = sphi 0, %s31
    %s48 = sphi 0, %s32
    %s52 = sphi 0, %s52
    %s54 = sphi 0, %s52
    %s55 = sphi 0, %s54
    %s69 = sphi 0, %s55
    %s73 = sphi 0, %s73
    %s75 = sphi 0, %s73
    %s76 = sphi 0, %s75
    %s90 = sphi 0, %s76
    %s94 = sphi 0, %s94
    %s96 = sphi 0, %s94
    %s97 = sphi 0, %s96
    %s111 = sphi 0, %s97
    %s115 = sphi 0, %s115
    %s117 = sphi 0, %s115
    %s118 = sphi 0, %s117
    %s132 = sphi 0, %s118
    %s136 = sphi 0, %s136
    %s138 = sphi 0, %s136
    %s139 = sphi 0, %s138
    %s153 = sphi 0, %s139
    %s157 = sphi 0, %s157
    %s159 = sphi 0, %s157
    %s160 = sphi 0, %s159
    %s174 = sphi 0, %s160
    %s178 = sphi 0, %s178
    %s180 = sphi 0, %s178
    %s181 = sphi 0, %s180
    %s195 = sphi 0, %s181
    %s199 = sphi 0, %s199
    %s201 = sphi 0, %s199
    %s202 = sphi 0, %s201
    %s216 = sphi 0, %s202
    %s220 = sphi 0, %s220
    %s222 = sphi 0, %s220
    %s223 = sphi 0, %s222
    %s237 = sphi 0, %s223
    %s243 = sphi 0, %s245
    %s246 = sphi 0, %s243
    %s247 = sphi 0, %s246
    %s263 = sphi 0, %s247
  $region4: #{tpu_custom_call.1} parent=0 // loop_header_branch
    %21 = sbr.rel (%p19) target = $region8
  $region5: #{tpu_custom_call.1} parent=0 // loop_body
    %s23 = ssub.s32 %s18, 1
    %s24 = ssub.s32 %s18, 2
    %s25 = sadd.s32 %s18, 1
    %s26 = ssub.s32 %s18, %s25
    %p27 = scmp.eq.s32.totalorder %s26, 0
    %s29 = sadd.s32 %s28, 1
    %s30 = scalar_select %p27, %s28, %s29
    %p33 = pneg %p27
    %p34 = scmp.eq.s32.totalorder %s18, 3
    %p35 = por %p33, %p34
    %p36 = scmp.ne.s32.totalorder %s28, %s31
    %p37 = scmp.eq.s32.totalorder %s18, 0
    %p38 = por %p36, %p37
    %p39 = scmp.ne.s32.totalorder %s28, %s31
    %p40 = scmp.eq.s32.totalorder %s23, 3
    %p41 = por %p39, %p40
    %p42 = scmp.ne.s32.totalorder %s31, %s32
    %p43 = scmp.eq.s32.totalorder %s23, 0
    %p44 = por %p42, %p43
    %p45 = scmp.ne.s32.totalorder %s31, %s32
    %p46 = scmp.eq.s32.totalorder %s24, 3
    %p47 = por %p45, %p46
    %p49 = scmp.ne.s32.totalorder %s32, %s48
    %p50 = scmp.eq.s32.totalorder %s24, 0
    %p51 = por %p49, %p50
    %s53 = sadd.s32 %s52, 1
    %p56 = scmp.eq.s32.totalorder %s18, 3
    %p57 = scmp.ne.s32.totalorder %s52, %s54
    %p58 = scmp.eq.s32.totalorder %s18, 0
    %p59 = por %p57, %p58
    %p60 = scmp.ne.s32.totalorder %s52, %s54
    %p61 = scmp.eq.s32.totalorder %s23, 3
    %p62 = por %p60, %p61
    %p63 = scmp.ne.s32.totalorder %s54, %s55
    %p64 = scmp.eq.s32.totalorder %s23, 0
    %p65 = por %p63, %p64
    %p66 = scmp.ne.s32.totalorder %s54, %s55
    %p67 = scmp.eq.s32.totalorder %s24, 3
    %p68 = por %p66, %p67
    %p70 = scmp.ne.s32.totalorder %s55, %s69
    %p71 = scmp.eq.s32.totalorder %s24, 0
    %p72 = por %p70, %p71
    %s74 = sadd.s32 %s73, 1
    %p77 = scmp.eq.s32.totalorder %s18, 3
    %p78 = scmp.ne.s32.totalorder %s73, %s75
    %p79 = scmp.eq.s32.totalorder %s18, 0
    %p80 = por %p78, %p79
    %p81 = scmp.ne.s32.totalorder %s73, %s75
    %p82 = scmp.eq.s32.totalorder %s23, 3
    %p83 = por %p81, %p82
    %p84 = scmp.ne.s32.totalorder %s75, %s76
    %p85 = scmp.eq.s32.totalorder %s23, 0
    %p86 = por %p84, %p85
    %p87 = scmp.ne.s32.totalorder %s75, %s76
    %p88 = scmp.eq.s32.totalorder %s24, 3
    %p89 = por %p87, %p88
    %p91 = scmp.ne.s32.totalorder %s76, %s90
    %p92 = scmp.eq.s32.totalorder %s24, 0
    %p93 = por %p91, %p92
    %s95 = sadd.s32 %s94, 1
    %p98 = scmp.eq.s32.totalorder %s18, 3
    %p99 = scmp.ne.s32.totalorder %s94, %s96
    %p100 = scmp.eq.s32.totalorder %s18, 0
    %p101 = por %p99, %p100
    %p102 = scmp.ne.s32.totalorder %s94, %s96
    %p103 = scmp.eq.s32.totalorder %s23, 3
    %p104 = por %p102, %p103
    %p105 = scmp.ne.s32.totalorder %s96, %s97
    %p106 = scmp.eq.s32.totalorder %s23, 0
    %p107 = por %p105, %p106
    %p108 = scmp.ne.s32.totalorder %s96, %s97
    %p109 = scmp.eq.s32.totalorder %s24, 3
    %p110 = por %p108, %p109
    %p112 = scmp.ne.s32.totalorder %s97, %s111
    %p113 = scmp.eq.s32.totalorder %s24, 0
    %p114 = por %p112, %p113
    %s116 = sadd.s32 %s115, 1
    %p119 = scmp.eq.s32.totalorder %s18, 3
    %p120 = scmp.ne.s32.totalorder %s115, %s117
    %p121 = scmp.eq.s32.totalorder %s18, 0
    %p122 = por %p120, %p121
    %p123 = scmp.ne.s32.totalorder %s115, %s117
    %p124 = scmp.eq.s32.totalorder %s23, 3
    %p125 = por %p123, %p124
    %p126 = scmp.ne.s32.totalorder %s117, %s118
    %p127 = scmp.eq.s32.totalorder %s23, 0
    %p128 = por %p126, %p127
    %p129 = scmp.ne.s32.totalorder %s117, %s118
    %p130 = scmp.eq.s32.totalorder %s24, 3
    %p131 = por %p129, %p130
    %p133 = scmp.ne.s32.totalorder %s118, %s132
    %p134 = scmp.eq.s32.totalorder %s24, 0
    %p135 = por %p133, %p134
    %s137 = sadd.s32 %s136, 1
    %p140 = scmp.eq.s32.totalorder %s18, 3
    %p141 = scmp.ne.s32.totalorder %s136, %s138
    %p142 = scmp.eq.s32.totalorder %s18, 0
    %p143 = por %p141, %p142
    %p144 = scmp.ne.s32.totalorder %s136, %s138
    %p145 = scmp.eq.s32.totalorder %s23, 3
    %p146 = por %p144, %p145
    %p147 = scmp.ne.s32.totalorder %s138, %s139
    %p148 = scmp.eq.s32.totalorder %s23, 0
    %p149 = por %p147, %p148
    %p150 = scmp.ne.s32.totalorder %s138, %s139
    %p151 = scmp.eq.s32.totalorder %s24, 3
    %p152 = por %p150, %p151
    %p154 = scmp.ne.s32.totalorder %s139, %s153
    %p155 = scmp.eq.s32.totalorder %s24, 0
    %p156 = por %p154, %p155
    %s158 = sadd.s32 %s157, 1
    %p161 = scmp.eq.s32.totalorder %s18, 3
    %p162 = scmp.ne.s32.totalorder %s157, %s159
    %p163 = scmp.eq.s32.totalorder %s18, 0
    %p164 = por %p162, %p163
    %p165 = scmp.ne.s32.totalorder %s157, %s159
    %p166 = scmp.eq.s32.totalorder %s23, 3
    %p167 = por %p165, %p166
    %p168 = scmp.ne.s32.totalorder %s159, %s160
    %p169 = scmp.eq.s32.totalorder %s23, 0
    %p170 = por %p168, %p169
    %p171 = scmp.ne.s32.totalorder %s159, %s160
    %p172 = scmp.eq.s32.totalorder %s24, 3
    %p173 = por %p171, %p172
    %p175 = scmp.ne.s32.totalorder %s160, %s174
    %p176 = scmp.eq.s32.totalorder %s24, 0
    %p177 = por %p175, %p176
    %s179 = sadd.s32 %s178, 1
    %p182 = scmp.eq.s32.totalorder %s18, 3
    %p183 = scmp.ne.s32.totalorder %s178, %s180
    %p184 = scmp.eq.s32.totalorder %s18, 0
    %p185 = por %p183, %p184
    %p186 = scmp.ne.s32.totalorder %s178, %s180
    %p187 = scmp.eq.s32.totalorder %s23, 3
    %p188 = por %p186, %p187
    %p189 = scmp.ne.s32.totalorder %s180, %s181
    %p190 = scmp.eq.s32.totalorder %s23, 0
    %p191 = por %p189, %p190
    %p192 = scmp.ne.s32.totalorder %s180, %s181
    %p193 = scmp.eq.s32.totalorder %s24, 3
    %p194 = por %p192, %p193
    %p196 = scmp.ne.s32.totalorder %s181, %s195
    %p197 = scmp.eq.s32.totalorder %s24, 0
    %p198 = por %p196, %p197
    %s200 = sadd.s32 %s199, 1
    %p203 = scmp.eq.s32.totalorder %s18, 3
    %p204 = scmp.ne.s32.totalorder %s199, %s201
    %p205 = scmp.eq.s32.totalorder %s18, 0
    %p206 = por %p204, %p205
    %p207 = scmp.ne.s32.totalorder %s199, %s201
    %p208 = scmp.eq.s32.totalorder %s23, 3
    %p209 = por %p207, %p208
    %p210 = scmp.ne.s32.totalorder %s201, %s202
    %p211 = scmp.eq.s32.totalorder %s23, 0
    %p212 = por %p210, %p211
    %p213 = scmp.ne.s32.totalorder %s201, %s202
    %p214 = scmp.eq.s32.totalorder %s24, 3
    %p215 = por %p213, %p214
    %p217 = scmp.ne.s32.totalorder %s202, %s216
    %p218 = scmp.eq.s32.totalorder %s24, 0
    %p219 = por %p217, %p218
    %s221 = sadd.s32 %s220, 1
    %p224 = scmp.eq.s32.totalorder %s18, 3
    %p225 = scmp.ne.s32.totalorder %s220, %s222
    %p226 = scmp.eq.s32.totalorder %s18, 0
    %p227 = por %p225, %p226
    %p228 = scmp.ne.s32.totalorder %s220, %s222
    %p229 = scmp.eq.s32.totalorder %s23, 3
    %p230 = por %p228, %p229
    %p231 = scmp.ne.s32.totalorder %s222, %s223
    %p232 = scmp.eq.s32.totalorder %s23, 0
    %p233 = por %p231, %p232
    %p234 = scmp.ne.s32.totalorder %s222, %s223
    %p235 = scmp.eq.s32.totalorder %s24, 3
    %p236 = por %p234, %p235
    %p238 = scmp.ne.s32.totalorder %s223, %s237
    %p239 = scmp.eq.s32.totalorder %s24, 0
    %p240 = por %p238, %p239
    %s241 = ssub.s32 %s18, %s25
    %p242 = scmp.eq.s32.totalorder %s241, 0
    %s244 = sadd.s32 %s243, 1
    %s245 = scalar_select %p242, %s243, %s244
    %p248 = pneg %p242
    %p249 = scmp.eq.s32.totalorder %s18, 3
    %p250 = por %p248, %p249
    %p251 = scmp.ne.s32.totalorder %s243, %s246
    %p252 = scmp.eq.s32.totalorder %s18, 0
    %p253 = por %p251, %p252
    %p254 = scmp.ne.s32.totalorder %s243, %s246
    %p255 = scmp.eq.s32.totalorder %s23, 3
    %p256 = por %p254, %p255
    %p257 = scmp.ne.s32.totalorder %s246, %s247
    %p258 = scmp.eq.s32.totalorder %s23, 0
    %p259 = por %p257, %p258
    %p260 = scmp.ne.s32.totalorder %s246, %s247
    %p261 = scmp.eq.s32.totalorder %s24, 3
    %p262 = por %p260, %p261
    %p264 = scmp.ne.s32.totalorder %s247, %s263
    %p265 = scmp.eq.s32.totalorder %s24, 0
    %p266 = por %p264, %p265
    %p267 = scmp.le.s32.totalorder 1, %s18
    %p268 = scmp.lt.s32.totalorder %s18, 5
    %p269 = pnand %p267, %p268
    %p270 = pneg %p269
    // Predicated region
    $region9: #{tpu_custom_call.1} parent=5 // pred_check
      _
    $region10: #{tpu_custom_call.1} parent=5 // pred_check_branch
      %272 = sbr.rel (%p269) target = $region12
    $region11: #{tpu_custom_call.1} parent=5 // pred_region
      %s273 = ssub.s32 %s18, 1
      // Predicated region
      $region13: #{tpu_custom_call.1} parent=11 // pred_check
        %p274 = pneg %p65
      $region14: #{tpu_custom_call.1} parent=11 // pred_check_branch
        %276 = sbr.rel (%p274) target = $region16
      $region15: #{tpu_custom_call.1} parent=11 // pred_region
        _
      $region16: #{tpu_custom_call.1} parent=11 // pred_fallthru
        _
      // Predicated region
      $region17: #{tpu_custom_call.1} parent=11 // pred_check
        %p277 = pneg %p86
      $region18: #{tpu_custom_call.1} parent=11 // pred_check_branch
        %279 = sbr.rel (%p277) target = $region20
      $region19: #{tpu_custom_call.1} parent=11 // pred_region
        _
      $region20: #{tpu_custom_call.1} parent=11 // pred_fallthru
        _
      // Predicated region
      $region21: #{tpu_custom_call.1} parent=11 // pred_check
        %p280 = pneg %p107
      $region22: #{tpu_custom_call.1} parent=11 // pred_check_branch
        %282 = sbr.rel (%p280) target = $region24
      $region23: #{tpu_custom_call.1} parent=11 // pred_region
        _
      $region24: #{tpu_custom_call.1} parent=11 // pred_fallthru
        _
      // Predicated region
      $region25: #{tpu_custom_call.1} parent=11 // pred_check
        %p283 = pneg %p128
      $region26: #{tpu_custom_call.1} parent=11 // pred_check_branch
        %285 = sbr.rel (%p283) target = $region28
      $region27: #{tpu_custom_call.1} parent=11 // pred_region
        _
      $region28: #{tpu_custom_call.1} parent=11 // pred_fallthru
        _
      // Predicated region
      $region29: #{tpu_custom_call.1} parent=11 // pred_check
        %p286 = pneg %p149
      $region30: #{tpu_custom_call.1} parent=11 // pred_check_branch
        %288 = sbr.rel (%p286) target = $region32
      $region31: #{tpu_custom_call.1} parent=11 // pred_region
        _
      $region32: #{tpu_custom_call.1} parent=11 // pred_fallthru
        _
      // Predicated region
      $region33: #{tpu_custom_call.1} parent=11 // pred_check
        %p289 = pneg %p170
      $region34: #{tpu_custom_call.1} parent=11 // pred_check_branch
        %291 = sbr.rel (%p289) target = $region36
      $region35: #{tpu_custom_call.1} parent=11 // pred_region
        _
      $region36: #{tpu_custom_call.1} parent=11 // pred_fallthru
        _
      // Predicated region
      $region37: #{tpu_custom_call.1} parent=11 // pred_check
        %p292 = pneg %p191
      $region38: #{tpu_custom_call.1} parent=11 // pred_check_branch
        %294 = sbr.rel (%p292) target = $region40
      $region39: #{tpu_custom_call.1} parent=11 // pred_region
        _
      $region40: #{tpu_custom_call.1} parent=11 // pred_fallthru
        _
      // Predicated region
      $region41: #{tpu_custom_call.1} parent=11 // pred_check
        %p295 = pneg %p212
      $region42: #{tpu_custom_call.1} parent=11 // pred_check_branch
        %297 = sbr.rel (%p295) target = $region44
      $region43: #{tpu_custom_call.1} parent=11 // pred_region
        _
      $region44: #{tpu_custom_call.1} parent=11 // pred_fallthru
        _
      // Predicated region
      $region45: #{tpu_custom_call.1} parent=11 // pred_check
        %p298 = pneg %p233
      $region46: #{tpu_custom_call.1} parent=11 // pred_check_branch
        %300 = sbr.rel (%p298) target = $region48
      $region47: #{tpu_custom_call.1} parent=11 // pred_region
        _
      $region48: #{tpu_custom_call.1} parent=11 // pred_fallthru
        _
    $region12: #{tpu_custom_call.1} parent=5 // pred_fallthru
      _
    %p301 = scmp.lt.s32.totalorder %s18, 4
    // Predicated region
    $region49: #{tpu_custom_call.1} parent=5 // pred_check
      %p302 = pneg %p301
    $region50: #{tpu_custom_call.1} parent=5 // pred_check_branch
      %304 = sbr.rel (%p302) target = $region52
    $region51: #{tpu_custom_call.1} parent=5 // pred_region
      // Predicated region
      $region53: #{tpu_custom_call.1} parent=51 // pred_check
        %p305 = pneg %p38
      $region54: #{tpu_custom_call.1} parent=51 // pred_check_branch
        %307 = sbr.rel (%p305) target = $region56
      $region55: #{tpu_custom_call.1} parent=51 // pred_region
        %p308 = scmp.lt.s32.totalorder %s18, 3
        %s309 = scalar_select %p308, %s18, 3
        %s310 = smul.addr %s309, 56
        %s311 = smul.addr %s310, 8
        %s312 = scalar_lea.vmem %s0, %s311
      $region56: #{tpu_custom_call.1} parent=51 // pred_fallthru
        _
    $region52: #{tpu_custom_call.1} parent=5 // pred_fallthru
      _
    %p313 = scmp.le.s32.totalorder 1, %s18
    %p314 = scmp.lt.s32.totalorder %s18, 5
    %p315 = pnand %p313, %p314
    %p316 = pneg %p315
    // Predicated region
    $region57: #{tpu_custom_call.1} parent=5 // pred_check
      _
    $region58: #{tpu_custom_call.1} parent=5 // pred_check_branch
      %318 = sbr.rel (%p315) target = $region60
    $region59: #{tpu_custom_call.1} parent=5 // pred_region
      %s319 = ssub.s32 %s18, 1
      %p320 = scmp.lt.s32.totalorder %s23, 3
      %s321 = scalar_select %p320, %s23, 3
      %s322 = smul.addr %s321, 56
      %s323 = smul.addr %s322, 8
      %s324 = scalar_lea.vmem %s0, %s323
      %p325 = pneg %p44
      %p326 = pneg %p41
      %p327 = pneg %p65
      %p328 = pneg %p62
      %p329 = pneg %p86
      %p330 = pneg %p83
      %p331 = pneg %p107
      %p332 = pneg %p104
      %p333 = pneg %p128
      %p334 = pneg %p125
      %p335 = pneg %p149
      %p336 = pneg %p146
      %p337 = pneg %p170
      %p338 = pneg %p167
      %p339 = pneg %p191
      %p340 = pneg %p188
      %p341 = pneg %p212
      %p342 = pneg %p209
      %p343 = pneg %p233
      %p344 = pneg %p230
      %p345 = pneg %p259
      %p346 = pneg %p256
      %p347 = scmp.lt.s32.totalorder %s23, 3
      %s348 = scalar_select %p347, %s23, 3
      %s349 = smul.addr %s348, 2
      %s350 = smul.addr %s349, 8
      %s351 = scalar_lea.vmem %s10, %s350
      %p352 = scmp.lt.s32.totalorder %s23, 3
      %s353 = scalar_select %p352, %s23, 3
      %s354 = smul.addr %s353, 56
      %s355 = smul.addr %s354, 8
      %s356 = scalar_lea.vmem %s0, %s355
      %p357 = scmp.lt.s32.totalorder %s23, 3
      %s358 = scalar_select %p357, %s23, 3
      %s359 = smul.addr %s358, 2
      %s360 = smul.addr %s359, 8
      %s361 = scalar_lea.vmem %s10, %s360
      %vm362 = vcmask 687104
      %363 = vst.msk [vmem:[#allocation2] sm:$0xff] %vm362, 0.0
      %364 = vst.msk [vmem:[#allocation2 + $0xe8] sm:$0xff] %vm362, 0.0
      %v365 = vld [vmem:[%s356] sm:$0xff]
      %v366 = vld [vmem:[%s356 + $0x8] sm:$0xff]
      %v367 = vld [vmem:[%s356 + $0x10] sm:$0xff]
      %v368 = vld [vmem:[%s356 + $0x18] sm:$0xff]
      %v369 = vld [vmem:[%s356 + $0x20] sm:$0xff]
      %v370 = vld [vmem:[%s356 + $0x28] sm:$0xff]
      %v371 = vld [vmem:[%s356 + $0x30] sm:$0xff]
      %v372 = vld [vmem:[%s356 + $0x38] sm:$0xff]
      %v373 = vld [vmem:[%s356 + $0x40] sm:$0xff]
      %v374 = vld [vmem:[%s356 + $0x48] sm:$0xff]
      %v375 = vld [vmem:[%s356 + $0x50] sm:$0xff]
      %v376 = vld [vmem:[%s356 + $0x58] sm:$0xff]
      %v377 = vld [vmem:[%s356 + $0x60] sm:$0xff]
      %v378 = vld [vmem:[%s356 + $0x68] sm:$0xff]
      %v379 = vld [vmem:[%s356 + $0x70] sm:$0xff]
      %v380 = vld [vmem:[%s356 + $0x78] sm:$0xff]
      %v381 = vld [vmem:[%s356 + $0x80] sm:$0xff]
      %v382 = vld [vmem:[%s356 + $0x88] sm:$0xff]
      %v383 = vld [vmem:[%s356 + $0x90] sm:$0xff]
      %v384 = vld [vmem:[%s356 + $0x98] sm:$0xff]
      %v385 = vld [vmem:[%s356 + $0xa0] sm:$0xff]
      %v386 = vld [vmem:[%s356 + $0xa8] sm:$0xff]
      %v387 = vld [vmem:[%s356 + $0xb0] sm:$0xff]
      %v388 = vld [vmem:[%s356 + $0xb8] sm:$0xff]
      %v389 = vld [vmem:[%s356 + $0xc0] sm:$0xff]
      %v390 = vld [vmem:[%s356 + $0xc8] sm:$0xff]
      %v391 = vld [vmem:[%s356 + $0xd0] sm:$0xff]
      %v392 = vld [vmem:[%s356 + $0xd8] sm:$0xff]
      %v393 = vld [vmem:[%s356 + $0xe0] sm:$0xff]
      %v394 = vld [vmem:[%s356 + $0xe8] sm:$0xff]
      %v395 = vld [vmem:[%s356 + $0xf0] sm:$0xff]
      %v396 = vld [vmem:[%s356 + $0xf8] sm:$0xff]
      %v397 = vld [vmem:[%s356 + $0x100] sm:$0xff]
      %v398 = vld [vmem:[%s356 + $0x108] sm:$0xff]
      %v399 = vld [vmem:[%s356 + $0x110] sm:$0xff]
      %v400 = vld [vmem:[%s356 + $0x118] sm:$0xff]
      %v401 = vld [vmem:[%s356 + $0x120] sm:$0xff]
      %v402 = vld [vmem:[%s356 + $0x128] sm:$0xff]
      %v403 = vld [vmem:[%s356 + $0x130] sm:$0xff]
      %v404 = vld [vmem:[%s356 + $0x138] sm:$0xff]
      %v405 = vld [vmem:[%s356 + $0x140] sm:$0xff]
      %v406 = vld [vmem:[%s356 + $0x148] sm:$0xff]
      %v407 = vld [vmem:[%s356 + $0x150] sm:$0xff]
      %v408 = vld [vmem:[%s356 + $0x158] sm:$0xff]
      %v409 = vld [vmem:[%s356 + $0x160] sm:$0xff]
      %v410 = vld [vmem:[%s356 + $0x168] sm:$0xff]
      %v411 = vld [vmem:[%s356 + $0x170] sm:$0xff]
      %v412 = vld [vmem:[%s356 + $0x178] sm:$0xff]
      %v413 = vld [vmem:[%s356 + $0x180] sm:$0xff]
      %v414 = vld [vmem:[%s356 + $0x188] sm:$0xff]
      %v415 = vld [vmem:[%s356 + $0x190] sm:$0xff]
      %v416 = vld [vmem:[%s356 + $0x198] sm:$0xff]
      %v417 = vld [vmem:[%s356 + $0x1a0] sm:$0xff]
      %v418 = vld [vmem:[%s356 + $0x1a8] sm:$0xff]
      %v419 = vld [vmem:[%s356 + $0x1b0] sm:$0xff]
      %v420 = vld [vmem:[%s356 + $0x1b8] sm:$0xff]
      %v421 = vld [vmem:[%s1] sm:$0xff]
      %v422 = vld [vmem:[%s1 + $0x8] sm:$0xff]
      %v423 = vld [vmem:[%s1 + $0x10] sm:$0xff]
      %v424 = vld [vmem:[%s1 + $0x18] sm:$0xff]
      %v425 = vld [vmem:[%s1 + $0x20] sm:$0xff]
      %v426 = vld [vmem:[%s1 + $0x28] sm:$0xff]
      %v427 = vld [vmem:[%s1 + $0x30] sm:$0xff]
      %v428 = vld [vmem:[%s1 + $0x38] sm:$0xff]
      %v429 = vld [vmem:[%s1 + $0x40] sm:$0xff]
      %v430 = vld [vmem:[%s1 + $0x48] sm:$0xff]
      %v431 = vld [vmem:[%s1 + $0x50] sm:$0xff]
      %v432 = vld [vmem:[%s1 + $0x58] sm:$0xff]
      %v433 = vld [vmem:[%s1 + $0x60] sm:$0xff]
      %v434 = vld [vmem:[%s1 + $0x68] sm:$0xff]
      %v435 = vld [vmem:[%s1 + $0x70] sm:$0xff]
      %v436 = vld [vmem:[%s1 + $0x78] sm:$0xff]
      %v437 = vld [vmem:[%s1 + $0x80] sm:$0xff]
      %v438 = vld [vmem:[%s1 + $0x88] sm:$0xff]
      %v439 = vld [vmem:[%s1 + $0x90] sm:$0xff]
      %v440 = vld [vmem:[%s1 + $0x98] sm:$0xff]
      %v441 = vld [vmem:[%s1 + $0xa0] sm:$0xf]
      %v442 = vld [vmem:[%s1 + $0xa8] sm:$0xf]
      %v444 = vsel %vm362, %v365, 0
      %v447 = vsel %vm362, %v366, 0
      %v450 = vsel %vm362, %v367, 0
      %v453 = vsel %vm362, %v368, 0
      %v456 = vsel %vm362, %v369, 0
      %v459 = vsel %vm362, %v370, 0
      %v462 = vsel %vm362, %v371, 0
      %v465 = vsel %vm362, %v372, 0
      %v468 = vsel %vm362, %v373, 0
      %v471 = vsel %vm362, %v374, 0
      %v474 = vsel %vm362, %v375, 0
      %v477 = vsel %vm362, %v376, 0
      %v480 = vsel %vm362, %v377, 0
      %v483 = vsel %vm362, %v378, 0
      %v486 = vsel %vm362, %v379, 0
      %v489 = vsel %vm362, %v380, 0
      %v492 = vsel %vm362, %v381, 0
      %v495 = vsel %vm362, %v382, 0
      %v498 = vsel %vm362, %v383, 0
      %v501 = vsel %vm362, %v384, 0
      %v504 = vsel %vm362, %v385, 0
      %v507 = vsel %vm362, %v386, 0
      %v510 = vsel %vm362, %v387, 0
      %v513 = vsel %vm362, %v388, 0
      %v516 = vsel %vm362, %v389, 0
      %v519 = vsel %vm362, %v390, 0
      %v522 = vsel %vm362, %v391, 0
      %v525 = vsel %vm362, %v392, 0
      %v528 = vsel %vm362, %v393, 0
      %v531 = vsel %vm362, %v394, 0
      %v534 = vsel %vm362, %v395, 0
      %v537 = vsel %vm362, %v396, 0
      %v540 = vsel %vm362, %v397, 0
      %v543 = vsel %vm362, %v398, 0
      %v546 = vsel %vm362, %v399, 0
      %v549 = vsel %vm362, %v400, 0
      %v552 = vsel %vm362, %v401, 0
      %v555 = vsel %vm362, %v402, 0
      %v558 = vsel %vm362, %v403, 0
      %v561 = vsel %vm362, %v404, 0
      %v564 = vsel %vm362, %v405, 0
      %v567 = vsel %vm362, %v406, 0
      %v570 = vsel %vm362, %v407, 0
      %v573 = vsel %vm362, %v408, 0
      %v576 = vsel %vm362, %v409, 0
      %v579 = vsel %vm362, %v410, 0
      %v582 = vsel %vm362, %v411, 0
      %v585 = vsel %vm362, %v412, 0
      %v588 = vsel %vm362, %v413, 0
      %v591 = vsel %vm362, %v414, 0
      %v594 = vsel %vm362, %v415, 0
      %v597 = vsel %vm362, %v416, 0
      %v600 = vsel %vm362, %v417, 0
      %v603 = vsel %vm362, %v418, 0
      %v606 = vsel %vm362, %v419, 0
      %v609 = vsel %vm362, %v420, 0
      %vm611 = vcmask 1043456
      %v613 = vsel %vm611, %v441, 0
      %v616 = vsel %vm611, %v442, 0
      %618 = vmatprep.subr.mxu0 0.0
      %619 = vmatpush1.msra.mxu0 0.0
      %620 = vmatprep.subr.mxu0 0.0
      %621 = vmatpush1.msra.mxu0 0.0
      %622 = vmatprep.subr.mxu0 0.0
      %623 = vmatpush1.msra.mxu0 0.0
      %624 = vmatprep.subr.mxu0 0.0
      %625 = vmatpush1.msra.mxu0 0.0
      %626 = vmatprep.subr.mxu0 0.0
      %627 = vmatpush1.msra.mxu0 0.0
      %628 = vmatprep.subr.mxu0 %v616
      %629 = vmatpush1.msra.mxu0 %v613
      %630 = vmatprep.subr.mxu0 %v440
      %631 = vmatpush1.msra.mxu0 %v439
      %632 = vmatprep.subr.mxu0 %v438
      %633 = vmatpush1.msra.mxu0 %v437
      %634 = vmatprep.subr.mxu0 %v436
      %635 = vmatpush1.msra.mxu0 %v435
      %636 = vmatprep.subr.mxu0 %v434
      %637 = vmatpush1.msra.mxu0 %v433
      %638 = vmatprep.subr.mxu0 %v432
      %639 = vmatpush1.msra.mxu0 %v431
      %640 = vmatprep.subr.mxu0 %v430
      %641 = vmatpush1.msra.mxu0 %v429
      %642 = vmatprep.subr.mxu0 %v428
      %643 = vmatpush1.msra.mxu0 %v427
      %644 = vmatprep.subr.mxu0 %v426
      %645 = vmatpush1.msra.mxu0 %v425
      %646 = vmatprep.subr.mxu0 %v424
      %647 = vmatpush1.msra.mxu0 %v423
      %648 = vmatprep.subr.mxu0 %v422
      %649 = vmatpush1.msra.mxu0 %v421
      %650 = vmatprep.subr.mxu0 0.0
      %651 = vmatpush2.msra.mxu0 0.0
      %652 = vmatprep.subr.mxu0 0.0
      %653 = vmatpush2.msra.mxu0 0.0
      %654 = vmatprep.subr.mxu0 0.0
      %655 = vmatpush2.msra.mxu0 0.0
      %656 = vmatprep.subr.mxu0 0.0
      %657 = vmatpush2.msra.mxu0 0.0
      %658 = vmatprep.subr.mxu0 0.0
      %659 = vmatpush2.msra.mxu0 0.0
      %660 = vmatprep.subr.mxu0 0.0
      %661 = vmatpush2.msra.mxu0 0.0
      %662 = vmatprep.subr.mxu0 0.0
      %663 = vmatpush2.msra.mxu0 0.0
      %664 = vmatprep.subr.mxu0 0.0
      %665 = vmatpush2.msra.mxu0 0.0
      %666 = vmatprep.subr.mxu0 0.0
      %667 = vmatpush2.msra.mxu0 0.0
      %668 = vmatprep.subr.mxu0 0.0
      %669 = vmatpush2.msra.mxu0 0.0
      %670 = vmatprep.subr.mxu0 0.0
      %671 = vmatpush2.msra.mxu0 0.0
      %672 = vmatprep.subr.mxu0 0.0
      %673 = vmatpush2.msra.mxu0 0.0
      %674 = vmatprep.subr.mxu0 0.0
      %675 = vmatpush2.msra.mxu0 0.0
      %676 = vmatprep.subr.mxu0 0.0
      %677 = vmatpush2.msra.mxu0 0.0
      %678 = vmatprep.subr.mxu0 0.0
      %679 = vmatpush2.msra.mxu0 0.0
      %680 = vmatprep.subr.mxu0 0.0
      %681 = vmatpush2.msra.mxu0 0.0
      %682 = vmatprep.mubr.f32.mxu0 0.0
      %683 = vmatmul.mubr.f32.gmra.mxu0 %v444
      %v684 = vpop.f32.mrf.mxu0
      %v685 = vadd.f32 0.0, %v684
      %v686 = vpop.f32.mrf.mxu0
      %v687 = vadd.f32 0.0, %v686
      %688 = vmatprep.mubr.f32.mxu0 0.0
      %689 = vmatmul.mubr.f32.gmra.mxu0 %v447
      %v690 = vpop.f32.mrf.mxu0
      %v691 = vadd.f32 0.0, %v690
      %v692 = vpop.f32.mrf.mxu0
      %v693 = vadd.f32 0.0, %v692
      %694 = vmatprep.mubr.f32.mxu0 0.0
      %695 = vmatmul.mubr.f32.gmra.mxu0 %v450
      %v696 = vpop.f32.mrf.mxu0
      %v697 = vadd.f32 0.0, %v696
      %v698 = vpop.f32.mrf.mxu0
      %v699 = vadd.f32 0.0, %v698
      %700 = vmatprep.mubr.f32.mxu0 0.0
      %701 = vmatmul.mubr.f32.gmra.mxu0 %v453
      %v702 = vpop.f32.mrf.mxu0
      %v703 = vadd.f32 0.0, %v702
      %v704 = vpop.f32.mrf.mxu0
      %v705 = vadd.f32 0.0, %v704
      %706 = vmatprep.mubr.f32.mxu0 0.0
      %707 = vmatmul.mubr.f32.gmra.mxu0 %v456
      %v708 = vpop.f32.mrf.mxu0
      %v709 = vadd.f32 0.0, %v708
      %v710 = vpop.f32.mrf.mxu0
      %v711 = vadd.f32 0.0, %v710
      %712 = vmatprep.mubr.f32.mxu0 0.0
      %713 = vmatmul.mubr.f32.gmra.mxu0 %v459
      %v714 = vpop.f32.mrf.mxu0
      %v715 = vadd.f32 0.0, %v714
      %v716 = vpop.f32.mrf.mxu0
      %v717 = vadd.f32 0.0, %v716
      %718 = vmatprep.mubr.f32.mxu0 0.0
      %719 = vmatmul.mubr.f32.gmra.mxu0 %v462
      %v720 = vpop.f32.mrf.mxu0
      %v721 = vadd.f32 0.0, %v720
      %v722 = vpop.f32.mrf.mxu0
      %v723 = vadd.f32 0.0, %v722
      %724 = vmatprep.mubr.f32.mxu0 0.0
      %725 = vmatmul.mubr.f32.gmra.mxu0 %v465
      %v726 = vpop.f32.mrf.mxu0
      %v727 = vadd.f32 0.0, %v726
      %v728 = vpop.f32.mrf.mxu0
      %v729 = vadd.f32 0.0, %v728
      %730 = vmatprep.mubr.f32.mxu0 0.0
      %731 = vmatmul.mubr.f32.gmra.mxu0 %v468
      %v732 = vpop.f32.mrf.mxu0
      %v733 = vadd.f32 0.0, %v732
      %v734 = vpop.f32.mrf.mxu0
      %v735 = vadd.f32 0.0, %v734
      %736 = vmatprep.mubr.f32.mxu0 0.0
      %737 = vmatmul.mubr.f32.gmra.mxu0 %v471
      %v738 = vpop.f32.mrf.mxu0
      %v739 = vadd.f32 0.0, %v738
      %v740 = vpop.f32.mrf.mxu0
      %v741 = vadd.f32 0.0, %v740
      %742 = vmatprep.mubr.f32.mxu0 0.0
      %743 = vmatmul.mubr.f32.gmra.mxu0 %v474
      %v744 = vpop.f32.mrf.mxu0
      %v745 = vadd.f32 0.0, %v744
      %v746 = vpop.f32.mrf.mxu0
      %v747 = vadd.f32 0.0, %v746
      %748 = vmatprep.mubr.f32.mxu0 0.0
      %749 = vmatmul.mubr.f32.gmra.mxu0 %v477
      %v750 = vpop.f32.mrf.mxu0
      %v751 = vadd.f32 0.0, %v750
      %v752 = vpop.f32.mrf.mxu0
      %v753 = vadd.f32 0.0, %v752
      %754 = vmatprep.mubr.f32.mxu0 0.0
      %755 = vmatmul.mubr.f32.gmra.mxu0 %v480
      %v756 = vpop.f32.mrf.mxu0
      %v757 = vadd.f32 0.0, %v756
      %v758 = vpop.f32.mrf.mxu0
      %v759 = vadd.f32 0.0, %v758
      %760 = vmatprep.mubr.f32.mxu0 0.0
      %761 = vmatmul.mubr.f32.gmra.mxu0 %v483
      %v762 = vpop.f32.mrf.mxu0
      %v763 = vadd.f32 0.0, %v762
      %v764 = vpop.f32.mrf.mxu0
      %v765 = vadd.f32 0.0, %v764
      %766 = vmatprep.mubr.f32.mxu0 0.0
      %767 = vmatmul.mubr.f32.gmra.mxu0 %v486
      %v768 = vpop.f32.mrf.mxu0
      %v769 = vadd.f32 0.0, %v768
      %v770 = vpop.f32.mrf.mxu0
      %v771 = vadd.f32 0.0, %v770
      %772 = vmatprep.mubr.f32.mxu0 0.0
      %773 = vmatmul.mubr.f32.gmra.mxu0 %v489
      %v774 = vpop.f32.mrf.mxu0
      %v775 = vadd.f32 0.0, %v774
      %v776 = vpop.f32.mrf.mxu0
      %v777 = vadd.f32 0.0, %v776
      %778 = vmatprep.mubr.f32.mxu0 0.0
      %779 = vmatmul.mubr.f32.gmra.mxu0 %v492
      %v780 = vpop.f32.mrf.mxu0
      %v781 = vadd.f32 0.0, %v780
      %v782 = vpop.f32.mrf.mxu0
      %v783 = vadd.f32 0.0, %v782
      %784 = vmatprep.mubr.f32.mxu0 0.0
      %785 = vmatmul.mubr.f32.gmra.mxu0 %v495
      %v786 = vpop.f32.mrf.mxu0
      %v787 = vadd.f32 0.0, %v786
      %v788 = vpop.f32.mrf.mxu0
      %v789 = vadd.f32 0.0, %v788
      %790 = vmatprep.mubr.f32.mxu0 0.0
      %791 = vmatmul.mubr.f32.gmra.mxu0 %v498
      %v792 = vpop.f32.mrf.mxu0
      %v793 = vadd.f32 0.0, %v792
      %v794 = vpop.f32.mrf.mxu0
      %v795 = vadd.f32 0.0, %v794
      %796 = vmatprep.mubr.f32.mxu0 0.0
      %797 = vmatmul.mubr.f32.gmra.mxu0 %v501
      %v798 = vpop.f32.mrf.mxu0
      %v799 = vadd.f32 0.0, %v798
      %v800 = vpop.f32.mrf.mxu0
      %v801 = vadd.f32 0.0, %v800
      %802 = vmatprep.mubr.f32.mxu0 0.0
      %803 = vmatmul.mubr.f32.gmra.mxu0 %v504
      %v804 = vpop.f32.mrf.mxu0
      %v805 = vadd.f32 0.0, %v804
      %v806 = vpop.f32.mrf.mxu0
      %v807 = vadd.f32 0.0, %v806
      %808 = vmatprep.mubr.f32.mxu0 0.0
      %809 = vmatmul.mubr.f32.gmra.mxu0 %v507
      %v810 = vpop.f32.mrf.mxu0
      %v811 = vadd.f32 0.0, %v810
      %v812 = vpop.f32.mrf.mxu0
      %v813 = vadd.f32 0.0, %v812
      %814 = vmatprep.mubr.f32.mxu0 0.0
      %815 = vmatmul.mubr.f32.gmra.mxu0 %v510
      %v816 = vpop.f32.mrf.mxu0
      %v817 = vadd.f32 0.0, %v816
      %v818 = vpop.f32.mrf.mxu0
      %v819 = vadd.f32 0.0, %v818
      %820 = vmatprep.mubr.f32.mxu0 0.0
      %821 = vmatmul.mubr.f32.gmra.mxu0 %v513
      %v822 = vpop.f32.mrf.mxu0
      %v823 = vadd.f32 0.0, %v822
      %v824 = vpop.f32.mrf.mxu0
      %v825 = vadd.f32 0.0, %v824
      %826 = vmatprep.mubr.f32.mxu0 0.0
      %827 = vmatmul.mubr.f32.gmra.mxu0 %v516
      %v828 = vpop.f32.mrf.mxu0
      %v829 = vadd.f32 0.0, %v828
      %v830 = vpop.f32.mrf.mxu0
      %v831 = vadd.f32 0.0, %v830
      %832 = vmatprep.mubr.f32.mxu0 0.0
      %833 = vmatmul.mubr.f32.gmra.mxu0 %v519
      %v834 = vpop.f32.mrf.mxu0
      %v835 = vadd.f32 0.0, %v834
      %v836 = vpop.f32.mrf.mxu0
      %v837 = vadd.f32 0.0, %v836
      %838 = vmatprep.mubr.f32.mxu0 0.0
      %839 = vmatmul.mubr.f32.gmra.mxu0 %v522
      %v840 = vpop.f32.mrf.mxu0
      %v841 = vadd.f32 0.0, %v840
      %v842 = vpop.f32.mrf.mxu0
      %v843 = vadd.f32 0.0, %v842
      %844 = vmatprep.mubr.f32.mxu0 0.0
      %845 = vmatmul.mubr.f32.gmra.mxu0 %v525
      %v846 = vpop.f32.mrf.mxu0
      %v847 = vadd.f32 0.0, %v846
      %v848 = vpop.f32.mrf.mxu0
      %v849 = vadd.f32 0.0, %v848
      %850 = vmatprep.mubr.f32.mxu0 0.0
      %851 = vmatmul.mubr.f32.gmra.mxu0 %v528
      %v852 = vpop.f32.mrf.mxu0
      %v853 = vadd.f32 0.0, %v852
      %v854 = vpop.f32.mrf.mxu0
      %v855 = vadd.f32 0.0, %v854
      %856 = vmatprep.mubr.f32.mxu0 0.0
      %857 = vmatmul.mubr.f32.gmra.mxu0 %v531
      %v858 = vpop.f32.mrf.mxu0
      %v859 = vadd.f32 0.0, %v858
      %v860 = vpop.f32.mrf.mxu0
      %v861 = vadd.f32 0.0, %v860
      %862 = vmatprep.mubr.f32.mxu0 0.0
      %863 = vmatmul.mubr.f32.gmra.mxu0 %v534
      %v864 = vpop.f32.mrf.mxu0
      %v865 = vadd.f32 0.0, %v864
      %v866 = vpop.f32.mrf.mxu0
      %v867 = vadd.f32 0.0, %v866
      %868 = vmatprep.mubr.f32.mxu0 0.0
      %869 = vmatmul.mubr.f32.gmra.mxu0 %v537
      %v870 = vpop.f32.mrf.mxu0
      %v871 = vadd.f32 0.0, %v870
      %v872 = vpop.f32.mrf.mxu0
      %v873 = vadd.f32 0.0, %v872
      %874 = vmatprep.mubr.f32.mxu0 0.0
      %875 = vmatmul.mubr.f32.gmra.mxu0 %v540
      %v876 = vpop.f32.mrf.mxu0
      %v877 = vadd.f32 0.0, %v876
      %v878 = vpop.f32.mrf.mxu0
      %v879 = vadd.f32 0.0, %v878
      %880 = vmatprep.mubr.f32.mxu0 0.0
      %881 = vmatmul.mubr.f32.gmra.mxu0 %v543
      %v882 = vpop.f32.mrf.mxu0
      %v883 = vadd.f32 0.0, %v882
      %v884 = vpop.f32.mrf.mxu0
      %v885 = vadd.f32 0.0, %v884
      %886 = vmatprep.mubr.f32.mxu0 0.0
      %887 = vmatmul.mubr.f32.gmra.mxu0 %v546
      %v888 = vpop.f32.mrf.mxu0
      %v889 = vadd.f32 0.0, %v888
      %v890 = vpop.f32.mrf.mxu0
      %v891 = vadd.f32 0.0, %v890
      %892 = vmatprep.mubr.f32.mxu0 0.0
      %893 = vmatmul.mubr.f32.gmra.mxu0 %v549
      %v894 = vpop.f32.mrf.mxu0
      %v895 = vadd.f32 0.0, %v894
      %v896 = vpop.f32.mrf.mxu0
      %v897 = vadd.f32 0.0, %v896
      %898 = vmatprep.mubr.f32.mxu0 0.0
      %899 = vmatmul.mubr.f32.gmra.mxu0 %v552
      %v900 = vpop.f32.mrf.mxu0
      %v901 = vadd.f32 0.0, %v900
      %v902 = vpop.f32.mrf.mxu0
      %v903 = vadd.f32 0.0, %v902
      %904 = vmatprep.mubr.f32.mxu0 0.0
      %905 = vmatmul.mubr.f32.gmra.mxu0 %v555
      %v906 = vpop.f32.mrf.mxu0
      %v907 = vadd.f32 0.0, %v906
      %v908 = vpop.f32.mrf.mxu0
      %v909 = vadd.f32 0.0, %v908
      %910 = vmatprep.mubr.f32.mxu0 0.0
      %911 = vmatmul.mubr.f32.gmra.mxu0 %v558
      %v912 = vpop.f32.mrf.mxu0
      %v913 = vadd.f32 0.0, %v912
      %v914 = vpop.f32.mrf.mxu0
      %v915 = vadd.f32 0.0, %v914
      %916 = vmatprep.mubr.f32.mxu0 0.0
      %917 = vmatmul.mubr.f32.gmra.mxu0 %v561
      %v918 = vpop.f32.mrf.mxu0
      %v919 = vadd.f32 0.0, %v918
      %v920 = vpop.f32.mrf.mxu0
      %v921 = vadd.f32 0.0, %v920
      %922 = vmatprep.mubr.f32.mxu0 0.0
      %923 = vmatmul.mubr.f32.gmra.mxu0 %v564
      %v924 = vpop.f32.mrf.mxu0
      %v925 = vadd.f32 0.0, %v924
      %v926 = vpop.f32.mrf.mxu0
      %v927 = vadd.f32 0.0, %v926
      %928 = vmatprep.mubr.f32.mxu0 0.0
      %929 = vmatmul.mubr.f32.gmra.mxu0 %v567
      %v930 = vpop.f32.mrf.mxu0
      %v931 = vadd.f32 0.0, %v930
      %v932 = vpop.f32.mrf.mxu0
      %v933 = vadd.f32 0.0, %v932
      %934 = vmatprep.mubr.f32.mxu0 0.0
      %935 = vmatmul.mubr.f32.gmra.mxu0 %v570
      %v936 = vpop.f32.mrf.mxu0
      %v937 = vadd.f32 0.0, %v936
      %v938 = vpop.f32.mrf.mxu0
      %v939 = vadd.f32 0.0, %v938
      %940 = vmatprep.mubr.f32.mxu0 0.0
      %941 = vmatmul.mubr.f32.gmra.mxu0 %v573
      %v942 = vpop.f32.mrf.mxu0
      %v943 = vadd.f32 0.0, %v942
      %v944 = vpop.f32.mrf.mxu0
      %v945 = vadd.f32 0.0, %v944
      %946 = vmatprep.mubr.f32.mxu0 0.0
      %947 = vmatmul.mubr.f32.gmra.mxu0 %v576
      %v948 = vpop.f32.mrf.mxu0
      %v949 = vadd.f32 0.0, %v948
      %v950 = vpop.f32.mrf.mxu0
      %v951 = vadd.f32 0.0, %v950
      %952 = vmatprep.mubr.f32.mxu0 0.0
      %953 = vmatmul.mubr.f32.gmra.mxu0 %v579
      %v954 = vpop.f32.mrf.mxu0
      %v955 = vadd.f32 0.0, %v954
      %v956 = vpop.f32.mrf.mxu0
      %v957 = vadd.f32 0.0, %v956
      %958 = vmatprep.mubr.f32.mxu0 0.0
      %959 = vmatmul.mubr.f32.gmra.mxu0 %v582
      %v960 = vpop.f32.mrf.mxu0
      %v961 = vadd.f32 0.0, %v960
      %v962 = vpop.f32.mrf.mxu0
      %v963 = vadd.f32 0.0, %v962
      %964 = vmatprep.mubr.f32.mxu0 0.0
      %965 = vmatmul.mubr.f32.gmra.mxu0 %v585
      %v966 = vpop.f32.mrf.mxu0
      %v967 = vadd.f32 0.0, %v966
      %v968 = vpop.f32.mrf.mxu0
      %v969 = vadd.f32 0.0, %v968
      %970 = vmatprep.mubr.f32.mxu0 0.0
      %971 = vmatmul.mubr.f32.gmra.mxu0 %v588
      %v972 = vpop.f32.mrf.mxu0
      %v973 = vadd.f32 0.0, %v972
      %v974 = vpop.f32.mrf.mxu0
      %v975 = vadd.f32 0.0, %v974
      %976 = vmatprep.mubr.f32.mxu0 0.0
      %977 = vmatmul.mubr.f32.gmra.mxu0 %v591
      %v978 = vpop.f32.mrf.mxu0
      %v979 = vadd.f32 0.0, %v978
      %v980 = vpop.f32.mrf.mxu0
      %v981 = vadd.f32 0.0, %v980
      %982 = vmatprep.mubr.f32.mxu0 0.0
      %983 = vmatmul.mubr.f32.gmra.mxu0 %v594
      %v984 = vpop.f32.mrf.mxu0
      %v985 = vadd.f32 0.0, %v984
      %v986 = vpop.f32.mrf.mxu0
      %v987 = vadd.f32 0.0, %v986
      %988 = vmatprep.mubr.f32.mxu0 0.0
      %989 = vmatmul.mubr.f32.gmra.mxu0 %v597
      %v990 = vpop.f32.mrf.mxu0
      %v991 = vadd.f32 0.0, %v990
      %v992 = vpop.f32.mrf.mxu0
      %v993 = vadd.f32 0.0, %v992
      %994 = vmatprep.mubr.f32.mxu0 0.0
      %995 = vmatmul.mubr.f32.gmra.mxu0 %v600
      %v996 = vpop.f32.mrf.mxu0
      %v997 = vadd.f32 0.0, %v996
      %v998 = vpop.f32.mrf.mxu0
      %v999 = vadd.f32 0.0, %v998
      %1000 = vmatprep.mubr.f32.mxu0 0.0
      %1001 = vmatmul.mubr.f32.gmra.mxu0 %v603
      %v1002 = vpop.f32.mrf.mxu0
      %v1003 = vadd.f32 0.0, %v1002
      %v1004 = vpop.f32.mrf.mxu0
      %v1005 = vadd.f32 0.0, %v1004
      %1006 = vmatprep.mubr.f32.mxu0 0.0
      %1007 = vmatmul.mubr.f32.gmra.mxu0 %v606
      %v1008 = vpop.f32.mrf.mxu0
      %v1009 = vadd.f32 0.0, %v1008
      %v1010 = vpop.f32.mrf.mxu0
      %v1011 = vadd.f32 0.0, %v1010
      %1012 = vmatprep.mubr.f32.mxu0 0.0
      %1013 = vmatmul.mubr.f32.gmra.mxu0 %v609
      %v1014 = vpop.f32.mrf.mxu0
      %v1015 = vadd.f32 0.0, %v1014
      %v1016 = vpop.f32.mrf.mxu0
      %v1017 = vadd.f32 0.0, %v1016
      %1018 = vdwg.mxu0
      %v1019 = vmax.f32 %v685, %v687
      %v1020 = vmax.f32 %v691, %v693
      %v1021 = vmax.f32 %v697, %v699
      %v1022 = vmax.f32 %v703, %v705
      %v1023 = vmax.f32 %v709, %v711
      %v1024 = vmax.f32 %v715, %v717
      %v1025 = vmax.f32 %v721, %v723
      %v1026 = vmax.f32 %v727, %v729
      %v1027 = vmax.f32 %v733, %v735
      %v1028 = vmax.f32 %v739, %v741
      %v1029 = vmax.f32 %v745, %v747
      %v1030 = vmax.f32 %v751, %v753
      %v1031 = vmax.f32 %v757, %v759
      %v1032 = vmax.f32 %v763, %v765
      %v1033 = vmax.f32 %v769, %v771
      %v1034 = vmax.f32 %v775, %v777
      %v1035 = vmax.f32 %v781, %v783
      %v1036 = vmax.f32 %v787, %v789
      %v1037 = vmax.f32 %v793, %v795
      %v1038 = vmax.f32 %v799, %v801
      %v1039 = vmax.f32 %v805, %v807
      %v1040 = vmax.f32 %v811, %v813
      %v1041 = vmax.f32 %v817, %v819
      %v1042 = vmax.f32 %v823, %v825
      %v1043 = vmax.f32 %v829, %v831
      %v1044 = vmax.f32 %v835, %v837
      %v1045 = vmax.f32 %v841, %v843
      %v1046 = vmax.f32 %v847, %v849
      %v1047 = vmax.f32 %v853, %v855
      %v1048 = vmax.f32 %v859, %v861
      %v1049 = vmax.f32 %v865, %v867
      %v1050 = vmax.f32 %v871, %v873
      %v1051 = vmax.f32 %v877, %v879
      %v1052 = vmax.f32 %v883, %v885
      %v1053 = vmax.f32 %v889, %v891
      %v1054 = vmax.f32 %v895, %v897
      %v1055 = vmax.f32 %v901, %v903
      %v1056 = vmax.f32 %v907, %v909
      %v1057 = vmax.f32 %v913, %v915
      %v1058 = vmax.f32 %v919, %v921
      %v1059 = vmax.f32 %v925, %v927
      %v1060 = vmax.f32 %v931, %v933
      %v1061 = vmax.f32 %v937, %v939
      %v1062 = vmax.f32 %v943, %v945
      %v1063 = vmax.f32 %v949, %v951
      %v1064 = vmax.f32 %v955, %v957
      %v1065 = vmax.f32 %v961, %v963
      %v1066 = vmax.f32 %v967, %v969
      %v1067 = vmax.f32 %v973, %v975
      %v1068 = vmax.f32 %v979, %v981
      %v1069 = vmax.f32 %v985, %v987
      %v1070 = vmax.f32 %v991, %v993
      %v1071 = vmax.f32 %v997, %v999
      %v1072 = vmax.f32 %v1003, %v1005
      %v1073 = vmax.f32 %v1009, %v1011
      %v1074 = vmax.f32 %v1015, %v1017
      %v1075 = vld [vmem:[%s2] sm:$0x1]
      %v1077 = vlaneseq
      %v1078 = vshrl.u32 %v1077, 7
      %v1079 = vsub.s32 0, %v1078
      %v1080 = vrot.slane %v1075, %v1079
      %v1082 = vadd.f32 %v1019, %v1080
      %v1083 = vadd.f32 %v1020, %v1080
      %v1084 = vadd.f32 %v1021, %v1080
      %v1085 = vadd.f32 %v1022, %v1080
      %v1086 = vadd.f32 %v1023, %v1080
      %v1087 = vadd.f32 %v1024, %v1080
      %v1088 = vadd.f32 %v1025, %v1080
      %v1089 = vadd.f32 %v1026, %v1080
      %v1090 = vadd.f32 %v1027, %v1080
      %v1091 = vadd.f32 %v1028, %v1080
      %v1092 = vadd.f32 %v1029, %v1080
      %v1093 = vadd.f32 %v1030, %v1080
      %v1094 = vadd.f32 %v1031, %v1080
      %v1095 = vadd.f32 %v1032, %v1080
      %v1096 = vadd.f32 %v1033, %v1080
      %v1097 = vadd.f32 %v1034, %v1080
      %v1098 = vadd.f32 %v1035, %v1080
      %v1099 = vadd.f32 %v1036, %v1080
      %v1100 = vadd.f32 %v1037, %v1080
      %v1101 = vadd.f32 %v1038, %v1080
      %v1102 = vadd.f32 %v1039, %v1080
      %v1103 = vadd.f32 %v1040, %v1080
      %v1104 = vadd.f32 %v1041, %v1080
      %v1105 = vadd.f32 %v1042, %v1080
      %v1106 = vadd.f32 %v1043, %v1080
      %v1107 = vadd.f32 %v1044, %v1080
      %v1108 = vadd.f32 %v1045, %v1080
      %v1109 = vadd.f32 %v1046, %v1080
      %v1110 = vadd.f32 %v1047, %v1080
      %v1111 = vadd.f32 %v1048, %v1080
      %v1112 = vadd.f32 %v1049, %v1080
      %v1113 = vadd.f32 %v1050, %v1080
      %v1114 = vadd.f32 %v1051, %v1080
      %v1115 = vadd.f32 %v1052, %v1080
      %v1116 = vadd.f32 %v1053, %v1080
      %v1117 = vadd.f32 %v1054, %v1080
      %v1118 = vadd.f32 %v1055, %v1080
      %v1119 = vadd.f32 %v1056, %v1080
      %v1120 = vadd.f32 %v1057, %v1080
      %v1121 = vadd.f32 %v1058, %v1080
      %v1122 = vadd.f32 %v1059, %v1080
      %v1123 = vadd.f32 %v1060, %v1080
      %v1124 = vadd.f32 %v1061, %v1080
      %v1125 = vadd.f32 %v1062, %v1080
      %v1126 = vadd.f32 %v1063, %v1080
      %v1127 = vadd.f32 %v1064, %v1080
      %v1128 = vadd.f32 %v1065, %v1080
      %v1129 = vadd.f32 %v1066, %v1080
      %v1130 = vadd.f32 %v1067, %v1080
      %v1131 = vadd.f32 %v1068, %v1080
      %v1132 = vadd.f32 %v1069, %v1080
      %v1133 = vadd.f32 %v1070, %v1080
      %v1134 = vadd.f32 %v1071, %v1080
      %v1135 = vadd.f32 %v1072, %v1080
      %v1136 = vadd.f32 %v1073, %v1080
      %v1137 = vadd.f32 %v1074, %v1080
      %v1138 = vmax.f32 %v1082, 0.0
      %v1139 = vmax.f32 %v1083, 0.0
      %v1140 = vmax.f32 %v1084, 0.0
      %v1141 = vmax.f32 %v1085, 0.0
      %v1142 = vmax.f32 %v1086, 0.0
      %v1143 = vmax.f32 %v1087, 0.0
      %v1144 = vmax.f32 %v1088, 0.0
      %v1145 = vmax.f32 %v1089, 0.0
      %v1146 = vmax.f32 %v1090, 0.0
      %v1147 = vmax.f32 %v1091, 0.0
      %v1148 = vmax.f32 %v1092, 0.0
      %v1149 = vmax.f32 %v1093, 0.0
      %v1150 = vmax.f32 %v1094, 0.0
      %v1151 = vmax.f32 %v1095, 0.0
      %v1152 = vmax.f32 %v1096, 0.0
      %v1153 = vmax.f32 %v1097, 0.0
      %v1154 = vmax.f32 %v1098, 0.0
      %v1155 = vmax.f32 %v1099, 0.0
      %v1156 = vmax.f32 %v1100, 0.0
      %v1157 = vmax.f32 %v1101, 0.0
      %v1158 = vmax.f32 %v1102, 0.0
      %v1159 = vmax.f32 %v1103, 0.0
      %v1160 = vmax.f32 %v1104, 0.0
      %v1161 = vmax.f32 %v1105, 0.0
      %v1162 = vmax.f32 %v1106, 0.0
      %v1163 = vmax.f32 %v1107, 0.0
      %v1164 = vmax.f32 %v1108, 0.0
      %v1165 = vmax.f32 %v1109, 0.0
      %v1166 = vmax.f32 %v1110, 0.0
      %v1167 = vmax.f32 %v1111, 0.0
      %v1168 = vmax.f32 %v1112, 0.0
      %v1169 = vmax.f32 %v1113, 0.0
      %v1170 = vmax.f32 %v1114, 0.0
      %v1171 = vmax.f32 %v1115, 0.0
      %v1172 = vmax.f32 %v1116, 0.0
      %v1173 = vmax.f32 %v1117, 0.0
      %v1174 = vmax.f32 %v1118, 0.0
      %v1175 = vmax.f32 %v1119, 0.0
      %v1176 = vmax.f32 %v1120, 0.0
      %v1177 = vmax.f32 %v1121, 0.0
      %v1178 = vmax.f32 %v1122, 0.0
      %v1179 = vmax.f32 %v1123, 0.0
      %v1180 = vmax.f32 %v1124, 0.0
      %v1181 = vmax.f32 %v1125, 0.0
      %v1182 = vmax.f32 %v1126, 0.0
      %v1183 = vmax.f32 %v1127, 0.0
      %v1184 = vmax.f32 %v1128, 0.0
      %v1185 = vmax.f32 %v1129, 0.0
      %v1186 = vmax.f32 %v1130, 0.0
      %v1187 = vmax.f32 %v1131, 0.0
      %v1188 = vmax.f32 %v1132, 0.0
      %v1189 = vmax.f32 %v1133, 0.0
      %v1190 = vmax.f32 %v1134, 0.0
      %v1191 = vmax.f32 %v1135, 0.0
      %v1192 = vmax.f32 %v1136, 0.0
      %v1193 = vmax.f32 %v1137, 0.0
      %v1194 = vmax.f32 %v1138, %v1166
      %v1195 = vmax.f32 %v1139, %v1167
      %v1196 = vmax.f32 %v1140, %v1168
      %v1197 = vmax.f32 %v1141, %v1169
      %v1198 = vmax.f32 %v1142, %v1170
      %v1199 = vmax.f32 %v1143, %v1171
      %v1200 = vmax.f32 %v1144, %v1172
      %v1201 = vmax.f32 %v1145, %v1173
      %v1202 = vmax.f32 %v1146, %v1174
      %v1203 = vmax.f32 %v1147, %v1175
      %v1204 = vmax.f32 %v1148, %v1176
      %v1205 = vmax.f32 %v1149, %v1177
      %v1206 = vmax.f32 %v1150, %v1178
      %v1207 = vmax.f32 %v1151, %v1179
      %v1208 = vmax.f32 %v1152, %v1180
      %v1209 = vmax.f32 %v1153, %v1181
      %v1210 = vmax.f32 %v1154, %v1182
      %v1211 = vmax.f32 %v1155, %v1183
      %v1212 = vmax.f32 %v1156, %v1184
      %v1213 = vmax.f32 %v1157, %v1185
      %v1214 = vmax.f32 %v1158, %v1186
      %v1215 = vmax.f32 %v1159, %v1187
      %v1216 = vmax.f32 %v1160, %v1188
      %v1217 = vmax.f32 %v1161, %v1189
      %v1218 = vmax.f32 %v1162, %v1190
      %v1219 = vmax.f32 %v1163, %v1191
      %v1220 = vmax.f32 %v1164, %v1192
      %v1221 = vmax.f32 %v1165, %v1193
      %1222 = vst.msk [vmem:[#allocation2 + $0x8] sm:$0xff] %vm362, %v1194
      %1223 = vst.msk [vmem:[#allocation2 + $0x10] sm:$0xff] %vm362, %v1195
      %1224 = vst.msk [vmem:[#allocation2 + $0x18] sm:$0xff] %vm362, %v1196
      %1225 = vst.msk [vmem:[#allocation2 + $0x20] sm:$0xff] %vm362, %v1197
      %1226 = vst.msk [vmem:[#allocation2 + $0x28] sm:$0xff] %vm362, %v1198
      %1227 = vst.msk [vmem:[#allocation2 + $0x30] sm:$0xff] %vm362, %v1199
      %1228 = vst.msk [vmem:[#allocation2 + $0x38] sm:$0xff] %vm362, %v1200
      %1229 = vst.msk [vmem:[#allocation2 + $0x40] sm:$0xff] %vm362, %v1201
      %1230 = vst.msk [vmem:[#allocation2 + $0x48] sm:$0xff] %vm362, %v1202
      %1231 = vst.msk [vmem:[#allocation2 + $0x50] sm:$0xff] %vm362, %v1203
      %1232 = vst.msk [vmem:[#allocation2 + $0x58] sm:$0xff] %vm362, %v1204
      %1233 = vst.msk [vmem:[#allocation2 + $0x60] sm:$0xff] %vm362, %v1205
      %1234 = vst.msk [vmem:[#allocation2 + $0x68] sm:$0xff] %vm362, %v1206
      %1235 = vst.msk [vmem:[#allocation2 + $0x70] sm:$0xff] %vm362, %v1207
      %1236 = vst.msk [vmem:[#allocation2 + $0x78] sm:$0xff] %vm362, %v1208
      %1237 = vst.msk [vmem:[#allocation2 + $0x80] sm:$0xff] %vm362, %v1209
      %1238 = vst.msk [vmem:[#allocation2 + $0x88] sm:$0xff] %vm362, %v1210
      %1239 = vst.msk [vmem:[#allocation2 + $0x90] sm:$0xff] %vm362, %v1211
      %1240 = vst.msk [vmem:[#allocation2 + $0x98] sm:$0xff] %vm362, %v1212
      %1241 = vst.msk [vmem:[#allocation2 + $0xa0] sm:$0xff] %vm362, %v1213
      %1242 = vst.msk [vmem:[#allocation2 + $0xa8] sm:$0xff] %vm362, %v1214
      %1243 = vst.msk [vmem:[#allocation2 + $0xb0] sm:$0xff] %vm362, %v1215
      %1244 = vst.msk [vmem:[#allocation2 + $0xb8] sm:$0xff] %vm362, %v1216
      %1245 = vst.msk [vmem:[#allocation2 + $0xc0] sm:$0xff] %vm362, %v1217
      %1246 = vst.msk [vmem:[#allocation2 + $0xc8] sm:$0xff] %vm362, %v1218
      %1247 = vst.msk [vmem:[#allocation2 + $0xd0] sm:$0xff] %vm362, %v1219
      %1248 = vst.msk [vmem:[#allocation2 + $0xd8] sm:$0xff] %vm362, %v1220
      %1249 = vst.msk [vmem:[#allocation2 + $0xe0] sm:$0xff] %vm362, %v1221
      %v1250 = vld [vmem:[#allocation2 + $0x7] sm:$0xff]
      %v1251 = vld [vmem:[#allocation2 + $0xf] sm:$0xff]
      %v1252 = vld [vmem:[#allocation2 + $0x17] sm:$0xff]
      %v1253 = vld [vmem:[#allocation2 + $0x1f] sm:$0xff]
      %v1254 = vld [vmem:[#allocation2 + $0x27] sm:$0xff]
      %v1255 = vld [vmem:[#allocation2 + $0x2f] sm:$0xff]
      %v1256 = vld [vmem:[#allocation2 + $0x37] sm:$0xff]
      %v1257 = vld [vmem:[#allocation2 + $0x3f] sm:$0xff]
      %v1258 = vld [vmem:[#allocation2 + $0x47] sm:$0xff]
      %v1259 = vld [vmem:[#allocation2 + $0x4f] sm:$0xff]
      %v1260 = vld [vmem:[#allocation2 + $0x57] sm:$0xff]
      %v1261 = vld [vmem:[#allocation2 + $0x5f] sm:$0xff]
      %v1262 = vld [vmem:[#allocation2 + $0x67] sm:$0xff]
      %v1263 = vld [vmem:[#allocation2 + $0x6f] sm:$0xff]
      %v1264 = vld [vmem:[#allocation2 + $0x77] sm:$0xff]
      %v1265 = vld [vmem:[#allocation2 + $0x7f] sm:$0xff]
      %v1266 = vld [vmem:[#allocation2 + $0x87] sm:$0xff]
      %v1267 = vld [vmem:[#allocation2 + $0x8f] sm:$0xff]
      %v1268 = vld [vmem:[#allocation2 + $0x97] sm:$0xff]
      %v1269 = vld [vmem:[#allocation2 + $0x9f] sm:$0xff]
      %v1270 = vld [vmem:[#allocation2 + $0xa7] sm:$0xff]
      %v1271 = vld [vmem:[#allocation2 + $0xaf] sm:$0xff]
      %v1272 = vld [vmem:[#allocation2 + $0xb7] sm:$0xff]
      %v1273 = vld [vmem:[#allocation2 + $0xbf] sm:$0xff]
      %v1274 = vld [vmem:[#allocation2 + $0xc7] sm:$0xff]
      %v1275 = vld [vmem:[#allocation2 + $0xcf] sm:$0xff]
      %v1276 = vld [vmem:[#allocation2 + $0xd7] sm:$0xff]
      %v1277 = vld [vmem:[#allocation2 + $0xdf] sm:$0xff]
      %v1278 = vld [vmem:[%s5] sm:$0xff]
      %v1279 = vld [vmem:[%s5 + $0x8] sm:$0xff]
      %v1280 = vld [vmem:[%s5 + $0x10] sm:$0xff]
      %v1281 = vld [vmem:[%s5 + $0x18] sm:$0xff]
      %v1282 = vld [vmem:[%s5 + $0x20] sm:$0xff]
      %v1283 = vld [vmem:[%s5 + $0x28] sm:$0xff]
      %v1284 = vld [vmem:[%s5 + $0x30] sm:$0xff]
      %v1285 = vld [vmem:[%s5 + $0x38] sm:$0xff]
      %v1286 = vld [vmem:[%s5 + $0x40] sm:$0xff]
      %v1287 = vld [vmem:[%s5 + $0x48] sm:$0xff]
      %v1288 = vld [vmem:[%s5 + $0x50] sm:$0xff]
      %v1289 = vld [vmem:[%s5 + $0x58] sm:$0xff]
      %v1290 = vld [vmem:[%s5 + $0x60] sm:$0xff]
      %v1291 = vld [vmem:[%s5 + $0x68] sm:$0xff]
      %v1292 = vld [vmem:[%s5 + $0x70] sm:$0xff]
      %v1293 = vld [vmem:[%s5 + $0x78] sm:$0xff]
      %v1294 = vld [vmem:[%s5 + $0x80] sm:$0xff]
      %v1295 = vld [vmem:[%s5 + $0x88] sm:$0xff]
      %v1296 = vld [vmem:[%s5 + $0x90] sm:$0xff]
      %v1297 = vld [vmem:[%s5 + $0x98] sm:$0xff]
      %v1298 = vld [vmem:[%s5 + $0xa0] sm:$0xff]
      %v1299 = vld [vmem:[%s5 + $0xa8] sm:$0xff]
      %v1300 = vld [vmem:[%s5 + $0xb0] sm:$0xff]
      %v1301 = vld [vmem:[%s5 + $0xb8] sm:$0xff]
      %v1302 = vld [vmem:[%s5 + $0xc0] sm:$0xff]
      %v1303 = vld [vmem:[%s5 + $0xc8] sm:$0xff]
      %v1304 = vld [vmem:[%s5 + $0xd0] sm:$0xff]
      %v1305 = vld [vmem:[%s5 + $0xd8] sm:$0xff]
      %1307 = vset.pattern.permute.xlu0 0
      %1308 = vperm.xlu0 %1307, %v1278
      %v1309 = vpop.permute.xlu0 %1308
      %1312 = vset.pattern.permute.xlu0 0
      %1313 = vperm.xlu0 %1312, %v1279
      %v1314 = vpop.permute.xlu0 %1313
      %1317 = vset.pattern.permute.xlu0 0
      %1318 = vperm.xlu0 %1317, %v1280
      %v1319 = vpop.permute.xlu0 %1318
      %1322 = vset.pattern.permute.xlu0 0
      %1323 = vperm.xlu0 %1322, %v1281
      %v1324 = vpop.permute.xlu0 %1323
      %1327 = vset.pattern.permute.xlu0 0
      %1328 = vperm.xlu0 %1327, %v1282
      %v1329 = vpop.permute.xlu0 %1328
      %1332 = vset.pattern.permute.xlu0 0
      %1333 = vperm.xlu0 %1332, %v1283
      %v1334 = vpop.permute.xlu0 %1333
      %1337 = vset.pattern.permute.xlu0 0
      %1338 = vperm.xlu0 %1337, %v1284
      %v1339 = vpop.permute.xlu0 %1338
      %1342 = vset.pattern.permute.xlu0 0
      %1343 = vperm.xlu0 %1342, %v1285
      %v1344 = vpop.permute.xlu0 %1343
      %1347 = vset.pattern.permute.xlu0 0
      %1348 = vperm.xlu0 %1347, %v1286
      %v1349 = vpop.permute.xlu0 %1348
      %1352 = vset.pattern.permute.xlu0 0
      %1353 = vperm.xlu0 %1352, %v1287
      %v1354 = vpop.permute.xlu0 %1353
      %1357 = vset.pattern.permute.xlu0 0
      %1358 = vperm.xlu0 %1357, %v1288
      %v1359 = vpop.permute.xlu0 %1358
      %1362 = vset.pattern.permute.xlu0 0
      %1363 = vperm.xlu0 %1362, %v1289
      %v1364 = vpop.permute.xlu0 %1363
      %1367 = vset.pattern.permute.xlu0 0
      %1368 = vperm.xlu0 %1367, %v1290
      %v1369 = vpop.permute.xlu0 %1368
      %1372 = vset.pattern.permute.xlu0 0
      %1373 = vperm.xlu0 %1372, %v1291
      %v1374 = vpop.permute.xlu0 %1373
      %1377 = vset.pattern.permute.xlu0 0
      %1378 = vperm.xlu0 %1377, %v1292
      %v1379 = vpop.permute.xlu0 %1378
      %1382 = vset.pattern.permute.xlu0 0
      %1383 = vperm.xlu0 %1382, %v1293
      %v1384 = vpop.permute.xlu0 %1383
      %1387 = vset.pattern.permute.xlu0 0
      %1388 = vperm.xlu0 %1387, %v1294
      %v1389 = vpop.permute.xlu0 %1388
      %1392 = vset.pattern.permute.xlu0 0
      %1393 = vperm.xlu0 %1392, %v1295
      %v1394 = vpop.permute.xlu0 %1393
      %1397 = vset.pattern.permute.xlu0 0
      %1398 = vperm.xlu0 %1397, %v1296
      %v1399 = vpop.permute.xlu0 %1398
      %1402 = vset.pattern.permute.xlu0 0
      %1403 = vperm.xlu0 %1402, %v1297
      %v1404 = vpop.permute.xlu0 %1403
      %1407 = vset.pattern.permute.xlu0 0
      %1408 = vperm.xlu0 %1407, %v1298
      %v1409 = vpop.permute.xlu0 %1408
      %1412 = vset.pattern.permute.xlu0 0
      %1413 = vperm.xlu0 %1412, %v1299
      %v1414 = vpop.permute.xlu0 %1413
      %1417 = vset.pattern.permute.xlu0 0
      %1418 = vperm.xlu0 %1417, %v1300
      %v1419 = vpop.permute.xlu0 %1418
      %1422 = vset.pattern.permute.xlu0 0
      %1423 = vperm.xlu0 %1422, %v1301
      %v1424 = vpop.permute.xlu0 %1423
      %1427 = vset.pattern.permute.xlu0 0
      %1428 = vperm.xlu0 %1427, %v1302
      %v1429 = vpop.permute.xlu0 %1428
      %1432 = vset.pattern.permute.xlu0 0
      %1433 = vperm.xlu0 %1432, %v1303
      %v1434 = vpop.permute.xlu0 %1433
      %1437 = vset.pattern.permute.xlu0 0
      %1438 = vperm.xlu0 %1437, %v1304
      %v1439 = vpop.permute.xlu0 %1438
      %1442 = vset.pattern.permute.xlu0 0
      %1443 = vperm.xlu0 %1442, %v1305
      %v1444 = vpop.permute.xlu0 %1443
      %v1446 = vmul.f32 %v1250, %v1309
      %v1447 = vmul.f32 %v1251, %v1314
      %v1448 = vmul.f32 %v1252, %v1319
      %v1449 = vmul.f32 %v1253, %v1324
      %v1450 = vmul.f32 %v1254, %v1329
      %v1451 = vmul.f32 %v1255, %v1334
      %v1452 = vmul.f32 %v1256, %v1339
      %v1453 = vmul.f32 %v1257, %v1344
      %v1454 = vmul.f32 %v1258, %v1349
      %v1455 = vmul.f32 %v1259, %v1354
      %v1456 = vmul.f32 %v1260, %v1359
      %v1457 = vmul.f32 %v1261, %v1364
      %v1458 = vmul.f32 %v1262, %v1369
      %v1459 = vmul.f32 %v1263, %v1374
      %v1460 = vmul.f32 %v1264, %v1379
      %v1461 = vmul.f32 %v1265, %v1384
      %v1462 = vmul.f32 %v1266, %v1389
      %v1463 = vmul.f32 %v1267, %v1394
      %v1464 = vmul.f32 %v1268, %v1399
      %v1465 = vmul.f32 %v1269, %v1404
      %v1466 = vmul.f32 %v1270, %v1409
      %v1467 = vmul.f32 %v1271, %v1414
      %v1468 = vmul.f32 %v1272, %v1419
      %v1469 = vmul.f32 %v1273, %v1424
      %v1470 = vmul.f32 %v1274, %v1429
      %v1471 = vmul.f32 %v1275, %v1434
      %v1472 = vmul.f32 %v1276, %v1439
      %v1473 = vmul.f32 %v1277, %v1444
      %v1474 = vld [vmem:[#allocation2 + $0x9] sm:$0xff]
      %v1475 = vld [vmem:[#allocation2 + $0x11] sm:$0xff]
      %v1476 = vld [vmem:[#allocation2 + $0x19] sm:$0xff]
      %v1477 = vld [vmem:[#allocation2 + $0x21] sm:$0xff]
      %v1478 = vld [vmem:[#allocation2 + $0x29] sm:$0xff]
      %v1479 = vld [vmem:[#allocation2 + $0x31] sm:$0xff]
      %v1480 = vld [vmem:[#allocation2 + $0x39] sm:$0xff]
      %v1481 = vld [vmem:[#allocation2 + $0x41] sm:$0xff]
      %v1482 = vld [vmem:[#allocation2 + $0x49] sm:$0xff]
      %v1483 = vld [vmem:[#allocation2 + $0x51] sm:$0xff]
      %v1484 = vld [vmem:[#allocation2 + $0x59] sm:$0xff]
      %v1485 = vld [vmem:[#allocation2 + $0x61] sm:$0xff]
      %v1486 = vld [vmem:[#allocation2 + $0x69] sm:$0xff]
      %v1487 = vld [vmem:[#allocation2 + $0x71] sm:$0xff]
      %v1488 = vld [vmem:[#allocation2 + $0x79] sm:$0xff]
      %v1489 = vld [vmem:[#allocation2 + $0x81] sm:$0xff]
      %v1490 = vld [vmem:[#allocation2 + $0x89] sm:$0xff]
      %v1491 = vld [vmem:[#allocation2 + $0x91] sm:$0xff]
      %v1492 = vld [vmem:[#allocation2 + $0x99] sm:$0xff]
      %v1493 = vld [vmem:[#allocation2 + $0xa1] sm:$0xff]
      %v1494 = vld [vmem:[#allocation2 + $0xa9] sm:$0xff]
      %v1495 = vld [vmem:[#allocation2 + $0xb1] sm:$0xff]
      %v1496 = vld [vmem:[#allocation2 + $0xb9] sm:$0xff]
      %v1497 = vld [vmem:[#allocation2 + $0xc1] sm:$0xff]
      %v1498 = vld [vmem:[#allocation2 + $0xc9] sm:$0xff]
      %v1499 = vld [vmem:[#allocation2 + $0xd1] sm:$0xff]
      %v1500 = vld [vmem:[#allocation2 + $0xd9] sm:$0xff]
      %v1501 = vld [vmem:[#allocation2 + $0xe1] sm:$0xff]
      %v1502 = vld [vmem:[%s6] sm:$0xff]
      %v1503 = vld [vmem:[%s6 + $0x8] sm:$0xff]
      %v1504 = vld [vmem:[%s6 + $0x10] sm:$0xff]
      %v1505 = vld [vmem:[%s6 + $0x18] sm:$0xff]
      %v1506 = vld [vmem:[%s6 + $0x20] sm:$0xff]
      %v1507 = vld [vmem:[%s6 + $0x28] sm:$0xff]
      %v1508 = vld [vmem:[%s6 + $0x30] sm:$0xff]
      %v1509 = vld [vmem:[%s6 + $0x38] sm:$0xff]
      %v1510 = vld [vmem:[%s6 + $0x40] sm:$0xff]
      %v1511 = vld [vmem:[%s6 + $0x48] sm:$0xff]
      %v1512 = vld [vmem:[%s6 + $0x50] sm:$0xff]
      %v1513 = vld [vmem:[%s6 + $0x58] sm:$0xff]
      %v1514 = vld [vmem:[%s6 + $0x60] sm:$0xff]
      %v1515 = vld [vmem:[%s6 + $0x68] sm:$0xff]
      %v1516 = vld [vmem:[%s6 + $0x70] sm:$0xff]
      %v1517 = vld [vmem:[%s6 + $0x78] sm:$0xff]
      %v1518 = vld [vmem:[%s6 + $0x80] sm:$0xff]
      %v1519 = vld [vmem:[%s6 + $0x88] sm:$0xff]
      %v1520 = vld [vmem:[%s6 + $0x90] sm:$0xff]
      %v1521 = vld [vmem:[%s6 + $0x98] sm:$0xff]
      %v1522 = vld [vmem:[%s6 + $0xa0] sm:$0xff]
      %v1523 = vld [vmem:[%s6 + $0xa8] sm:$0xff]
      %v1524 = vld [vmem:[%s6 + $0xb0] sm:$0xff]
      %v1525 = vld [vmem:[%s6 + $0xb8] sm:$0xff]
      %v1526 = vld [vmem:[%s6 + $0xc0] sm:$0xff]
      %v1527 = vld [vmem:[%s6 + $0xc8] sm:$0xff]
      %v1528 = vld [vmem:[%s6 + $0xd0] sm:$0xff]
      %v1529 = vld [vmem:[%s6 + $0xd8] sm:$0xff]
      %1531 = vset.pattern.permute.xlu0 0
      %1532 = vperm.xlu0 %1531, %v1502
      %v1533 = vpop.permute.xlu0 %1532
      %1536 = vset.pattern.permute.xlu0 0
      %1537 = vperm.xlu0 %1536, %v1503
      %v1538 = vpop.permute.xlu0 %1537
      %1541 = vset.pattern.permute.xlu0 0
      %1542 = vperm.xlu0 %1541, %v1504
      %v1543 = vpop.permute.xlu0 %1542
      %1546 = vset.pattern.permute.xlu0 0
      %1547 = vperm.xlu0 %1546, %v1505
      %v1548 = vpop.permute.xlu0 %1547
      %1551 = vset.pattern.permute.xlu0 0
      %1552 = vperm.xlu0 %1551, %v1506
      %v1553 = vpop.permute.xlu0 %1552
      %1556 = vset.pattern.permute.xlu0 0
      %1557 = vperm.xlu0 %1556, %v1507
      %v1558 = vpop.permute.xlu0 %1557
      %1561 = vset.pattern.permute.xlu0 0
      %1562 = vperm.xlu0 %1561, %v1508
      %v1563 = vpop.permute.xlu0 %1562
      %1566 = vset.pattern.permute.xlu0 0
      %1567 = vperm.xlu0 %1566, %v1509
      %v1568 = vpop.permute.xlu0 %1567
      %1571 = vset.pattern.permute.xlu0 0
      %1572 = vperm.xlu0 %1571, %v1510
      %v1573 = vpop.permute.xlu0 %1572
      %1576 = vset.pattern.permute.xlu0 0
      %1577 = vperm.xlu0 %1576, %v1511
      %v1578 = vpop.permute.xlu0 %1577
      %1581 = vset.pattern.permute.xlu0 0
      %1582 = vperm.xlu0 %1581, %v1512
      %v1583 = vpop.permute.xlu0 %1582
      %1586 = vset.pattern.permute.xlu0 0
      %1587 = vperm.xlu0 %1586, %v1513
      %v1588 = vpop.permute.xlu0 %1587
      %1591 = vset.pattern.permute.xlu0 0
      %1592 = vperm.xlu0 %1591, %v1514
      %v1593 = vpop.permute.xlu0 %1592
      %1596 = vset.pattern.permute.xlu0 0
      %1597 = vperm.xlu0 %1596, %v1515
      %v1598 = vpop.permute.xlu0 %1597
      %1601 = vset.pattern.permute.xlu0 0
      %1602 = vperm.xlu0 %1601, %v1516
      %v1603 = vpop.permute.xlu0 %1602
      %1606 = vset.pattern.permute.xlu0 0
      %1607 = vperm.xlu0 %1606, %v1517
      %v1608 = vpop.permute.xlu0 %1607
      %1611 = vset.pattern.permute.xlu0 0
      %1612 = vperm.xlu0 %1611, %v1518
      %v1613 = vpop.permute.xlu0 %1612
      %1616 = vset.pattern.permute.xlu0 0
      %1617 = vperm.xlu0 %1616, %v1519
      %v1618 = vpop.permute.xlu0 %1617
      %1621 = vset.pattern.permute.xlu0 0
      %1622 = vperm.xlu0 %1621, %v1520
      %v1623 = vpop.permute.xlu0 %1622
      %1626 = vset.pattern.permute.xlu0 0
      %1627 = vperm.xlu0 %1626, %v1521
      %v1628 = vpop.permute.xlu0 %1627
      %1631 = vset.pattern.permute.xlu0 0
      %1632 = vperm.xlu0 %1631, %v1522
      %v1633 = vpop.permute.xlu0 %1632
      %1636 = vset.pattern.permute.xlu0 0
      %1637 = vperm.xlu0 %1636, %v1523
      %v1638 = vpop.permute.xlu0 %1637
      %1641 = vset.pattern.permute.xlu0 0
      %1642 = vperm.xlu0 %1641, %v1524
      %v1643 = vpop.permute.xlu0 %1642
      %1646 = vset.pattern.permute.xlu0 0
      %1647 = vperm.xlu0 %1646, %v1525
      %v1648 = vpop.permute.xlu0 %1647
      %1651 = vset.pattern.permute.xlu0 0
      %1652 = vperm.xlu0 %1651, %v1526
      %v1653 = vpop.permute.xlu0 %1652
      %1656 = vset.pattern.permute.xlu0 0
      %1657 = vperm.xlu0 %1656, %v1527
      %v1658 = vpop.permute.xlu0 %1657
      %1661 = vset.pattern.permute.xlu0 0
      %1662 = vperm.xlu0 %1661, %v1528
      %v1663 = vpop.permute.xlu0 %1662
      %1666 = vset.pattern.permute.xlu0 0
      %1667 = vperm.xlu0 %1666, %v1529
      %v1668 = vpop.permute.xlu0 %1667
      %v1670 = vmul.f32 %v1474, %v1533
      %v1671 = vmul.f32 %v1475, %v1538
      %v1672 = vmul.f32 %v1476, %v1543
      %v1673 = vmul.f32 %v1477, %v1548
      %v1674 = vmul.f32 %v1478, %v1553
      %v1675 = vmul.f32 %v1479, %v1558
      %v1676 = vmul.f32 %v1480, %v1563
      %v1677 = vmul.f32 %v1481, %v1568
      %v1678 = vmul.f32 %v1482, %v1573
      %v1679 = vmul.f32 %v1483, %v1578
      %v1680 = vmul.f32 %v1484, %v1583
      %v1681 = vmul.f32 %v1485, %v1588
      %v1682 = vmul.f32 %v1486, %v1593
      %v1683 = vmul.f32 %v1487, %v1598
      %v1684 = vmul.f32 %v1488, %v1603
      %v1685 = vmul.f32 %v1489, %v1608
      %v1686 = vmul.f32 %v1490, %v1613
      %v1687 = vmul.f32 %v1491, %v1618
      %v1688 = vmul.f32 %v1492, %v1623
      %v1689 = vmul.f32 %v1493, %v1628
      %v1690 = vmul.f32 %v1494, %v1633
      %v1691 = vmul.f32 %v1495, %v1638
      %v1692 = vmul.f32 %v1496, %v1643
      %v1693 = vmul.f32 %v1497, %v1648
      %v1694 = vmul.f32 %v1498, %v1653
      %v1695 = vmul.f32 %v1499, %v1658
      %v1696 = vmul.f32 %v1500, %v1663
      %v1697 = vmul.f32 %v1501, %v1668
      %v1698 = vld [vmem:[%s3] sm:$0xff]
      %v1699 = vld [vmem:[%s3 + $0x8] sm:$0xff]
      %v1700 = vld [vmem:[%s3 + $0x10] sm:$0xff]
      %v1701 = vld [vmem:[%s3 + $0x18] sm:$0xff]
      %v1702 = vld [vmem:[%s3 + $0x20] sm:$0xff]
      %v1703 = vld [vmem:[%s3 + $0x28] sm:$0xff]
      %v1704 = vld [vmem:[%s3 + $0x30] sm:$0xff]
      %v1705 = vld [vmem:[%s3 + $0x38] sm:$0xff]
      %v1706 = vld [vmem:[%s3 + $0x40] sm:$0xff]
      %v1707 = vld [vmem:[%s3 + $0x48] sm:$0xff]
      %v1708 = vld [vmem:[%s3 + $0x50] sm:$0xff]
      %v1709 = vld [vmem:[%s3 + $0x58] sm:$0xff]
      %v1710 = vld [vmem:[%s3 + $0x60] sm:$0xff]
      %v1711 = vld [vmem:[%s3 + $0x68] sm:$0xff]
      %v1712 = vld [vmem:[%s3 + $0x70] sm:$0xff]
      %v1713 = vld [vmem:[%s3 + $0x78] sm:$0xff]
      %v1714 = vld [vmem:[%s3 + $0x80] sm:$0xff]
      %v1715 = vld [vmem:[%s3 + $0x88] sm:$0xff]
      %v1716 = vld [vmem:[%s3 + $0x90] sm:$0xff]
      %v1717 = vld [vmem:[%s3 + $0x98] sm:$0xff]
      %v1718 = vld [vmem:[%s3 + $0xa0] sm:$0xf]
      %v1719 = vld [vmem:[%s3 + $0xa8] sm:$0xf]
      %s1720 = scalar_lea.vmem %s3, 176
      %v1721 = vld [vmem:[%s1720] sm:$0xff]
      %v1722 = vld [vmem:[%s1720 + $0x8] sm:$0xff]
      %v1723 = vld [vmem:[%s1720 + $0x10] sm:$0xff]
      %v1724 = vld [vmem:[%s1720 + $0x18] sm:$0xff]
      %v1725 = vld [vmem:[%s1720 + $0x20] sm:$0xff]
      %v1726 = vld [vmem:[%s1720 + $0x28] sm:$0xff]
      %v1727 = vld [vmem:[%s1720 + $0x30] sm:$0xff]
      %v1728 = vld [vmem:[%s1720 + $0x38] sm:$0xff]
      %v1729 = vld [vmem:[%s1720 + $0x40] sm:$0xff]
      %v1730 = vld [vmem:[%s1720 + $0x48] sm:$0xff]
      %v1731 = vld [vmem:[%s1720 + $0x50] sm:$0xff]
      %v1732 = vld [vmem:[%s1720 + $0x58] sm:$0xff]
      %v1733 = vld [vmem:[%s1720 + $0x60] sm:$0xff]
      %v1734 = vld [vmem:[%s1720 + $0x68] sm:$0xff]
      %v1735 = vld [vmem:[%s1720 + $0x70] sm:$0xff]
      %v1736 = vld [vmem:[%s1720 + $0x78] sm:$0xff]
      %v1737 = vld [vmem:[%s1720 + $0x80] sm:$0xff]
      %v1738 = vld [vmem:[%s1720 + $0x88] sm:$0xff]
      %v1739 = vld [vmem:[%s1720 + $0x90] sm:$0xff]
      %v1740 = vld [vmem:[%s1720 + $0x98] sm:$0xff]
      %v1741 = vld [vmem:[%s1720 + $0xa0] sm:$0xf]
      %v1742 = vld [vmem:[%s1720 + $0xa8] sm:$0xf]
      %v1744 = vsel %vm362, %v1194, 0
      %v1747 = vsel %vm362, %v1195, 0
      %v1750 = vsel %vm362, %v1196, 0
      %v1753 = vsel %vm362, %v1197, 0
      %v1756 = vsel %vm362, %v1198, 0
      %v1759 = vsel %vm362, %v1199, 0
      %v1762 = vsel %vm362, %v1200, 0
      %v1765 = vsel %vm362, %v1201, 0
      %v1768 = vsel %vm362, %v1202, 0
      %v1771 = vsel %vm362, %v1203, 0
      %v1774 = vsel %vm362, %v1204, 0
      %v1777 = vsel %vm362, %v1205, 0
      %v1780 = vsel %vm362, %v1206, 0
      %v1783 = vsel %vm362, %v1207, 0
      %v1786 = vsel %vm362, %v1208, 0
      %v1789 = vsel %vm362, %v1209, 0
      %v1792 = vsel %vm362, %v1210, 0
      %v1795 = vsel %vm362, %v1211, 0
      %v1798 = vsel %vm362, %v1212, 0
      %v1801 = vsel %vm362, %v1213, 0
      %v1804 = vsel %vm362, %v1214, 0
      %v1807 = vsel %vm362, %v1215, 0
      %v1810 = vsel %vm362, %v1216, 0
      %v1813 = vsel %vm362, %v1217, 0
      %v1816 = vsel %vm362, %v1218, 0
      %v1819 = vsel %vm362, %v1219, 0
      %v1822 = vsel %vm362, %v1220, 0
      %v1825 = vsel %vm362, %v1221, 0
      %v1828 = vsel %vm611, %v1741, 0
      %v1831 = vsel %vm611, %v1742, 0
      %1833 = vmatprep.subr.mxu0 0.0
      %1834 = vmatpush1.msra.mxu0 0.0
      %1835 = vmatprep.subr.mxu0 0.0
      %1836 = vmatpush1.msra.mxu0 0.0
      %1837 = vmatprep.subr.mxu0 0.0
      %1838 = vmatpush1.msra.mxu0 0.0
      %1839 = vmatprep.subr.mxu0 0.0
      %1840 = vmatpush1.msra.mxu0 0.0
      %1841 = vmatprep.subr.mxu0 0.0
      %1842 = vmatpush1.msra.mxu0 0.0
      %1843 = vmatprep.subr.mxu0 %v1831
      %1844 = vmatpush1.msra.mxu0 %v1828
      %1845 = vmatprep.subr.mxu0 %v1740
      %1846 = vmatpush1.msra.mxu0 %v1739
      %1847 = vmatprep.subr.mxu0 %v1738
      %1848 = vmatpush1.msra.mxu0 %v1737
      %1849 = vmatprep.subr.mxu0 %v1736
      %1850 = vmatpush1.msra.mxu0 %v1735
      %1851 = vmatprep.subr.mxu0 %v1734
      %1852 = vmatpush1.msra.mxu0 %v1733
      %1853 = vmatprep.subr.mxu0 %v1732
      %1854 = vmatpush1.msra.mxu0 %v1731
      %1855 = vmatprep.subr.mxu0 %v1730
      %1856 = vmatpush1.msra.mxu0 %v1729
      %1857 = vmatprep.subr.mxu0 %v1728
      %1858 = vmatpush1.msra.mxu0 %v1727
      %1859 = vmatprep.subr.mxu0 %v1726
      %1860 = vmatpush1.msra.mxu0 %v1725
      %1861 = vmatprep.subr.mxu0 %v1724
      %1862 = vmatpush1.msra.mxu0 %v1723
      %1863 = vmatprep.subr.mxu0 %v1722
      %1864 = vmatpush1.msra.mxu0 %v1721
      %1865 = vmatprep.subr.mxu0 0.0
      %1866 = vmatpush2.msra.mxu0 0.0
      %1867 = vmatprep.subr.mxu0 0.0
      %1868 = vmatpush2.msra.mxu0 0.0
      %1869 = vmatprep.subr.mxu0 0.0
      %1870 = vmatpush2.msra.mxu0 0.0
      %1871 = vmatprep.subr.mxu0 0.0
      %1872 = vmatpush2.msra.mxu0 0.0
      %1873 = vmatprep.subr.mxu0 0.0
      %1874 = vmatpush2.msra.mxu0 0.0
      %1875 = vmatprep.subr.mxu0 0.0
      %1876 = vmatpush2.msra.mxu0 0.0
      %1877 = vmatprep.subr.mxu0 0.0
      %1878 = vmatpush2.msra.mxu0 0.0
      %1879 = vmatprep.subr.mxu0 0.0
      %1880 = vmatpush2.msra.mxu0 0.0
      %1881 = vmatprep.subr.mxu0 0.0
      %1882 = vmatpush2.msra.mxu0 0.0
      %1883 = vmatprep.subr.mxu0 0.0
      %1884 = vmatpush2.msra.mxu0 0.0
      %1885 = vmatprep.subr.mxu0 0.0
      %1886 = vmatpush2.msra.mxu0 0.0
      %1887 = vmatprep.subr.mxu0 0.0
      %1888 = vmatpush2.msra.mxu0 0.0
      %1889 = vmatprep.subr.mxu0 0.0
      %1890 = vmatpush2.msra.mxu0 0.0
      %1891 = vmatprep.subr.mxu0 0.0
      %1892 = vmatpush2.msra.mxu0 0.0
      %1893 = vmatprep.subr.mxu0 0.0
      %1894 = vmatpush2.msra.mxu0 0.0
      %1895 = vmatprep.subr.mxu0 0.0
      %1896 = vmatpush2.msra.mxu0 0.0
      %1897 = vmatprep.mubr.f32.mxu0 0.0
      %1898 = vmatmul.mubr.f32.gmra.mxu0 %v1744
      %v1899 = vpop.f32.mrf.mxu0
      %v1900 = vadd.f32 0.0, %v1899
      %v1901 = vpop.f32.mrf.mxu0
      %v1902 = vadd.f32 0.0, %v1901
      %1903 = vmatprep.mubr.f32.mxu0 0.0
      %1904 = vmatmul.mubr.f32.gmra.mxu0 %v1747
      %v1905 = vpop.f32.mrf.mxu0
      %v1906 = vadd.f32 0.0, %v1905
      %v1907 = vpop.f32.mrf.mxu0
      %v1908 = vadd.f32 0.0, %v1907
      %1909 = vmatprep.mubr.f32.mxu0 0.0
      %1910 = vmatmul.mubr.f32.gmra.mxu0 %v1750
      %v1911 = vpop.f32.mrf.mxu0
      %v1912 = vadd.f32 0.0, %v1911
      %v1913 = vpop.f32.mrf.mxu0
      %v1914 = vadd.f32 0.0, %v1913
      %1915 = vmatprep.mubr.f32.mxu0 0.0
      %1916 = vmatmul.mubr.f32.gmra.mxu0 %v1753
      %v1917 = vpop.f32.mrf.mxu0
      %v1918 = vadd.f32 0.0, %v1917
      %v1919 = vpop.f32.mrf.mxu0
      %v1920 = vadd.f32 0.0, %v1919
      %1921 = vmatprep.mubr.f32.mxu0 0.0
      %1922 = vmatmul.mubr.f32.gmra.mxu0 %v1756
      %v1923 = vpop.f32.mrf.mxu0
      %v1924 = vadd.f32 0.0, %v1923
      %v1925 = vpop.f32.mrf.mxu0
      %v1926 = vadd.f32 0.0, %v1925
      %1927 = vmatprep.mubr.f32.mxu0 0.0
      %1928 = vmatmul.mubr.f32.gmra.mxu0 %v1759
      %v1929 = vpop.f32.mrf.mxu0
      %v1930 = vadd.f32 0.0, %v1929
      %v1931 = vpop.f32.mrf.mxu0
      %v1932 = vadd.f32 0.0, %v1931
      %1933 = vmatprep.mubr.f32.mxu0 0.0
      %1934 = vmatmul.mubr.f32.gmra.mxu0 %v1762
      %v1935 = vpop.f32.mrf.mxu0
      %v1936 = vadd.f32 0.0, %v1935
      %v1937 = vpop.f32.mrf.mxu0
      %v1938 = vadd.f32 0.0, %v1937
      %1939 = vmatprep.mubr.f32.mxu0 0.0
      %1940 = vmatmul.mubr.f32.gmra.mxu0 %v1765
      %v1941 = vpop.f32.mrf.mxu0
      %v1942 = vadd.f32 0.0, %v1941
      %v1943 = vpop.f32.mrf.mxu0
      %v1944 = vadd.f32 0.0, %v1943
      %1945 = vmatprep.mubr.f32.mxu0 0.0
      %1946 = vmatmul.mubr.f32.gmra.mxu0 %v1768
      %v1947 = vpop.f32.mrf.mxu0
      %v1948 = vadd.f32 0.0, %v1947
      %v1949 = vpop.f32.mrf.mxu0
      %v1950 = vadd.f32 0.0, %v1949
      %1951 = vmatprep.mubr.f32.mxu0 0.0
      %1952 = vmatmul.mubr.f32.gmra.mxu0 %v1771
      %v1953 = vpop.f32.mrf.mxu0
      %v1954 = vadd.f32 0.0, %v1953
      %v1955 = vpop.f32.mrf.mxu0
      %v1956 = vadd.f32 0.0, %v1955
      %1957 = vmatprep.mubr.f32.mxu0 0.0
      %1958 = vmatmul.mubr.f32.gmra.mxu0 %v1774
      %v1959 = vpop.f32.mrf.mxu0
      %v1960 = vadd.f32 0.0, %v1959
      %v1961 = vpop.f32.mrf.mxu0
      %v1962 = vadd.f32 0.0, %v1961
      %1963 = vmatprep.mubr.f32.mxu0 0.0
      %1964 = vmatmul.mubr.f32.gmra.mxu0 %v1777
      %v1965 = vpop.f32.mrf.mxu0
      %v1966 = vadd.f32 0.0, %v1965
      %v1967 = vpop.f32.mrf.mxu0
      %v1968 = vadd.f32 0.0, %v1967
      %1969 = vmatprep.mubr.f32.mxu0 0.0
      %1970 = vmatmul.mubr.f32.gmra.mxu0 %v1780
      %v1971 = vpop.f32.mrf.mxu0
      %v1972 = vadd.f32 0.0, %v1971
      %v1973 = vpop.f32.mrf.mxu0
      %v1974 = vadd.f32 0.0, %v1973
      %1975 = vmatprep.mubr.f32.mxu0 0.0
      %1976 = vmatmul.mubr.f32.gmra.mxu0 %v1783
      %v1977 = vpop.f32.mrf.mxu0
      %v1978 = vadd.f32 0.0, %v1977
      %v1979 = vpop.f32.mrf.mxu0
      %v1980 = vadd.f32 0.0, %v1979
      %1981 = vmatprep.mubr.f32.mxu0 0.0
      %1982 = vmatmul.mubr.f32.gmra.mxu0 %v1786
      %v1983 = vpop.f32.mrf.mxu0
      %v1984 = vadd.f32 0.0, %v1983
      %v1985 = vpop.f32.mrf.mxu0
      %v1986 = vadd.f32 0.0, %v1985
      %1987 = vmatprep.mubr.f32.mxu0 0.0
      %1988 = vmatmul.mubr.f32.gmra.mxu0 %v1789
      %v1989 = vpop.f32.mrf.mxu0
      %v1990 = vadd.f32 0.0, %v1989
      %v1991 = vpop.f32.mrf.mxu0
      %v1992 = vadd.f32 0.0, %v1991
      %1993 = vmatprep.mubr.f32.mxu0 0.0
      %1994 = vmatmul.mubr.f32.gmra.mxu0 %v1792
      %v1995 = vpop.f32.mrf.mxu0
      %v1996 = vadd.f32 0.0, %v1995
      %v1997 = vpop.f32.mrf.mxu0
      %v1998 = vadd.f32 0.0, %v1997
      %1999 = vmatprep.mubr.f32.mxu0 0.0
      %2000 = vmatmul.mubr.f32.gmra.mxu0 %v1795
      %v2001 = vpop.f32.mrf.mxu0
      %v2002 = vadd.f32 0.0, %v2001
      %v2003 = vpop.f32.mrf.mxu0
      %v2004 = vadd.f32 0.0, %v2003
      %2005 = vmatprep.mubr.f32.mxu0 0.0
      %2006 = vmatmul.mubr.f32.gmra.mxu0 %v1798
      %v2007 = vpop.f32.mrf.mxu0
      %v2008 = vadd.f32 0.0, %v2007
      %v2009 = vpop.f32.mrf.mxu0
      %v2010 = vadd.f32 0.0, %v2009
      %2011 = vmatprep.mubr.f32.mxu0 0.0
      %2012 = vmatmul.mubr.f32.gmra.mxu0 %v1801
      %v2013 = vpop.f32.mrf.mxu0
      %v2014 = vadd.f32 0.0, %v2013
      %v2015 = vpop.f32.mrf.mxu0
      %v2016 = vadd.f32 0.0, %v2015
      %2017 = vmatprep.mubr.f32.mxu0 0.0
      %2018 = vmatmul.mubr.f32.gmra.mxu0 %v1804
      %v2019 = vpop.f32.mrf.mxu0
      %v2020 = vadd.f32 0.0, %v2019
      %v2021 = vpop.f32.mrf.mxu0
      %v2022 = vadd.f32 0.0, %v2021
      %2023 = vmatprep.mubr.f32.mxu0 0.0
      %2024 = vmatmul.mubr.f32.gmra.mxu0 %v1807
      %v2025 = vpop.f32.mrf.mxu0
      %v2026 = vadd.f32 0.0, %v2025
      %v2027 = vpop.f32.mrf.mxu0
      %v2028 = vadd.f32 0.0, %v2027
      %2029 = vmatprep.mubr.f32.mxu0 0.0
      %2030 = vmatmul.mubr.f32.gmra.mxu0 %v1810
      %v2031 = vpop.f32.mrf.mxu0
      %v2032 = vadd.f32 0.0, %v2031
      %v2033 = vpop.f32.mrf.mxu0
      %v2034 = vadd.f32 0.0, %v2033
      %2035 = vmatprep.mubr.f32.mxu0 0.0
      %2036 = vmatmul.mubr.f32.gmra.mxu0 %v1813
      %v2037 = vpop.f32.mrf.mxu0
      %v2038 = vadd.f32 0.0, %v2037
      %v2039 = vpop.f32.mrf.mxu0
      %v2040 = vadd.f32 0.0, %v2039
      %2041 = vmatprep.mubr.f32.mxu0 0.0
      %2042 = vmatmul.mubr.f32.gmra.mxu0 %v1816
      %v2043 = vpop.f32.mrf.mxu0
      %v2044 = vadd.f32 0.0, %v2043
      %v2045 = vpop.f32.mrf.mxu0
      %v2046 = vadd.f32 0.0, %v2045
      %2047 = vmatprep.mubr.f32.mxu0 0.0
      %2048 = vmatmul.mubr.f32.gmra.mxu0 %v1819
      %v2049 = vpop.f32.mrf.mxu0
      %v2050 = vadd.f32 0.0, %v2049
      %v2051 = vpop.f32.mrf.mxu0
      %v2052 = vadd.f32 0.0, %v2051
      %2053 = vmatprep.mubr.f32.mxu0 0.0
      %2054 = vmatmul.mubr.f32.gmra.mxu0 %v1822
      %v2055 = vpop.f32.mrf.mxu0
      %v2056 = vadd.f32 0.0, %v2055
      %v2057 = vpop.f32.mrf.mxu0
      %v2058 = vadd.f32 0.0, %v2057
      %2059 = vmatprep.mubr.f32.mxu0 0.0
      %2060 = vmatmul.mubr.f32.gmra.mxu0 %v1825
      %v2061 = vpop.f32.mrf.mxu0
      %v2062 = vadd.f32 0.0, %v2061
      %v2063 = vpop.f32.mrf.mxu0
      %v2064 = vadd.f32 0.0, %v2063
      %2065 = vdwg.mxu0
      %v2067 = vsel %vm362, %v1446, 0
      %v2070 = vsel %vm362, %v1447, 0
      %v2073 = vsel %vm362, %v1448, 0
      %v2076 = vsel %vm362, %v1449, 0
      %v2079 = vsel %vm362, %v1450, 0
      %v2082 = vsel %vm362, %v1451, 0
      %v2085 = vsel %vm362, %v1452, 0
      %v2088 = vsel %vm362, %v1453, 0
      %v2091 = vsel %vm362, %v1454, 0
      %v2094 = vsel %vm362, %v1455, 0
      %v2097 = vsel %vm362, %v1456, 0
      %v2100 = vsel %vm362, %v1457, 0
      %v2103 = vsel %vm362, %v1458, 0
      %v2106 = vsel %vm362, %v1459, 0
      %v2109 = vsel %vm362, %v1460, 0
      %v2112 = vsel %vm362, %v1461, 0
      %v2115 = vsel %vm362, %v1462, 0
      %v2118 = vsel %vm362, %v1463, 0
      %v2121 = vsel %vm362, %v1464, 0
      %v2124 = vsel %vm362, %v1465, 0
      %v2127 = vsel %vm362, %v1466, 0
      %v2130 = vsel %vm362, %v1467, 0
      %v2133 = vsel %vm362, %v1468, 0
      %v2136 = vsel %vm362, %v1469, 0
      %v2139 = vsel %vm362, %v1470, 0
      %v2142 = vsel %vm362, %v1471, 0
      %v2145 = vsel %vm362, %v1472, 0
      %v2148 = vsel %vm362, %v1473, 0
      %v2151 = vsel %vm611, %v1718, 0
      %v2154 = vsel %vm611, %v1719, 0
      %2156 = vmatprep.subr.mxu0 0.0
      %2157 = vmatpush1.msra.mxu0 0.0
      %2158 = vmatprep.subr.mxu0 0.0
      %2159 = vmatpush1.msra.mxu0 0.0
      %2160 = vmatprep.subr.mxu0 0.0
      %2161 = vmatpush1.msra.mxu0 0.0
      %2162 = vmatprep.subr.mxu0 0.0
      %2163 = vmatpush1.msra.mxu0 0.0
      %2164 = vmatprep.subr.mxu0 0.0
      %2165 = vmatpush1.msra.mxu0 0.0
      %2166 = vmatprep.subr.mxu0 %v2154
      %2167 = vmatpush1.msra.mxu0 %v2151
      %2168 = vmatprep.subr.mxu0 %v1717
      %2169 = vmatpush1.msra.mxu0 %v1716
      %2170 = vmatprep.subr.mxu0 %v1715
      %2171 = vmatpush1.msra.mxu0 %v1714
      %2172 = vmatprep.subr.mxu0 %v1713
      %2173 = vmatpush1.msra.mxu0 %v1712
      %2174 = vmatprep.subr.mxu0 %v1711
      %2175 = vmatpush1.msra.mxu0 %v1710
      %2176 = vmatprep.subr.mxu0 %v1709
      %2177 = vmatpush1.msra.mxu0 %v1708
      %2178 = vmatprep.subr.mxu0 %v1707
      %2179 = vmatpush1.msra.mxu0 %v1706
      %2180 = vmatprep.subr.mxu0 %v1705
      %2181 = vmatpush1.msra.mxu0 %v1704
      %2182 = vmatprep.subr.mxu0 %v1703
      %2183 = vmatpush1.msra.mxu0 %v1702
      %2184 = vmatprep.subr.mxu0 %v1701
      %2185 = vmatpush1.msra.mxu0 %v1700
      %2186 = vmatprep.subr.mxu0 %v1699
      %2187 = vmatpush1.msra.mxu0 %v1698
      %2188 = vmatprep.subr.mxu0 0.0
      %2189 = vmatpush2.msra.mxu0 0.0
      %2190 = vmatprep.subr.mxu0 0.0
      %2191 = vmatpush2.msra.mxu0 0.0
      %2192 = vmatprep.subr.mxu0 0.0
      %2193 = vmatpush2.msra.mxu0 0.0
      %2194 = vmatprep.subr.mxu0 0.0
      %2195 = vmatpush2.msra.mxu0 0.0
      %2196 = vmatprep.subr.mxu0 0.0
      %2197 = vmatpush2.msra.mxu0 0.0
      %2198 = vmatprep.subr.mxu0 0.0
      %2199 = vmatpush2.msra.mxu0 0.0
      %2200 = vmatprep.subr.mxu0 0.0
      %2201 = vmatpush2.msra.mxu0 0.0
      %2202 = vmatprep.subr.mxu0 0.0
      %2203 = vmatpush2.msra.mxu0 0.0
      %2204 = vmatprep.subr.mxu0 0.0
      %2205 = vmatpush2.msra.mxu0 0.0
      %2206 = vmatprep.subr.mxu0 0.0
      %2207 = vmatpush2.msra.mxu0 0.0
      %2208 = vmatprep.subr.mxu0 0.0
      %2209 = vmatpush2.msra.mxu0 0.0
      %2210 = vmatprep.subr.mxu0 0.0
      %2211 = vmatpush2.msra.mxu0 0.0
      %2212 = vmatprep.subr.mxu0 0.0
      %2213 = vmatpush2.msra.mxu0 0.0
      %2214 = vmatprep.subr.mxu0 0.0
      %2215 = vmatpush2.msra.mxu0 0.0
      %2216 = vmatprep.subr.mxu0 0.0
      %2217 = vmatpush2.msra.mxu0 0.0
      %2218 = vmatprep.subr.mxu0 0.0
      %2219 = vmatpush2.msra.mxu0 0.0
      %2220 = vmatprep.mubr.f32.mxu0 0.0
      %2221 = vmatmul.mubr.f32.gmra.mxu0 %v2067
      %v2222 = vpop.f32.mrf.mxu0
      %v2223 = vadd.f32 %v1900, %v2222
      %v2224 = vpop.f32.mrf.mxu0
      %v2225 = vadd.f32 %v1902, %v2224
      %2226 = vmatprep.mubr.f32.mxu0 0.0
      %2227 = vmatmul.mubr.f32.gmra.mxu0 %v2070
      %v2228 = vpop.f32.mrf.mxu0
      %v2229 = vadd.f32 %v1906, %v2228
      %v2230 = vpop.f32.mrf.mxu0
      %v2231 = vadd.f32 %v1908, %v2230
      %2232 = vmatprep.mubr.f32.mxu0 0.0
      %2233 = vmatmul.mubr.f32.gmra.mxu0 %v2073
      %v2234 = vpop.f32.mrf.mxu0
      %v2235 = vadd.f32 %v1912, %v2234
      %v2236 = vpop.f32.mrf.mxu0
      %v2237 = vadd.f32 %v1914, %v2236
      %2238 = vmatprep.mubr.f32.mxu0 0.0
      %2239 = vmatmul.mubr.f32.gmra.mxu0 %v2076
      %v2240 = vpop.f32.mrf.mxu0
      %v2241 = vadd.f32 %v1918, %v2240
      %v2242 = vpop.f32.mrf.mxu0
      %v2243 = vadd.f32 %v1920, %v2242
      %2244 = vmatprep.mubr.f32.mxu0 0.0
      %2245 = vmatmul.mubr.f32.gmra.mxu0 %v2079
      %v2246 = vpop.f32.mrf.mxu0
      %v2247 = vadd.f32 %v1924, %v2246
      %v2248 = vpop.f32.mrf.mxu0
      %v2249 = vadd.f32 %v1926, %v2248
      %2250 = vmatprep.mubr.f32.mxu0 0.0
      %2251 = vmatmul.mubr.f32.gmra.mxu0 %v2082
      %v2252 = vpop.f32.mrf.mxu0
      %v2253 = vadd.f32 %v1930, %v2252
      %v2254 = vpop.f32.mrf.mxu0
      %v2255 = vadd.f32 %v1932, %v2254
      %2256 = vmatprep.mubr.f32.mxu0 0.0
      %2257 = vmatmul.mubr.f32.gmra.mxu0 %v2085
      %v2258 = vpop.f32.mrf.mxu0
      %v2259 = vadd.f32 %v1936, %v2258
      %v2260 = vpop.f32.mrf.mxu0
      %v2261 = vadd.f32 %v1938, %v2260
      %2262 = vmatprep.mubr.f32.mxu0 0.0
      %2263 = vmatmul.mubr.f32.gmra.mxu0 %v2088
      %v2264 = vpop.f32.mrf.mxu0
      %v2265 = vadd.f32 %v1942, %v2264
      %v2266 = vpop.f32.mrf.mxu0
      %v2267 = vadd.f32 %v1944, %v2266
      %2268 = vmatprep.mubr.f32.mxu0 0.0
      %2269 = vmatmul.mubr.f32.gmra.mxu0 %v2091
      %v2270 = vpop.f32.mrf.mxu0
      %v2271 = vadd.f32 %v1948, %v2270
      %v2272 = vpop.f32.mrf.mxu0
      %v2273 = vadd.f32 %v1950, %v2272
      %2274 = vmatprep.mubr.f32.mxu0 0.0
      %2275 = vmatmul.mubr.f32.gmra.mxu0 %v2094
      %v2276 = vpop.f32.mrf.mxu0
      %v2277 = vadd.f32 %v1954, %v2276
      %v2278 = vpop.f32.mrf.mxu0
      %v2279 = vadd.f32 %v1956, %v2278
      %2280 = vmatprep.mubr.f32.mxu0 0.0
      %2281 = vmatmul.mubr.f32.gmra.mxu0 %v2097
      %v2282 = vpop.f32.mrf.mxu0
      %v2283 = vadd.f32 %v1960, %v2282
      %v2284 = vpop.f32.mrf.mxu0
      %v2285 = vadd.f32 %v1962, %v2284
      %2286 = vmatprep.mubr.f32.mxu0 0.0
      %2287 = vmatmul.mubr.f32.gmra.mxu0 %v2100
      %v2288 = vpop.f32.mrf.mxu0
      %v2289 = vadd.f32 %v1966, %v2288
      %v2290 = vpop.f32.mrf.mxu0
      %v2291 = vadd.f32 %v1968, %v2290
      %2292 = vmatprep.mubr.f32.mxu0 0.0
      %2293 = vmatmul.mubr.f32.gmra.mxu0 %v2103
      %v2294 = vpop.f32.mrf.mxu0
      %v2295 = vadd.f32 %v1972, %v2294
      %v2296 = vpop.f32.mrf.mxu0
      %v2297 = vadd.f32 %v1974, %v2296
      %2298 = vmatprep.mubr.f32.mxu0 0.0
      %2299 = vmatmul.mubr.f32.gmra.mxu0 %v2106
      %v2300 = vpop.f32.mrf.mxu0
      %v2301 = vadd.f32 %v1978, %v2300
      %v2302 = vpop.f32.mrf.mxu0
      %v2303 = vadd.f32 %v1980, %v2302
      %2304 = vmatprep.mubr.f32.mxu0 0.0
      %2305 = vmatmul.mubr.f32.gmra.mxu0 %v2109
      %v2306 = vpop.f32.mrf.mxu0
      %v2307 = vadd.f32 %v1984, %v2306
      %v2308 = vpop.f32.mrf.mxu0
      %v2309 = vadd.f32 %v1986, %v2308
      %2310 = vmatprep.mubr.f32.mxu0 0.0
      %2311 = vmatmul.mubr.f32.gmra.mxu0 %v2112
      %v2312 = vpop.f32.mrf.mxu0
      %v2313 = vadd.f32 %v1990, %v2312
      %v2314 = vpop.f32.mrf.mxu0
      %v2315 = vadd.f32 %v1992, %v2314
      %2316 = vmatprep.mubr.f32.mxu0 0.0
      %2317 = vmatmul.mubr.f32.gmra.mxu0 %v2115
      %v2318 = vpop.f32.mrf.mxu0
      %v2319 = vadd.f32 %v1996, %v2318
      %v2320 = vpop.f32.mrf.mxu0
      %v2321 = vadd.f32 %v1998, %v2320
      %2322 = vmatprep.mubr.f32.mxu0 0.0
      %2323 = vmatmul.mubr.f32.gmra.mxu0 %v2118
      %v2324 = vpop.f32.mrf.mxu0
      %v2325 = vadd.f32 %v2002, %v2324
      %v2326 = vpop.f32.mrf.mxu0
      %v2327 = vadd.f32 %v2004, %v2326
      %2328 = vmatprep.mubr.f32.mxu0 0.0
      %2329 = vmatmul.mubr.f32.gmra.mxu0 %v2121
      %v2330 = vpop.f32.mrf.mxu0
      %v2331 = vadd.f32 %v2008, %v2330
      %v2332 = vpop.f32.mrf.mxu0
      %v2333 = vadd.f32 %v2010, %v2332
      %2334 = vmatprep.mubr.f32.mxu0 0.0
      %2335 = vmatmul.mubr.f32.gmra.mxu0 %v2124
      %v2336 = vpop.f32.mrf.mxu0
      %v2337 = vadd.f32 %v2014, %v2336
      %v2338 = vpop.f32.mrf.mxu0
      %v2339 = vadd.f32 %v2016, %v2338
      %2340 = vmatprep.mubr.f32.mxu0 0.0
      %2341 = vmatmul.mubr.f32.gmra.mxu0 %v2127
      %v2342 = vpop.f32.mrf.mxu0
      %v2343 = vadd.f32 %v2020, %v2342
      %v2344 = vpop.f32.mrf.mxu0
      %v2345 = vadd.f32 %v2022, %v2344
      %2346 = vmatprep.mubr.f32.mxu0 0.0
      %2347 = vmatmul.mubr.f32.gmra.mxu0 %v2130
      %v2348 = vpop.f32.mrf.mxu0
      %v2349 = vadd.f32 %v2026, %v2348
      %v2350 = vpop.f32.mrf.mxu0
      %v2351 = vadd.f32 %v2028, %v2350
      %2352 = vmatprep.mubr.f32.mxu0 0.0
      %2353 = vmatmul.mubr.f32.gmra.mxu0 %v2133
      %v2354 = vpop.f32.mrf.mxu0
      %v2355 = vadd.f32 %v2032, %v2354
      %v2356 = vpop.f32.mrf.mxu0
      %v2357 = vadd.f32 %v2034, %v2356
      %2358 = vmatprep.mubr.f32.mxu0 0.0
      %2359 = vmatmul.mubr.f32.gmra.mxu0 %v2136
      %v2360 = vpop.f32.mrf.mxu0
      %v2361 = vadd.f32 %v2038, %v2360
      %v2362 = vpop.f32.mrf.mxu0
      %v2363 = vadd.f32 %v2040, %v2362
      %2364 = vmatprep.mubr.f32.mxu0 0.0
      %2365 = vmatmul.mubr.f32.gmra.mxu0 %v2139
      %v2366 = vpop.f32.mrf.mxu0
      %v2367 = vadd.f32 %v2044, %v2366
      %v2368 = vpop.f32.mrf.mxu0
      %v2369 = vadd.f32 %v2046, %v2368
      %2370 = vmatprep.mubr.f32.mxu0 0.0
      %2371 = vmatmul.mubr.f32.gmra.mxu0 %v2142
      %v2372 = vpop.f32.mrf.mxu0
      %v2373 = vadd.f32 %v2050, %v2372
      %v2374 = vpop.f32.mrf.mxu0
      %v2375 = vadd.f32 %v2052, %v2374
      %2376 = vmatprep.mubr.f32.mxu0 0.0
      %2377 = vmatmul.mubr.f32.gmra.mxu0 %v2145
      %v2378 = vpop.f32.mrf.mxu0
      %v2379 = vadd.f32 %v2056, %v2378
      %v2380 = vpop.f32.mrf.mxu0
      %v2381 = vadd.f32 %v2058, %v2380
      %2382 = vmatprep.mubr.f32.mxu0 0.0
      %2383 = vmatmul.mubr.f32.gmra.mxu0 %v2148
      %v2384 = vpop.f32.mrf.mxu0
      %v2385 = vadd.f32 %v2062, %v2384
      %v2386 = vpop.f32.mrf.mxu0
      %v2387 = vadd.f32 %v2064, %v2386
      %2388 = vdwg.mxu0
      %s2389 = scalar_lea.vmem %s3, 352
      %v2390 = vld [vmem:[%s2389] sm:$0xff]
      %v2391 = vld [vmem:[%s2389 + $0x8] sm:$0xff]
      %v2392 = vld [vmem:[%s2389 + $0x10] sm:$0xff]
      %v2393 = vld [vmem:[%s2389 + $0x18] sm:$0xff]
      %v2394 = vld [vmem:[%s2389 + $0x20] sm:$0xff]
      %v2395 = vld [vmem:[%s2389 + $0x28] sm:$0xff]
      %v2396 = vld [vmem:[%s2389 + $0x30] sm:$0xff]
      %v2397 = vld [vmem:[%s2389 + $0x38] sm:$0xff]
      %v2398 = vld [vmem:[%s2389 + $0x40] sm:$0xff]
      %v2399 = vld [vmem:[%s2389 + $0x48] sm:$0xff]
      %v2400 = vld [vmem:[%s2389 + $0x50] sm:$0xff]
      %v2401 = vld [vmem:[%s2389 + $0x58] sm:$0xff]
      %v2402 = vld [vmem:[%s2389 + $0x60] sm:$0xff]
      %v2403 = vld [vmem:[%s2389 + $0x68] sm:$0xff]
      %v2404 = vld [vmem:[%s2389 + $0x70] sm:$0xff]
      %v2405 = vld [vmem:[%s2389 + $0x78] sm:$0xff]
      %v2406 = vld [vmem:[%s2389 + $0x80] sm:$0xff]
      %v2407 = vld [vmem:[%s2389 + $0x88] sm:$0xff]
      %v2408 = vld [vmem:[%s2389 + $0x90] sm:$0xff]
      %v2409 = vld [vmem:[%s2389 + $0x98] sm:$0xff]
      %v2410 = vld [vmem:[%s2389 + $0xa0] sm:$0xf]
      %v2411 = vld [vmem:[%s2389 + $0xa8] sm:$0xf]
      %v2413 = vsel %vm362, %v1670, 0
      %v2416 = vsel %vm362, %v1671, 0
      %v2419 = vsel %vm362, %v1672, 0
      %v2422 = vsel %vm362, %v1673, 0
      %v2425 = vsel %vm362, %v1674, 0
      %v2428 = vsel %vm362, %v1675, 0
      %v2431 = vsel %vm362, %v1676, 0
      %v2434 = vsel %vm362, %v1677, 0
      %v2437 = vsel %vm362, %v1678, 0
      %v2440 = vsel %vm362, %v1679, 0
      %v2443 = vsel %vm362, %v1680, 0
      %v2446 = vsel %vm362, %v1681, 0
      %v2449 = vsel %vm362, %v1682, 0
      %v2452 = vsel %vm362, %v1683, 0
      %v2455 = vsel %vm362, %v1684, 0
      %v2458 = vsel %vm362, %v1685, 0
      %v2461 = vsel %vm362, %v1686, 0
      %v2464 = vsel %vm362, %v1687, 0
      %v2467 = vsel %vm362, %v1688, 0
      %v2470 = vsel %vm362, %v1689, 0
      %v2473 = vsel %vm362, %v1690, 0
      %v2476 = vsel %vm362, %v1691, 0
      %v2479 = vsel %vm362, %v1692, 0
      %v2482 = vsel %vm362, %v1693, 0
      %v2485 = vsel %vm362, %v1694, 0
      %v2488 = vsel %vm362, %v1695, 0
      %v2491 = vsel %vm362, %v1696, 0
      %v2494 = vsel %vm362, %v1697, 0
      %v2497 = vsel %vm611, %v2410, 0
      %v2500 = vsel %vm611, %v2411, 0
      %2502 = vmatprep.subr.mxu0 0.0
      %2503 = vmatpush1.msra.mxu0 0.0
      %2504 = vmatprep.subr.mxu0 0.0
      %2505 = vmatpush1.msra.mxu0 0.0
      %2506 = vmatprep.subr.mxu0 0.0
      %2507 = vmatpush1.msra.mxu0 0.0
      %2508 = vmatprep.subr.mxu0 0.0
      %2509 = vmatpush1.msra.mxu0 0.0
      %2510 = vmatprep.subr.mxu0 0.0
      %2511 = vmatpush1.msra.mxu0 0.0
      %2512 = vmatprep.subr.mxu0 %v2500
      %2513 = vmatpush1.msra.mxu0 %v2497
      %2514 = vmatprep.subr.mxu0 %v2409
      %2515 = vmatpush1.msra.mxu0 %v2408
      %2516 = vmatprep.subr.mxu0 %v2407
      %2517 = vmatpush1.msra.mxu0 %v2406
      %2518 = vmatprep.subr.mxu0 %v2405
      %2519 = vmatpush1.msra.mxu0 %v2404
      %2520 = vmatprep.subr.mxu0 %v2403
      %2521 = vmatpush1.msra.mxu0 %v2402
      %2522 = vmatprep.subr.mxu0 %v2401
      %2523 = vmatpush1.msra.mxu0 %v2400
      %2524 = vmatprep.subr.mxu0 %v2399
      %2525 = vmatpush1.msra.mxu0 %v2398
      %2526 = vmatprep.subr.mxu0 %v2397
      %2527 = vmatpush1.msra.mxu0 %v2396
      %2528 = vmatprep.subr.mxu0 %v2395
      %2529 = vmatpush1.msra.mxu0 %v2394
      %2530 = vmatprep.subr.mxu0 %v2393
      %2531 = vmatpush1.msra.mxu0 %v2392
      %2532 = vmatprep.subr.mxu0 %v2391
      %2533 = vmatpush1.msra.mxu0 %v2390
      %2534 = vmatprep.subr.mxu0 0.0
      %2535 = vmatpush2.msra.mxu0 0.0
      %2536 = vmatprep.subr.mxu0 0.0
      %2537 = vmatpush2.msra.mxu0 0.0
      %2538 = vmatprep.subr.mxu0 0.0
      %2539 = vmatpush2.msra.mxu0 0.0
      %2540 = vmatprep.subr.mxu0 0.0
      %2541 = vmatpush2.msra.mxu0 0.0
      %2542 = vmatprep.subr.mxu0 0.0
      %2543 = vmatpush2.msra.mxu0 0.0
      %2544 = vmatprep.subr.mxu0 0.0
      %2545 = vmatpush2.msra.mxu0 0.0
      %2546 = vmatprep.subr.mxu0 0.0
      %2547 = vmatpush2.msra.mxu0 0.0
      %2548 = vmatprep.subr.mxu0 0.0
      %2549 = vmatpush2.msra.mxu0 0.0
      %2550 = vmatprep.subr.mxu0 0.0
      %2551 = vmatpush2.msra.mxu0 0.0
      %2552 = vmatprep.subr.mxu0 0.0
      %2553 = vmatpush2.msra.mxu0 0.0
      %2554 = vmatprep.subr.mxu0 0.0
      %2555 = vmatpush2.msra.mxu0 0.0
      %2556 = vmatprep.subr.mxu0 0.0
      %2557 = vmatpush2.msra.mxu0 0.0
      %2558 = vmatprep.subr.mxu0 0.0
      %2559 = vmatpush2.msra.mxu0 0.0
      %2560 = vmatprep.subr.mxu0 0.0
      %2561 = vmatpush2.msra.mxu0 0.0
      %2562 = vmatprep.subr.mxu0 0.0
      %2563 = vmatpush2.msra.mxu0 0.0
      %2564 = vmatprep.subr.mxu0 0.0
      %2565 = vmatpush2.msra.mxu0 0.0
      %2566 = vmatprep.mubr.f32.mxu0 0.0
      %2567 = vmatmul.mubr.f32.gmra.mxu0 %v2413
      %v2568 = vpop.f32.mrf.mxu0
      %v2569 = vadd.f32 0.0, %v2568
      %v2570 = vpop.f32.mrf.mxu0
      %v2571 = vadd.f32 0.0, %v2570
      %2572 = vmatprep.mubr.f32.mxu0 0.0
      %2573 = vmatmul.mubr.f32.gmra.mxu0 %v2416
      %v2574 = vpop.f32.mrf.mxu0
      %v2575 = vadd.f32 0.0, %v2574
      %v2576 = vpop.f32.mrf.mxu0
      %v2577 = vadd.f32 0.0, %v2576
      %2578 = vmatprep.mubr.f32.mxu0 0.0
      %2579 = vmatmul.mubr.f32.gmra.mxu0 %v2419
      %v2580 = vpop.f32.mrf.mxu0
      %v2581 = vadd.f32 0.0, %v2580
      %v2582 = vpop.f32.mrf.mxu0
      %v2583 = vadd.f32 0.0, %v2582
      %2584 = vmatprep.mubr.f32.mxu0 0.0
      %2585 = vmatmul.mubr.f32.gmra.mxu0 %v2422
      %v2586 = vpop.f32.mrf.mxu0
      %v2587 = vadd.f32 0.0, %v2586
      %v2588 = vpop.f32.mrf.mxu0
      %v2589 = vadd.f32 0.0, %v2588
      %2590 = vmatprep.mubr.f32.mxu0 0.0
      %2591 = vmatmul.mubr.f32.gmra.mxu0 %v2425
      %v2592 = vpop.f32.mrf.mxu0
      %v2593 = vadd.f32 0.0, %v2592
      %v2594 = vpop.f32.mrf.mxu0
      %v2595 = vadd.f32 0.0, %v2594
      %2596 = vmatprep.mubr.f32.mxu0 0.0
      %2597 = vmatmul.mubr.f32.gmra.mxu0 %v2428
      %v2598 = vpop.f32.mrf.mxu0
      %v2599 = vadd.f32 0.0, %v2598
      %v2600 = vpop.f32.mrf.mxu0
      %v2601 = vadd.f32 0.0, %v2600
      %2602 = vmatprep.mubr.f32.mxu0 0.0
      %2603 = vmatmul.mubr.f32.gmra.mxu0 %v2431
      %v2604 = vpop.f32.mrf.mxu0
      %v2605 = vadd.f32 0.0, %v2604
      %v2606 = vpop.f32.mrf.mxu0
      %v2607 = vadd.f32 0.0, %v2606
      %2608 = vmatprep.mubr.f32.mxu0 0.0
      %2609 = vmatmul.mubr.f32.gmra.mxu0 %v2434
      %v2610 = vpop.f32.mrf.mxu0
      %v2611 = vadd.f32 0.0, %v2610
      %v2612 = vpop.f32.mrf.mxu0
      %v2613 = vadd.f32 0.0, %v2612
      %2614 = vmatprep.mubr.f32.mxu0 0.0
      %2615 = vmatmul.mubr.f32.gmra.mxu0 %v2437
      %v2616 = vpop.f32.mrf.mxu0
      %v2617 = vadd.f32 0.0, %v2616
      %v2618 = vpop.f32.mrf.mxu0
      %v2619 = vadd.f32 0.0, %v2618
      %2620 = vmatprep.mubr.f32.mxu0 0.0
      %2621 = vmatmul.mubr.f32.gmra.mxu0 %v2440
      %v2622 = vpop.f32.mrf.mxu0
      %v2623 = vadd.f32 0.0, %v2622
      %v2624 = vpop.f32.mrf.mxu0
      %v2625 = vadd.f32 0.0, %v2624
      %2626 = vmatprep.mubr.f32.mxu0 0.0
      %2627 = vmatmul.mubr.f32.gmra.mxu0 %v2443
      %v2628 = vpop.f32.mrf.mxu0
      %v2629 = vadd.f32 0.0, %v2628
      %v2630 = vpop.f32.mrf.mxu0
      %v2631 = vadd.f32 0.0, %v2630
      %2632 = vmatprep.mubr.f32.mxu0 0.0
      %2633 = vmatmul.mubr.f32.gmra.mxu0 %v2446
      %v2634 = vpop.f32.mrf.mxu0
      %v2635 = vadd.f32 0.0, %v2634
      %v2636 = vpop.f32.mrf.mxu0
      %v2637 = vadd.f32 0.0, %v2636
      %2638 = vmatprep.mubr.f32.mxu0 0.0
      %2639 = vmatmul.mubr.f32.gmra.mxu0 %v2449
      %v2640 = vpop.f32.mrf.mxu0
      %v2641 = vadd.f32 0.0, %v2640
      %v2642 = vpop.f32.mrf.mxu0
      %v2643 = vadd.f32 0.0, %v2642
      %2644 = vmatprep.mubr.f32.mxu0 0.0
      %2645 = vmatmul.mubr.f32.gmra.mxu0 %v2452
      %v2646 = vpop.f32.mrf.mxu0
      %v2647 = vadd.f32 0.0, %v2646
      %v2648 = vpop.f32.mrf.mxu0
      %v2649 = vadd.f32 0.0, %v2648
      %2650 = vmatprep.mubr.f32.mxu0 0.0
      %2651 = vmatmul.mubr.f32.gmra.mxu0 %v2455
      %v2652 = vpop.f32.mrf.mxu0
      %v2653 = vadd.f32 0.0, %v2652
      %v2654 = vpop.f32.mrf.mxu0
      %v2655 = vadd.f32 0.0, %v2654
      %2656 = vmatprep.mubr.f32.mxu0 0.0
      %2657 = vmatmul.mubr.f32.gmra.mxu0 %v2458
      %v2658 = vpop.f32.mrf.mxu0
      %v2659 = vadd.f32 0.0, %v2658
      %v2660 = vpop.f32.mrf.mxu0
      %v2661 = vadd.f32 0.0, %v2660
      %2662 = vmatprep.mubr.f32.mxu0 0.0
      %2663 = vmatmul.mubr.f32.gmra.mxu0 %v2461
      %v2664 = vpop.f32.mrf.mxu0
      %v2665 = vadd.f32 0.0, %v2664
      %v2666 = vpop.f32.mrf.mxu0
      %v2667 = vadd.f32 0.0, %v2666
      %2668 = vmatprep.mubr.f32.mxu0 0.0
      %2669 = vmatmul.mubr.f32.gmra.mxu0 %v2464
      %v2670 = vpop.f32.mrf.mxu0
      %v2671 = vadd.f32 0.0, %v2670
      %v2672 = vpop.f32.mrf.mxu0
      %v2673 = vadd.f32 0.0, %v2672
      %2674 = vmatprep.mubr.f32.mxu0 0.0
      %2675 = vmatmul.mubr.f32.gmra.mxu0 %v2467
      %v2676 = vpop.f32.mrf.mxu0
      %v2677 = vadd.f32 0.0, %v2676
      %v2678 = vpop.f32.mrf.mxu0
      %v2679 = vadd.f32 0.0, %v2678
      %2680 = vmatprep.mubr.f32.mxu0 0.0
      %2681 = vmatmul.mubr.f32.gmra.mxu0 %v2470
      %v2682 = vpop.f32.mrf.mxu0
      %v2683 = vadd.f32 0.0, %v2682
      %v2684 = vpop.f32.mrf.mxu0
      %v2685 = vadd.f32 0.0, %v2684
      %2686 = vmatprep.mubr.f32.mxu0 0.0
      %2687 = vmatmul.mubr.f32.gmra.mxu0 %v2473
      %v2688 = vpop.f32.mrf.mxu0
      %v2689 = vadd.f32 0.0, %v2688
      %v2690 = vpop.f32.mrf.mxu0
      %v2691 = vadd.f32 0.0, %v2690
      %2692 = vmatprep.mubr.f32.mxu0 0.0
      %2693 = vmatmul.mubr.f32.gmra.mxu0 %v2476
      %v2694 = vpop.f32.mrf.mxu0
      %v2695 = vadd.f32 0.0, %v2694
      %v2696 = vpop.f32.mrf.mxu0
      %v2697 = vadd.f32 0.0, %v2696
      %2698 = vmatprep.mubr.f32.mxu0 0.0
      %2699 = vmatmul.mubr.f32.gmra.mxu0 %v2479
      %v2700 = vpop.f32.mrf.mxu0
      %v2701 = vadd.f32 0.0, %v2700
      %v2702 = vpop.f32.mrf.mxu0
      %v2703 = vadd.f32 0.0, %v2702
      %2704 = vmatprep.mubr.f32.mxu0 0.0
      %2705 = vmatmul.mubr.f32.gmra.mxu0 %v2482
      %v2706 = vpop.f32.mrf.mxu0
      %v2707 = vadd.f32 0.0, %v2706
      %v2708 = vpop.f32.mrf.mxu0
      %v2709 = vadd.f32 0.0, %v2708
      %2710 = vmatprep.mubr.f32.mxu0 0.0
      %2711 = vmatmul.mubr.f32.gmra.mxu0 %v2485
      %v2712 = vpop.f32.mrf.mxu0
      %v2713 = vadd.f32 0.0, %v2712
      %v2714 = vpop.f32.mrf.mxu0
      %v2715 = vadd.f32 0.0, %v2714
      %2716 = vmatprep.mubr.f32.mxu0 0.0
      %2717 = vmatmul.mubr.f32.gmra.mxu0 %v2488
      %v2718 = vpop.f32.mrf.mxu0
      %v2719 = vadd.f32 0.0, %v2718
      %v2720 = vpop.f32.mrf.mxu0
      %v2721 = vadd.f32 0.0, %v2720
      %2722 = vmatprep.mubr.f32.mxu0 0.0
      %2723 = vmatmul.mubr.f32.gmra.mxu0 %v2491
      %v2724 = vpop.f32.mrf.mxu0
      %v2725 = vadd.f32 0.0, %v2724
      %v2726 = vpop.f32.mrf.mxu0
      %v2727 = vadd.f32 0.0, %v2726
      %2728 = vmatprep.mubr.f32.mxu0 0.0
      %2729 = vmatmul.mubr.f32.gmra.mxu0 %v2494
      %v2730 = vpop.f32.mrf.mxu0
      %v2731 = vadd.f32 0.0, %v2730
      %v2732 = vpop.f32.mrf.mxu0
      %v2733 = vadd.f32 0.0, %v2732
      %2734 = vdwg.mxu0
      %v2735 = vadd.f32 %v2223, %v2569
      %v2736 = vadd.f32 %v2225, %v2571
      %v2737 = vadd.f32 %v2229, %v2575
      %v2738 = vadd.f32 %v2231, %v2577
      %v2739 = vadd.f32 %v2235, %v2581
      %v2740 = vadd.f32 %v2237, %v2583
      %v2741 = vadd.f32 %v2241, %v2587
      %v2742 = vadd.f32 %v2243, %v2589
      %v2743 = vadd.f32 %v2247, %v2593
      %v2744 = vadd.f32 %v2249, %v2595
      %v2745 = vadd.f32 %v2253, %v2599
      %v2746 = vadd.f32 %v2255, %v2601
      %v2747 = vadd.f32 %v2259, %v2605
      %v2748 = vadd.f32 %v2261, %v2607
      %v2749 = vadd.f32 %v2265, %v2611
      %v2750 = vadd.f32 %v2267, %v2613
      %v2751 = vadd.f32 %v2271, %v2617
      %v2752 = vadd.f32 %v2273, %v2619
      %v2753 = vadd.f32 %v2277, %v2623
      %v2754 = vadd.f32 %v2279, %v2625
      %v2755 = vadd.f32 %v2283, %v2629
      %v2756 = vadd.f32 %v2285, %v2631
      %v2757 = vadd.f32 %v2289, %v2635
      %v2758 = vadd.f32 %v2291, %v2637
      %v2759 = vadd.f32 %v2295, %v2641
      %v2760 = vadd.f32 %v2297, %v2643
      %v2761 = vadd.f32 %v2301, %v2647
      %v2762 = vadd.f32 %v2303, %v2649
      %v2763 = vadd.f32 %v2307, %v2653
      %v2764 = vadd.f32 %v2309, %v2655
      %v2765 = vadd.f32 %v2313, %v2659
      %v2766 = vadd.f32 %v2315, %v2661
      %v2767 = vadd.f32 %v2319, %v2665
      %v2768 = vadd.f32 %v2321, %v2667
      %v2769 = vadd.f32 %v2325, %v2671
      %v2770 = vadd.f32 %v2327, %v2673
      %v2771 = vadd.f32 %v2331, %v2677
      %v2772 = vadd.f32 %v2333, %v2679
      %v2773 = vadd.f32 %v2337, %v2683
      %v2774 = vadd.f32 %v2339, %v2685
      %v2775 = vadd.f32 %v2343, %v2689
      %v2776 = vadd.f32 %v2345, %v2691
      %v2777 = vadd.f32 %v2349, %v2695
      %v2778 = vadd.f32 %v2351, %v2697
      %v2779 = vadd.f32 %v2355, %v2701
      %v2780 = vadd.f32 %v2357, %v2703
      %v2781 = vadd.f32 %v2361, %v2707
      %v2782 = vadd.f32 %v2363, %v2709
      %v2783 = vadd.f32 %v2367, %v2713
      %v2784 = vadd.f32 %v2369, %v2715
      %v2785 = vadd.f32 %v2373, %v2719
      %v2786 = vadd.f32 %v2375, %v2721
      %v2787 = vadd.f32 %v2379, %v2725
      %v2788 = vadd.f32 %v2381, %v2727
      %v2789 = vadd.f32 %v2385, %v2731
      %v2790 = vadd.f32 %v2387, %v2733
      %v2791 = vmax.f32 %v2735, %v2736
      %v2792 = vmax.f32 %v2737, %v2738
      %v2793 = vmax.f32 %v2739, %v2740
      %v2794 = vmax.f32 %v2741, %v2742
      %v2795 = vmax.f32 %v2743, %v2744
      %v2796 = vmax.f32 %v2745, %v2746
      %v2797 = vmax.f32 %v2747, %v2748
      %v2798 = vmax.f32 %v2749, %v2750
      %v2799 = vmax.f32 %v2751, %v2752
      %v2800 = vmax.f32 %v2753, %v2754
      %v2801 = vmax.f32 %v2755, %v2756
      %v2802 = vmax.f32 %v2757, %v2758
      %v2803 = vmax.f32 %v2759, %v2760
      %v2804 = vmax.f32 %v2761, %v2762
      %v2805 = vmax.f32 %v2763, %v2764
      %v2806 = vmax.f32 %v2765, %v2766
      %v2807 = vmax.f32 %v2767, %v2768
      %v2808 = vmax.f32 %v2769, %v2770
      %v2809 = vmax.f32 %v2771, %v2772
      %v2810 = vmax.f32 %v2773, %v2774
      %v2811 = vmax.f32 %v2775, %v2776
      %v2812 = vmax.f32 %v2777, %v2778
      %v2813 = vmax.f32 %v2779, %v2780
      %v2814 = vmax.f32 %v2781, %v2782
      %v2815 = vmax.f32 %v2783, %v2784
      %v2816 = vmax.f32 %v2785, %v2786
      %v2817 = vmax.f32 %v2787, %v2788
      %v2818 = vmax.f32 %v2789, %v2790
      %v2819 = vld [vmem:[%s4] sm:$0x1]
      %v2821 = vlaneseq
      %v2822 = vshrl.u32 %v2821, 7
      %v2823 = vsub.s32 0, %v2822
      %v2824 = vrot.slane %v2819, %v2823
      %v2826 = vadd.f32 %v2791, %v2824
      %v2827 = vadd.f32 %v2792, %v2824
      %v2828 = vadd.f32 %v2793, %v2824
      %v2829 = vadd.f32 %v2794, %v2824
      %v2830 = vadd.f32 %v2795, %v2824
      %v2831 = vadd.f32 %v2796, %v2824
      %v2832 = vadd.f32 %v2797, %v2824
      %v2833 = vadd.f32 %v2798, %v2824
      %v2834 = vadd.f32 %v2799, %v2824
      %v2835 = vadd.f32 %v2800, %v2824
      %v2836 = vadd.f32 %v2801, %v2824
      %v2837 = vadd.f32 %v2802, %v2824
      %v2838 = vadd.f32 %v2803, %v2824
      %v2839 = vadd.f32 %v2804, %v2824
      %v2840 = vadd.f32 %v2805, %v2824
      %v2841 = vadd.f32 %v2806, %v2824
      %v2842 = vadd.f32 %v2807, %v2824
      %v2843 = vadd.f32 %v2808, %v2824
      %v2844 = vadd.f32 %v2809, %v2824
      %v2845 = vadd.f32 %v2810, %v2824
      %v2846 = vadd.f32 %v2811, %v2824
      %v2847 = vadd.f32 %v2812, %v2824
      %v2848 = vadd.f32 %v2813, %v2824
      %v2849 = vadd.f32 %v2814, %v2824
      %v2850 = vadd.f32 %v2815, %v2824
      %v2851 = vadd.f32 %v2816, %v2824
      %v2852 = vadd.f32 %v2817, %v2824
      %v2853 = vadd.f32 %v2818, %v2824
      %v2854 = vmax.f32 %v2826, 0.0
      %v2855 = vmax.f32 %v2827, 0.0
      %v2856 = vmax.f32 %v2828, 0.0
      %v2857 = vmax.f32 %v2829, 0.0
      %v2858 = vmax.f32 %v2830, 0.0
      %v2859 = vmax.f32 %v2831, 0.0
      %v2860 = vmax.f32 %v2832, 0.0
      %v2861 = vmax.f32 %v2833, 0.0
      %v2862 = vmax.f32 %v2834, 0.0
      %v2863 = vmax.f32 %v2835, 0.0
      %v2864 = vmax.f32 %v2836, 0.0
      %v2865 = vmax.f32 %v2837, 0.0
      %v2866 = vmax.f32 %v2838, 0.0
      %v2867 = vmax.f32 %v2839, 0.0
      %v2868 = vmax.f32 %v2840, 0.0
      %v2869 = vmax.f32 %v2841, 0.0
      %v2870 = vmax.f32 %v2842, 0.0
      %v2871 = vmax.f32 %v2843, 0.0
      %v2872 = vmax.f32 %v2844, 0.0
      %v2873 = vmax.f32 %v2845, 0.0
      %v2874 = vmax.f32 %v2846, 0.0
      %v2875 = vmax.f32 %v2847, 0.0
      %v2876 = vmax.f32 %v2848, 0.0
      %v2877 = vmax.f32 %v2849, 0.0
      %v2878 = vmax.f32 %v2850, 0.0
      %v2879 = vmax.f32 %v2851, 0.0
      %v2880 = vmax.f32 %v2852, 0.0
      %v2881 = vmax.f32 %v2853, 0.0
      %2882 = vst.msk [vmem:[#allocation2 + $0x8] sm:$0xff] %vm362, %v2854
      %2883 = vst.msk [vmem:[#allocation2 + $0x10] sm:$0xff] %vm362, %v2855
      %2884 = vst.msk [vmem:[#allocation2 + $0x18] sm:$0xff] %vm362, %v2856
      %2885 = vst.msk [vmem:[#allocation2 + $0x20] sm:$0xff] %vm362, %v2857
      %2886 = vst.msk [vmem:[#allocation2 + $0x28] sm:$0xff] %vm362, %v2858
      %2887 = vst.msk [vmem:[#allocation2 + $0x30] sm:$0xff] %vm362, %v2859
      %2888 = vst.msk [vmem:[#allocation2 + $0x38] sm:$0xff] %vm362, %v2860
      %2889 = vst.msk [vmem:[#allocation2 + $0x40] sm:$0xff] %vm362, %v2861
      %2890 = vst.msk [vmem:[#allocation2 + $0x48] sm:$0xff] %vm362, %v2862
      %2891 = vst.msk [vmem:[#allocation2 + $0x50] sm:$0xff] %vm362, %v2863
      %2892 = vst.msk [vmem:[#allocation2 + $0x58] sm:$0xff] %vm362, %v2864
      %2893 = vst.msk [vmem:[#allocation2 + $0x60] sm:$0xff] %vm362, %v2865
      %2894 = vst.msk [vmem:[#allocation2 + $0x68] sm:$0xff] %vm362, %v2866
      %2895 = vst.msk [vmem:[#allocation2 + $0x70] sm:$0xff] %vm362, %v2867
      %2896 = vst.msk [vmem:[#allocation2 + $0x78] sm:$0xff] %vm362, %v2868
      %2897 = vst.msk [vmem:[#allocation2 + $0x80] sm:$0xff] %vm362, %v2869
      %2898 = vst.msk [vmem:[#allocation2 + $0x88] sm:$0xff] %vm362, %v2870
      %2899 = vst.msk [vmem:[#allocation2 + $0x90] sm:$0xff] %vm362, %v2871
      %2900 = vst.msk [vmem:[#allocation2 + $0x98] sm:$0xff] %vm362, %v2872
      %2901 = vst.msk [vmem:[#allocation2 + $0xa0] sm:$0xff] %vm362, %v2873
      %2902 = vst.msk [vmem:[#allocation2 + $0xa8] sm:$0xff] %vm362, %v2874
      %2903 = vst.msk [vmem:[#allocation2 + $0xb0] sm:$0xff] %vm362, %v2875
      %2904 = vst.msk [vmem:[#allocation2 + $0xb8] sm:$0xff] %vm362, %v2876
      %2905 = vst.msk [vmem:[#allocation2 + $0xc0] sm:$0xff] %vm362, %v2877
      %2906 = vst.msk [vmem:[#allocation2 + $0xc8] sm:$0xff] %vm362, %v2878
      %2907 = vst.msk [vmem:[#allocation2 + $0xd0] sm:$0xff] %vm362, %v2879
      %2908 = vst.msk [vmem:[#allocation2 + $0xd8] sm:$0xff] %vm362, %v2880
      %2909 = vst.msk [vmem:[#allocation2 + $0xe0] sm:$0xff] %vm362, %v2881
      %v2910 = vld [vmem:[#allocation2 + $0x9] sm:$0xff]
      %v2911 = vld [vmem:[#allocation2 + $0x11] sm:$0xff]
      %v2912 = vld [vmem:[#allocation2 + $0x19] sm:$0xff]
      %v2913 = vld [vmem:[#allocation2 + $0x21] sm:$0xff]
      %v2914 = vld [vmem:[#allocation2 + $0x29] sm:$0xff]
      %v2915 = vld [vmem:[#allocation2 + $0x31] sm:$0xff]
      %v2916 = vld [vmem:[#allocation2 + $0x39] sm:$0xff]
      %v2917 = vld [vmem:[#allocation2 + $0x41] sm:$0xff]
      %v2918 = vld [vmem:[#allocation2 + $0x49] sm:$0xff]
      %v2919 = vld [vmem:[#allocation2 + $0x51] sm:$0xff]
      %v2920 = vld [vmem:[#allocation2 + $0x59] sm:$0xff]
      %v2921 = vld [vmem:[#allocation2 + $0x61] sm:$0xff]
      %v2922 = vld [vmem:[#allocation2 + $0x69] sm:$0xff]
      %v2923 = vld [vmem:[#allocation2 + $0x71] sm:$0xff]
      %v2924 = vld [vmem:[#allocation2 + $0x79] sm:$0xff]
      %v2925 = vld [vmem:[#allocation2 + $0x81] sm:$0xff]
      %v2926 = vld [vmem:[#allocation2 + $0x89] sm:$0xff]
      %v2927 = vld [vmem:[#allocation2 + $0x91] sm:$0xff]
      %v2928 = vld [vmem:[#allocation2 + $0x99] sm:$0xff]
      %v2929 = vld [vmem:[#allocation2 + $0xa1] sm:$0xff]
      %v2930 = vld [vmem:[#allocation2 + $0xa9] sm:$0xff]
      %v2931 = vld [vmem:[#allocation2 + $0xb1] sm:$0xff]
      %v2932 = vld [vmem:[#allocation2 + $0xb9] sm:$0xff]
      %v2933 = vld [vmem:[#allocation2 + $0xc1] sm:$0xff]
      %v2934 = vld [vmem:[#allocation2 + $0xc9] sm:$0xff]
      %v2935 = vld [vmem:[#allocation2 + $0xd1] sm:$0xff]
      %v2936 = vld [vmem:[#allocation2 + $0xd9] sm:$0xff]
      %v2937 = vld [vmem:[#allocation2 + $0xe1] sm:$0xff]
      %v2938 = vmax.f32 %v2854, %v2910
      %v2939 = vmax.f32 %v2855, %v2911
      %v2940 = vmax.f32 %v2856, %v2912
      %v2941 = vmax.f32 %v2857, %v2913
      %v2942 = vmax.f32 %v2858, %v2914
      %v2943 = vmax.f32 %v2859, %v2915
      %v2944 = vmax.f32 %v2860, %v2916
      %v2945 = vmax.f32 %v2861, %v2917
      %v2946 = vmax.f32 %v2862, %v2918
      %v2947 = vmax.f32 %v2863, %v2919
      %v2948 = vmax.f32 %v2864, %v2920
      %v2949 = vmax.f32 %v2865, %v2921
      %v2950 = vmax.f32 %v2866, %v2922
      %v2951 = vmax.f32 %v2867, %v2923
      %v2952 = vmax.f32 %v2868, %v2924
      %v2953 = vmax.f32 %v2869, %v2925
      %v2954 = vmax.f32 %v2870, %v2926
      %v2955 = vmax.f32 %v2871, %v2927
      %v2956 = vmax.f32 %v2872, %v2928
      %v2957 = vmax.f32 %v2873, %v2929
      %v2958 = vmax.f32 %v2874, %v2930
      %v2959 = vmax.f32 %v2875, %v2931
      %v2960 = vmax.f32 %v2876, %v2932
      %v2961 = vmax.f32 %v2877, %v2933
      %v2962 = vmax.f32 %v2878, %v2934
      %v2963 = vmax.f32 %v2879, %v2935
      %v2964 = vmax.f32 %v2880, %v2936
      %v2965 = vmax.f32 %v2881, %v2937
      %v2966 = vld [vmem:[%s7] sm:$0xff]
      %v2967 = vld [vmem:[%s7 + $0x8] sm:$0xff]
      %v2968 = vld [vmem:[%s7 + $0x10] sm:$0xff]
      %v2969 = vld [vmem:[%s7 + $0x18] sm:$0xff]
      %v2970 = vld [vmem:[%s7 + $0x20] sm:$0xff]
      %v2971 = vld [vmem:[%s7 + $0x28] sm:$0xff]
      %v2972 = vld [vmem:[%s7 + $0x30] sm:$0xff]
      %v2973 = vld [vmem:[%s7 + $0x38] sm:$0xff]
      %v2974 = vld [vmem:[%s7 + $0x40] sm:$0xff]
      %v2975 = vld [vmem:[%s7 + $0x48] sm:$0xff]
      %v2976 = vld [vmem:[%s7 + $0x50] sm:$0xff]
      %v2977 = vld [vmem:[%s7 + $0x58] sm:$0xff]
      %v2978 = vld [vmem:[%s7 + $0x60] sm:$0xff]
      %v2979 = vld [vmem:[%s7 + $0x68] sm:$0xff]
      %v2980 = vld [vmem:[%s7 + $0x70] sm:$0xff]
      %v2981 = vld [vmem:[%s7 + $0x78] sm:$0xff]
      %v2982 = vld [vmem:[%s7 + $0x80] sm:$0xff]
      %v2983 = vld [vmem:[%s7 + $0x88] sm:$0xff]
      %v2984 = vld [vmem:[%s7 + $0x90] sm:$0xff]
      %v2985 = vld [vmem:[%s7 + $0x98] sm:$0xff]
      %v2986 = vld [vmem:[%s7 + $0xa0] sm:$0xff]
      %v2987 = vld [vmem:[%s7 + $0xa8] sm:$0xff]
      %v2988 = vld [vmem:[%s7 + $0xb0] sm:$0xff]
      %v2989 = vld [vmem:[%s7 + $0xb8] sm:$0xff]
      %v2990 = vld [vmem:[%s7 + $0xc0] sm:$0xff]
      %v2991 = vld [vmem:[%s7 + $0xc8] sm:$0xff]
      %v2992 = vld [vmem:[%s7 + $0xd0] sm:$0xff]
      %v2993 = vld [vmem:[%s7 + $0xd8] sm:$0xff]
      %v2994 = vmul.f32 %v2938, %v2966
      %v2995 = vmul.f32 %v2939, %v2967
      %v2996 = vmul.f32 %v2940, %v2968
      %v2997 = vmul.f32 %v2941, %v2969
      %v2998 = vmul.f32 %v2942, %v2970
      %v2999 = vmul.f32 %v2943, %v2971
      %v3000 = vmul.f32 %v2944, %v2972
      %v3001 = vmul.f32 %v2945, %v2973
      %v3002 = vmul.f32 %v2946, %v2974
      %v3003 = vmul.f32 %v2947, %v2975
      %v3004 = vmul.f32 %v2948, %v2976
      %v3005 = vmul.f32 %v2949, %v2977
      %v3006 = vmul.f32 %v2950, %v2978
      %v3007 = vmul.f32 %v2951, %v2979
      %v3008 = vmul.f32 %v2952, %v2980
      %v3009 = vmul.f32 %v2953, %v2981
      %v3010 = vmul.f32 %v2954, %v2982
      %v3011 = vmul.f32 %v2955, %v2983
      %v3012 = vmul.f32 %v2956, %v2984
      %v3013 = vmul.f32 %v2957, %v2985
      %v3014 = vmul.f32 %v2958, %v2986
      %v3015 = vmul.f32 %v2959, %v2987
      %v3016 = vmul.f32 %v2960, %v2988
      %v3017 = vmul.f32 %v2961, %v2989
      %v3018 = vmul.f32 %v2962, %v2990
      %v3019 = vmul.f32 %v2963, %v2991
      %v3020 = vmul.f32 %v2964, %v2992
      %v3021 = vmul.f32 %v2965, %v2993
      %v3022 = vld [vmem:[%s8] sm:$0xff]
      %v3023 = vld [vmem:[%s8 + $0x8] sm:$0xff]
      %v3024 = vld [vmem:[%s8 + $0x10] sm:$0xff]
      %v3025 = vld [vmem:[%s8 + $0x18] sm:$0xff]
      %vm3026 = vcmask 785408
      %v3028 = vsel %vm3026, %v3023, 0
      %v3031 = vsel %vm3026, %v3025, 0
      %3033 = vmatprep.subr.mxu0 0.0
      %3034 = vmatpush1.msra.mxu0 %v3009
      %3035 = vmatprep.subr.mxu0 0.0
      %3036 = vmatpush1.msra.mxu0 %v3008
      %3037 = vmatprep.subr.mxu0 0.0
      %3038 = vmatpush1.msra.mxu0 %v3007
      %3039 = vmatprep.subr.mxu0 0.0
      %3040 = vmatpush1.msra.mxu0 %v3006
      %3041 = vmatprep.subr.mxu0 0.0
      %3042 = vmatpush1.msra.mxu0 %v3005
      %3043 = vmatprep.subr.mxu0 0.0
      %3044 = vmatpush1.msra.mxu0 %v3004
      %3045 = vmatprep.subr.mxu0 0.0
      %3046 = vmatpush1.msra.mxu0 %v3003
      %3047 = vmatprep.subr.mxu0 0.0
      %3048 = vmatpush1.msra.mxu0 %v3002
      %3049 = vmatprep.subr.mxu0 0.0
      %3050 = vmatpush1.msra.mxu0 %v3001
      %3051 = vmatprep.subr.mxu0 0.0
      %3052 = vmatpush1.msra.mxu0 %v3000
      %3053 = vmatprep.subr.mxu0 0.0
      %3054 = vmatpush1.msra.mxu0 %v2999
      %3055 = vmatprep.subr.mxu0 0.0
      %3056 = vmatpush1.msra.mxu0 %v2998
      %3057 = vmatprep.subr.mxu0 0.0
      %3058 = vmatpush1.msra.mxu0 %v2997
      %3059 = vmatprep.subr.mxu0 0.0
      %3060 = vmatpush1.msra.mxu0 %v2996
      %3061 = vmatprep.subr.mxu0 0.0
      %3062 = vmatpush1.msra.mxu0 %v2995
      %3063 = vmatprep.subr.mxu0 0.0
      %3064 = vmatpush1.msra.mxu0 %v2994
      %3065 = vmatprep.subr.mxu0 0.0
      %3066 = vmatpush2.msra.mxu0 0.0
      %3067 = vmatprep.subr.mxu0 0.0
      %3068 = vmatpush2.msra.mxu0 0.0
      %3069 = vmatprep.subr.mxu0 0.0
      %3070 = vmatpush2.msra.mxu0 0.0
      %3071 = vmatprep.subr.mxu0 0.0
      %3072 = vmatpush2.msra.mxu0 0.0
      %3073 = vmatprep.subr.mxu0 0.0
      %3074 = vmatpush2.msra.mxu0 %v3021
      %3075 = vmatprep.subr.mxu0 0.0
      %3076 = vmatpush2.msra.mxu0 %v3020
      %3077 = vmatprep.subr.mxu0 0.0
      %3078 = vmatpush2.msra.mxu0 %v3019
      %3079 = vmatprep.subr.mxu0 0.0
      %3080 = vmatpush2.msra.mxu0 %v3018
      %3081 = vmatprep.subr.mxu0 0.0
      %3082 = vmatpush2.msra.mxu0 %v3017
      %3083 = vmatprep.subr.mxu0 0.0
      %3084 = vmatpush2.msra.mxu0 %v3016
      %3085 = vmatprep.subr.mxu0 0.0
      %3086 = vmatpush2.msra.mxu0 %v3015
      %3087 = vmatprep.subr.mxu0 0.0
      %3088 = vmatpush2.msra.mxu0 %v3014
      %3089 = vmatprep.subr.mxu0 0.0
      %3090 = vmatpush2.msra.mxu0 %v3013
      %3091 = vmatprep.subr.mxu0 0.0
      %3092 = vmatpush2.msra.mxu0 %v3012
      %3093 = vmatprep.subr.mxu0 0.0
      %3094 = vmatpush2.msra.mxu0 %v3011
      %3095 = vmatprep.subr.mxu0 0.0
      %3096 = vmatpush2.msra.mxu0 %v3010
      %3097 = vmatprep.mubr.f32.mxu0 %v3028
      %3098 = vmatmul.mubr.f32.gmra.mxu0 %v3022
      %v3099 = vpop.f32.mrf.mxu0
      %v3100 = vadd.f32 0.0, %v3099
      %v3101 = vpop.f32.mrf.mxu0
      %3102 = vmatprep.mubr.f32.mxu0 %v3031
      %3103 = vmatmul.mubr.f32.gmra.mxu0 %v3024
      %v3104 = vpop.f32.mrf.mxu0
      %v3105 = vadd.f32 0.0, %v3104
      %v3106 = vpop.f32.mrf.mxu0
      %3107 = vdwg.mxu0
      %v3108 = vsel %vm362, %v3100, 0.0
      %3109 = vadd.xlane.f32.xlu0 %v3108
      %v3110 = vpop.xlane.xlu0 %3109
      %v3111 = vsel %vm362, %v3105, 0.0
      %3112 = vadd.xlane.f32.xlu0 %v3111
      %v3113 = vpop.xlane.xlu0 %3112
      %v3114 = vld [vmem:[#allocation3] sm:$0x1]
      %v3116 = vlaneseq
      %v3117 = vshrl.u32 %v3116, 7
      %v3118 = vsub.s32 0, %v3117
      %v3119 = vrot.slane %v3114, %v3118
      %v3121 = vadd.f32 %v3110, %v3119
      %v3122 = vadd.f32 %v3113, %v3119
      %v3123 = vsub.f32 0.0, %v3121
      %v3124 = vsub.f32 0.0, %v3122
      %v3125 = vmul.f32 %v3123, 1.442695
      %v3126 = vpow.pop %v3125
      %v3127 = vmul.f32 %v3124, 1.442695
      %v3128 = vpow.pop %v3127
      %v3129 = vadd.f32 %v3126, 1.0
      %v3130 = vadd.f32 %v3128, 1.0
      %v3131 = vrcp.pop %v3129
      %v3132 = vmul.f32 1.0, %v3131
      %v3133 = vrcp.pop %v3130
      %v3134 = vmul.f32 1.0, %v3133
      %vm3135 = vcmask 7168
      %3136 = vst.msk [vmem:[%s361] sm:$0xff] %vm3135, %v3132
      %3137 = vst.msk [vmem:[%s361 + $0x8] sm:$0xff] %vm3135, %v3134
      %p3138 = scmp.lt.s32.totalorder %s23, 3
      %s3139 = scalar_select %p3138, %s23, 3
      %s3140 = smul.addr %s3139, 2
      %s3141 = smul.addr %s3140, 8
      %s3142 = scalar_lea.vmem %s10, %s3141
      // Predicated region
      $region61: #{tpu_custom_call.1} parent=59 // pred_check
        %p3143 = pneg %p256
      $region62: #{tpu_custom_call.1} parent=59 // pred_check_branch
        %3145 = sbr.rel (%p3143) target = $region64
      $region63: #{tpu_custom_call.1} parent=59 // pred_region
        _
      $region64: #{tpu_custom_call.1} parent=59 // pred_fallthru
        _
    $region60: #{tpu_custom_call.1} parent=5 // pred_fallthru
      _
    %p3146 = scmp.le.s32.totalorder 2, %s18
    // Predicated region
    $region65: #{tpu_custom_call.1} parent=5 // pred_check
      %p3147 = pneg %p3146
    $region66: #{tpu_custom_call.1} parent=5 // pred_check_branch
      %3149 = sbr.rel (%p3147) target = $region68
    $region67: #{tpu_custom_call.1} parent=5 // pred_region
      %s3150 = ssub.s32 %s18, 2
      // Predicated region
      $region69: #{tpu_custom_call.1} parent=67 // pred_check
        %p3151 = pneg %p262
      $region70: #{tpu_custom_call.1} parent=67 // pred_check_branch
        %3153 = sbr.rel (%p3151) target = $region72
      $region71: #{tpu_custom_call.1} parent=67 // pred_region
        %p3154 = scmp.lt.s32.totalorder %s24, 3
        %s3155 = scalar_select %p3154, %s24, 3
        %s3156 = smul.addr %s3155, 2
        %s3157 = smul.addr %s3156, 8
        %s3158 = scalar_lea.vmem %s10, %s3157
      $region72: #{tpu_custom_call.1} parent=67 // pred_fallthru
        _
    $region68: #{tpu_custom_call.1} parent=5 // pred_fallthru
      _
  $region6: #{tpu_custom_call.1} parent=0 // loop_footer
    %s22 = sadd.s32 1, %s18
  $region7: #{tpu_custom_call.1} parent=0 // loop_footer_branch
    %17 = sbr.rel target = $region3
  $region8: #{tpu_custom_call.1} parent=0 // loop_exit
    _

</llo_original>
